<compile_context>
chip_gen: v5e
topology: v5e:2x2
jax: 0.10.0
libtpu: 0.0.40
codegen_flags: <defaults>
</compile_context>

<pallas_src>
import functools

import jax
import jax.numpy as jnp
from jax.experimental import pallas as pl
from jax.experimental.pallas import tpu as pltpu


def _round_up(n, m):
    return ((n + m - 1) // m) * m


def _ae_kernel(x_ref,
               w1, b1, w2, b2, w3, b3,      # encoder params: W [in,out], b [1,out]
               w4, b4, w5, b5, w6, b6,      # decoder params
               out_ref, *, compute_dtype, precision):
    """Fused 6-layer MLP forward for one batch tile.

    MXU matmuls run in `compute_dtype` (bf16 by default) with f32 accumulation;
    bias-adds stay f32; tanh runs in `compute_dtype`. The final (linear) layer
    keeps an f32 result until the store-cast.
    """
    cd = compute_dtype
    h = x_ref[...].astype(cd)

    def layer(h, w_ref, b_ref, activate):
        y = jnp.dot(h, w_ref[...],
                    preferred_element_type=jnp.float32,
                    precision=precision) + b_ref[...]
        if activate:
            return jnp.tanh(y.astype(cd))
        return y

    # ----- encoder -----
    h = layer(h, w1, b1, True)
    h = layer(h, w2, b2, True)
    h = layer(h, w3, b3, True)
    # ----- decoder -----
    h = layer(h, w4, b4, True)
    h = layer(h, w5, b5, True)
    y = layer(h, w6, b6, False)          # last layer: no tanh
    out_ref[...] = y.astype(out_ref.dtype)


def autoencoder_forward(x, params, *, batch_tile=2048, compute_dtype=jnp.bfloat16):
    """x: [B, input_dim]; params: 6 (W[in,out], b[1,out]) pairs (y = x @ W + b).

    Returns [B, input_dim] in x.dtype. Weights are pre-cast once on the host to
    `compute_dtype`; biases stay f32 so the accumulate / bias-add path is f32.
    """
    B, D = x.shape
    cd = jnp.dtype(compute_dtype)
    precision = (jax.lax.Precision.HIGHEST
                 if cd == jnp.dtype(jnp.float32) else None)

    # Host-side one-time prep: cast weights to the compute dtype.  No zero-padding
    # of hidden widths (matmul-internal, never touch HBM) and no pad/slice of x/out.
    flat = []
    for w, b in params:
        flat.append(jnp.asarray(w, cd))
        flat.append(jnp.asarray(b, jnp.float32))

    weight_bytes = sum(int(a.size) * a.dtype.itemsize for a in flat)
    io_itemsize = jnp.dtype(x.dtype).itemsize

    def est_vmem(tb):
        return (2 * tb * D * 2 * io_itemsize      # x-in + out tiles, double-buffered
                + 2 * weight_bytes                # resident weights (conservative x2)
                + tb * D * (cd.itemsize + 4)      # x cast + final f32 y (TB x D, not TB x 128)
                + 6 * tb * 128 * 4)               # hidden-layer activations headroom

    # ---- batch tiling: big tiles, but >= 4 grid steps (>= 2 per v7x TensorCore) ----
    TB = _round_up(min(batch_tile, _round_up(B, 8)), 8)
    if pl.cdiv(B, TB) < 4 and B >= 32:
        TB = max(8, _round_up(pl.cdiv(B, 4), 8))
    while est_vmem(TB) > (40 << 20) and TB > 8:   # stay inside v7x's 64 MiB VMEM
        TB = max(8, _round_up(TB // 2, 8))
    grid = pl.cdiv(B, TB)                         # ragged last block is masked

    # Always pass an explicit limit (v5e's 16 MiB scoped default is too small);
    # cap at 48 MiB so Pallas internals still fit in v7x's 64 MiB physical VMEM.
    vmem_limit = int(min(max(2 * est_vmem(TB), 24 << 20), 48 << 20))

    # Constant-index, full-extent BlockSpecs keep all weights VMEM-resident across
    # grid steps (fetched once, no per-step re-DMA).  Unpadded they total a few
    # hundred KB; for very large input_dim, pipeline_mode=pl.Buffered(1) on these
    # specs would additionally drop their double-buffer copy.
    weight_specs = [pl.BlockSpec(a.shape, lambda i: (0, 0)) for a in flat]
    in_specs = [pl.BlockSpec((TB, D), lambda i: (i, 0))] + weight_specs
    out_spec = pl.BlockSpec((TB, D), lambda i: (i, 0))

    kernel = functools.partial(_ae_kernel, compute_dtype=cd, precision=precision)

    return pl.pallas_call(
        kernel,
        out_shape=jax.ShapeDtypeStruct((B, D), x.dtype),
        grid_spec=pltpu.PrefetchScalarGridSpec(
            num_scalar_prefetch=0,
            grid=(grid,),
            in_specs=in_specs,
            out_specs=out_spec,
        ),
        compiler_params=pltpu.CompilerParams(
            dimension_semantics=("parallel",),
            vmem_limit_bytes=vmem_limit),
    )(x, *flat)


def init_params(key, input_dim, latent_dim=16):
    """Deterministic param init matching the PyTorch module's layer shapes.

    Mimics nn.Linear default init: U(-1/sqrt(fan_in), 1/sqrt(fan_in)).
    Weights stored as [in, out] (transposed vs. PyTorch) so y = x @ W + b.
    """
    dims = [(input_dim, 64), (64, 32), (32, latent_dim),     # encoder
            (latent_dim, 32), (32, 64), (64, input_dim)]     # decoder
    params = []
    for (fan_in, fan_out) in dims:
        key, kw, kb = jax.random.split(key, 3)
        bound = 1.0 / jnp.sqrt(jnp.float32(fan_in))
        w = jax.random.uniform(kw, (fan_in, fan_out), jnp.float32, -bound, bound)
        b = jax.random.uniform(kb, (1, fan_out), jnp.float32, -bound, bound)
        params.append((w, b))
    return params


def autoencoder_ref(x, params):
    """Pure-JAX f32 reference for correctness checking."""
    h = x
    for idx, (w, b) in enumerate(params):
        h = h @ w + b
        if idx != len(params) - 1:   # last decoder layer has no Tanh
            h = jnp.tanh(h)
    return h


if __name__ == "__main__":
    key = jax.random.PRNGKey(0)
    k_x, k_p = jax.random.split(key)

    B, INPUT_DIM, LATENT_DIM = 256, 128, 16
    x = jax.random.normal(k_x, (B, INPUT_DIM), jnp.float32)
    params = init_params(k_p, INPUT_DIM, LATENT_DIM)

    ref = autoencoder_ref(x, params)

    # f32 path (faithful to the PyTorch module; HIGHEST matmul precision).
    out_f32 = jax.block_until_ready(
        autoencoder_forward(x, params, compute_dtype=jnp.float32))
    assert out_f32.shape == (B, INPUT_DIM) and out_f32.dtype == jnp.float32
    assert jnp.allclose(out_f32, ref, atol=2e-3, rtol=2e-3), "f32 mismatch vs reference"

    # Default fast path: bf16 x/out + bf16 MXU operands, f32 accumulation.
    x_bf16 = x.astype(jnp.bfloat16)
    out_bf16 = jax.block_until_ready(autoencoder_forward(x_bf16, params))
    assert out_bf16.shape == (B, INPUT_DIM) and out_bf16.dtype == jnp.bfloat16
    assert jnp.allclose(out_bf16.astype(jnp.float32), ref, atol=1e-1, rtol=1e-1), \
        "bf16 mismatch vs reference"

    print("KERNEL_OK")
</pallas_src>

<mosaic_0001>
module attributes {stable_mosaic.version = 11 : i64} {
  func.func @_ae_kernel(%arg0: i32, %arg1: memref<64x128xf32, #tpu.memory_space<vmem>>, %arg2: memref<128x64xf32, #tpu.memory_space<vmem>>, %arg3: memref<1x64xf32, #tpu.memory_space<vmem>>, %arg4: memref<64x32xf32, #tpu.memory_space<vmem>>, %arg5: memref<1x32xf32, #tpu.memory_space<vmem>>, %arg6: memref<32x16xf32, #tpu.memory_space<vmem>>, %arg7: memref<1x16xf32, #tpu.memory_space<vmem>>, %arg8: memref<16x32xf32, #tpu.memory_space<vmem>>, %arg9: memref<1x32xf32, #tpu.memory_space<vmem>>, %arg10: memref<32x64xf32, #tpu.memory_space<vmem>>, %arg11: memref<1x64xf32, #tpu.memory_space<vmem>>, %arg12: memref<64x128xf32, #tpu.memory_space<vmem>>, %arg13: memref<1x128xf32, #tpu.memory_space<vmem>>, %arg14: memref<64x128xf32, #tpu.memory_space<vmem>>) attributes {dimension_semantics = [#tpu.dimension_semantics<parallel>], iteration_bounds = array<i64: 4>, scalar_prefetch = 0 : i64, scratch_operands = 0 : i64, tpu.core_type = #tpu.core_type<tc>, window_params = [{transform_indices = @transform_0, window_bounds = array<i64: 64, 128>}, {pipeline_mode = #tpu.pipeline_mode<synchronous>, transform_indices = @transform_1, window_bounds = array<i64: 128, 64>}, {pipeline_mode = #tpu.pipeline_mode<synchronous>, transform_indices = @transform_2, window_bounds = array<i64: 1, 64>}, {pipeline_mode = #tpu.pipeline_mode<synchronous>, transform_indices = @transform_3, window_bounds = array<i64: 64, 32>}, {pipeline_mode = #tpu.pipeline_mode<synchronous>, transform_indices = @transform_4, window_bounds = array<i64: 1, 32>}, {pipeline_mode = #tpu.pipeline_mode<synchronous>, transform_indices = @transform_5, window_bounds = array<i64: 32, 16>}, {pipeline_mode = #tpu.pipeline_mode<synchronous>, transform_indices = @transform_6, window_bounds = array<i64: 1, 16>}, {pipeline_mode = #tpu.pipeline_mode<synchronous>, transform_indices = @transform_7, window_bounds = array<i64: 16, 32>}, {pipeline_mode = #tpu.pipeline_mode<synchronous>, transform_indices = @transform_8, window_bounds = array<i64: 1, 32>}, {pipeline_mode = #tpu.pipeline_mode<synchronous>, transform_indices = @transform_9, window_bounds = array<i64: 32, 64>}, {pipeline_mode = #tpu.pipeline_mode<synchronous>, transform_indices = @transform_10, window_bounds = array<i64: 1, 64>}, {pipeline_mode = #tpu.pipeline_mode<synchronous>, transform_indices = @transform_11, window_bounds = array<i64: 64, 128>}, {pipeline_mode = #tpu.pipeline_mode<synchronous>, transform_indices = @transform_12, window_bounds = array<i64: 1, 128>}, {transform_indices = @transform_13, window_bounds = array<i64: 64, 128>}]} {
    %c0 = arith.constant 0 : index
    %c0_0 = arith.constant 0 : index
    %0 = vector.load %arg1[%c0, %c0_0] : memref<64x128xf32, #tpu.memory_space<vmem>>, vector<64x128xf32>
    %c0_1 = arith.constant 0 : index
    %c0_2 = arith.constant 0 : index
    %1 = vector.load %arg2[%c0_1, %c0_2] : memref<128x64xf32, #tpu.memory_space<vmem>>, vector<128x64xf32>
    %cst = arith.constant dense<0.000000e+00> : vector<64x64xf32>
    %2 = tpu.matmul %0, %1, %cst {dimension_numbers = #tpu.dot_dimension_numbers<[1], [0], [0], [1], [0, 0, 1, 1], [], []>, precision = #tpu.contract_precision<fp32>} : vector<64x128xf32>, vector<128x64xf32>, vector<64x64xf32> -> vector<64x64xf32>
    %c0_3 = arith.constant 0 : index
    %c0_4 = arith.constant 0 : index
    %3 = vector.load %arg3[%c0_3, %c0_4] : memref<1x64xf32, #tpu.memory_space<vmem>>, vector<1x64xf32>
    %4 = vector.broadcast %3 : vector<1x64xf32> to vector<64x64xf32>
    %5 = arith.addf %2, %4 : vector<64x64xf32>
    %6 = math.tanh %5 : vector<64x64xf32>
    %c0_5 = arith.constant 0 : index
    %c0_6 = arith.constant 0 : index
    %7 = vector.load %arg4[%c0_5, %c0_6] : memref<64x32xf32, #tpu.memory_space<vmem>>, vector<64x32xf32>
    %cst_7 = arith.constant dense<0.000000e+00> : vector<64x32xf32>
    %8 = tpu.matmul %6, %7, %cst_7 {dimension_numbers = #tpu.dot_dimension_numbers<[1], [0], [0], [1], [0, 0, 1, 1], [], []>, precision = #tpu.contract_precision<fp32>} : vector<64x64xf32>, vector<64x32xf32>, vector<64x32xf32> -> vector<64x32xf32>
    %c0_8 = arith.constant 0 : index
    %c0_9 = arith.constant 0 : index
    %9 = vector.load %arg5[%c0_8, %c0_9] : memref<1x32xf32, #tpu.memory_space<vmem>>, vector<1x32xf32>
    %10 = vector.broadcast %9 : vector<1x32xf32> to vector<64x32xf32>
    %11 = arith.addf %8, %10 : vector<64x32xf32>
    %12 = math.tanh %11 : vector<64x32xf32>
    %c0_10 = arith.constant 0 : index
    %c0_11 = arith.constant 0 : index
    %13 = vector.load %arg6[%c0_10, %c0_11] : memref<32x16xf32, #tpu.memory_space<vmem>>, vector<32x16xf32>
    %cst_12 = arith.constant dense<0.000000e+00> : vector<64x16xf32>
    %14 = tpu.matmul %12, %13, %cst_12 {dimension_numbers = #tpu.dot_dimension_numbers<[1], [0], [0], [1], [0, 0, 1, 1], [], []>, precision = #tpu.contract_precision<fp32>} : vector<64x32xf32>, vector<32x16xf32>, vector<64x16xf32> -> vector<64x16xf32>
    %c0_13 = arith.constant 0 : index
    %c0_14 = arith.constant 0 : index
    %15 = vector.load %arg7[%c0_13, %c0_14] : memref<1x16xf32, #tpu.memory_space<vmem>>, vector<1x16xf32>
    %16 = vector.broadcast %15 : vector<1x16xf32> to vector<64x16xf32>
    %17 = arith.addf %14, %16 : vector<64x16xf32>
    %18 = math.tanh %17 : vector<64x16xf32>
    %c0_15 = arith.constant 0 : index
    %c0_16 = arith.constant 0 : index
    %19 = vector.load %arg8[%c0_15, %c0_16] : memref<16x32xf32, #tpu.memory_space<vmem>>, vector<16x32xf32>
    %cst_17 = arith.constant dense<0.000000e+00> : vector<64x32xf32>
    %20 = tpu.matmul %18, %19, %cst_17 {dimension_numbers = #tpu.dot_dimension_numbers<[1], [0], [0], [1], [0, 0, 1, 1], [], []>, precision = #tpu.contract_precision<fp32>} : vector<64x16xf32>, vector<16x32xf32>, vector<64x32xf32> -> vector<64x32xf32>
    %c0_18 = arith.constant 0 : index
    %c0_19 = arith.constant 0 : index
    %21 = vector.load %arg9[%c0_18, %c0_19] : memref<1x32xf32, #tpu.memory_space<vmem>>, vector<1x32xf32>
    %22 = vector.broadcast %21 : vector<1x32xf32> to vector<64x32xf32>
    %23 = arith.addf %20, %22 : vector<64x32xf32>
    %24 = math.tanh %23 : vector<64x32xf32>
    %c0_20 = arith.constant 0 : index
    %c0_21 = arith.constant 0 : index
    %25 = vector.load %arg10[%c0_20, %c0_21] : memref<32x64xf32, #tpu.memory_space<vmem>>, vector<32x64xf32>
    %cst_22 = arith.constant dense<0.000000e+00> : vector<64x64xf32>
    %26 = tpu.matmul %24, %25, %cst_22 {dimension_numbers = #tpu.dot_dimension_numbers<[1], [0], [0], [1], [0, 0, 1, 1], [], []>, precision = #tpu.contract_precision<fp32>} : vector<64x32xf32>, vector<32x64xf32>, vector<64x64xf32> -> vector<64x64xf32>
    %c0_23 = arith.constant 0 : index
    %c0_24 = arith.constant 0 : index
    %27 = vector.load %arg11[%c0_23, %c0_24] : memref<1x64xf32, #tpu.memory_space<vmem>>, vector<1x64xf32>
    %28 = vector.broadcast %27 : vector<1x64xf32> to vector<64x64xf32>
    %29 = arith.addf %26, %28 : vector<64x64xf32>
    %30 = math.tanh %29 : vector<64x64xf32>
    %c0_25 = arith.constant 0 : index
    %c0_26 = arith.constant 0 : index
    %31 = vector.load %arg12[%c0_25, %c0_26] : memref<64x128xf32, #tpu.memory_space<vmem>>, vector<64x128xf32>
    %cst_27 = arith.constant dense<0.000000e+00> : vector<64x128xf32>
    %32 = tpu.matmul %30, %31, %cst_27 {dimension_numbers = #tpu.dot_dimension_numbers<[1], [0], [0], [1], [0, 0, 1, 1], [], []>, precision = #tpu.contract_precision<fp32>} : vector<64x64xf32>, vector<64x128xf32>, vector<64x128xf32> -> vector<64x128xf32>
    %c0_28 = arith.constant 0 : index
    %c0_29 = arith.constant 0 : index
    %33 = vector.load %arg13[%c0_28, %c0_29] : memref<1x128xf32, #tpu.memory_space<vmem>>, vector<1x128xf32>
    %34 = vector.broadcast %33 : vector<1x128xf32> to vector<64x128xf32>
    %35 = arith.addf %32, %34 : vector<64x128xf32>
    %c0_30 = arith.constant 0 : index
    %c0_31 = arith.constant 0 : index
    %36 = vector.load %arg14[%c0_30, %c0_31] : memref<64x128xf32, #tpu.memory_space<vmem>>, vector<64x128xf32>
    tpu.vector_store %arg14[%c0_30, %c0_31], %35 {strides = array<i32>} : memref<64x128xf32, #tpu.memory_space<vmem>>, vector<64x128xf32>,
    return
  }
  func.func @transform_0(%arg0: i32) -> (i32, i32) {
    %c0_i32 = arith.constant 0 : i32
    %c0_i32_0 = arith.constant 0 : i32
    return %arg0, %c0_i32 : i32, i32
  }
  func.func @transform_1(%arg0: i32) -> (i32, i32) {
    %c0_i32 = arith.constant 0 : i32
    %c0_i32_0 = arith.constant 0 : i32
    %c0_i32_1 = arith.constant 0 : i32
    return %c0_i32, %c0_i32_0 : i32, i32
  }
  func.func @transform_2(%arg0: i32) -> (i32, i32) {
    %c0_i32 = arith.constant 0 : i32
    %c0_i32_0 = arith.constant 0 : i32
    %c0_i32_1 = arith.constant 0 : i32
    return %c0_i32, %c0_i32_0 : i32, i32
  }
  func.func @transform_3(%arg0: i32) -> (i32, i32) {
    %c0_i32 = arith.constant 0 : i32
    %c0_i32_0 = arith.constant 0 : i32
    %c0_i32_1 = arith.constant 0 : i32
    return %c0_i32, %c0_i32_0 : i32, i32
  }
  func.func @transform_4(%arg0: i32) -> (i32, i32) {
    %c0_i32 = arith.constant 0 : i32
    %c0_i32_0 = arith.constant 0 : i32
    %c0_i32_1 = arith.constant 0 : i32
    return %c0_i32, %c0_i32_0 : i32, i32
  }
  func.func @transform_5(%arg0: i32) -> (i32, i32) {
    %c0_i32 = arith.constant 0 : i32
    %c0_i32_0 = arith.constant 0 : i32
    %c0_i32_1 = arith.constant 0 : i32
    return %c0_i32, %c0_i32_0 : i32, i32
  }
  func.func @transform_6(%arg0: i32) -> (i32, i32) {
    %c0_i32 = arith.constant 0 : i32
    %c0_i32_0 = arith.constant 0 : i32
    %c0_i32_1 = arith.constant 0 : i32
    return %c0_i32, %c0_i32_0 : i32, i32
  }
  func.func @transform_7(%arg0: i32) -> (i32, i32) {
    %c0_i32 = arith.constant 0 : i32
    %c0_i32_0 = arith.constant 0 : i32
    %c0_i32_1 = arith.constant 0 : i32
    return %c0_i32, %c0_i32_0 : i32, i32
  }
  func.func @transform_8(%arg0: i32) -> (i32, i32) {
    %c0_i32 = arith.constant 0 : i32
    %c0_i32_0 = arith.constant 0 : i32
    %c0_i32_1 = arith.constant 0 : i32
    return %c0_i32, %c0_i32_0 : i32, i32
  }
  func.func @transform_9(%arg0: i32) -> (i32, i32) {
    %c0_i32 = arith.constant 0 : i32
    %c0_i32_0 = arith.constant 0 : i32
    %c0_i32_1 = arith.constant 0 : i32
    return %c0_i32, %c0_i32_0 : i32, i32
  }
  func.func @transform_10(%arg0: i32) -> (i32, i32) {
    %c0_i32 = arith.constant 0 : i32
    %c0_i32_0 = arith.constant 0 : i32
    %c0_i32_1 = arith.constant 0 : i32
    return %c0_i32, %c0_i32_0 : i32, i32
  }
  func.func @transform_11(%arg0: i32) -> (i32, i32) {
    %c0_i32 = arith.constant 0 : i32
    %c0_i32_0 = arith.constant 0 : i32
    %c0_i32_1 = arith.constant 0 : i32
    return %c0_i32, %c0_i32_0 : i32, i32
  }
  func.func @transform_12(%arg0: i32) -> (i32, i32) {
    %c0_i32 = arith.constant 0 : i32
    %c0_i32_0 = arith.constant 0 : i32
    %c0_i32_1 = arith.constant 0 : i32
    return %c0_i32, %c0_i32_0 : i32, i32
  }
  func.func @transform_13(%arg0: i32) -> (i32, i32) {
    %c0_i32 = arith.constant 0 : i32
    %c0_i32_0 = arith.constant 0 : i32
    return %arg0, %c0_i32 : i32, i32
  }
}

</mosaic_0001>

<llo_original>
// kernel: tpu_custom_call.1
$region0: #{tpu_custom_call.1}
  #allocation0 [shape = 'u32[]', space=smem, size = 0x4, offset = 0x4, fixed_abs, tag = 'smem constant byte address 0x4 - core index']
  #allocation1 [shape = 'u32[72,128]{1,0:T(1,128)}', space=vmem, size = 0x9000, scoped, tag = 'internal scratch']
  %s0 = inlined_call_operand.hbm [shape: f32[256,128], index: 0, kind: input, shape index: {}]
  %s1 = inlined_call_operand.vmem [shape: f32[128,64], index: 1, kind: input, shape index: {}]
  %s2 = inlined_call_operand.vmem [shape: f32[1,64], index: 2, kind: input, shape index: {}]
  %s3 = inlined_call_operand.vmem [shape: f32[64,32], index: 3, kind: input, shape index: {}]
  %s4 = inlined_call_operand.vmem [shape: f32[1,32], index: 4, kind: input, shape index: {}]
  %s5 = inlined_call_operand.vmem [shape: f32[32,16], index: 5, kind: input, shape index: {}]
  %s6 = inlined_call_operand.vmem [shape: f32[1,16], index: 6, kind: input, shape index: {}]
  %s7 = inlined_call_operand.vmem [shape: f32[16,32], index: 7, kind: input, shape index: {}]
  %s8 = inlined_call_operand.vmem [shape: f32[1,32], index: 8, kind: input, shape index: {}]
  %s9 = inlined_call_operand.vmem [shape: f32[32,64], index: 9, kind: input, shape index: {}]
  %s10 = inlined_call_operand.vmem [shape: f32[1,64], index: 10, kind: input, shape index: {}]
  %s11 = inlined_call_operand.vmem [shape: f32[64,128], index: 11, kind: input, shape index: {}]
  %s12 = inlined_call_operand.vmem [shape: f32[1,128], index: 12, kind: input, shape index: {}]
  %s13 = inlined_call_operand.hbm [shape: f32[256,128], index: 13, kind: output, shape index: {}]
  %s14 = sld [smem:[#allocation0]]
  $region89: #{tpu_custom_call.1} parent=0
    _
  %s16 = ssub.s32 1, %s14
  %s17 = scalar_select 0, %s16, %s14
  $region1: #{tpu_custom_call.1} parent=0
    #allocation2 [shape = 'u8[65536]{0}', space=vmem, size = 0x10000, scoped, tag = 'input window, operand 0']
    #allocation3 [shape = 's32[2]{0}', space=sflag, size = 0x8, scoped, tag = 'scoped memory for tpu_custom_call.1']
    #allocation4 [shape = 's32[2]{0}', space=sflag, size = 0x8, scoped, tag = 'scoped memory for tpu_custom_call.1']
    #allocation5 [shape = 'u8[65536]{0}', space=vmem, size = 0x10000, scoped, tag = 'output window, operand 0']
    %18 = vsyncpa [#allocation3], 0
    %s19 = scalar_lea.sflag [#allocation3], 1
    %20 = vsyncpa %s19, 0
    %21 = vsyncpa [#allocation4], 0
    %s22 = scalar_lea.sflag [#allocation4], 1
    %23 = vsyncpa %s22, 0
    loop: start=0, step=1, limit=6
    $region2: #{tpu_custom_call.1} parent=1 // loop_pre_header
      _
    $region3: #{tpu_custom_call.1} parent=1 // loop_header
      %s25 = sphi 0, %s29
      %p26 = scmp.ge.s32.totalorder %s25, 6
      %s35 = sphi 0, %s37
      %s38 = sphi 0, %s35
      %s39 = sphi 0, %s38
      %s55 = sphi 0, %s39
      %s59 = sphi 0, %s59
      %s61 = sphi 0, %s59
      %s62 = sphi 0, %s61
      %s76 = sphi 0, %s62
      %s80 = sphi 0, %s80
      %s82 = sphi 0, %s80
      %s83 = sphi 0, %s82
      %s97 = sphi 0, %s83
      %s101 = sphi 0, %s101
      %s103 = sphi 0, %s101
      %s104 = sphi 0, %s103
      %s118 = sphi 0, %s104
      %s122 = sphi 0, %s122
      %s124 = sphi 0, %s122
      %s125 = sphi 0, %s124
      %s139 = sphi 0, %s125
      %s143 = sphi 0, %s143
      %s145 = sphi 0, %s143
      %s146 = sphi 0, %s145
      %s160 = sphi 0, %s146
      %s164 = sphi 0, %s164
      %s166 = sphi 0, %s164
      %s167 = sphi 0, %s166
      %s181 = sphi 0, %s167
      %s185 = sphi 0, %s185
      %s187 = sphi 0, %s185
      %s188 = sphi 0, %s187
      %s202 = sphi 0, %s188
      %s206 = sphi 0, %s206
      %s208 = sphi 0, %s206
      %s209 = sphi 0, %s208
      %s223 = sphi 0, %s209
      %s227 = sphi 0, %s227
      %s229 = sphi 0, %s227
      %s230 = sphi 0, %s229
      %s244 = sphi 0, %s230
      %s248 = sphi 0, %s248
      %s250 = sphi 0, %s248
      %s251 = sphi 0, %s250
      %s265 = sphi 0, %s251
      %s269 = sphi 0, %s269
      %s271 = sphi 0, %s269
      %s272 = sphi 0, %s271
      %s286 = sphi 0, %s272
      %s290 = sphi 0, %s290
      %s292 = sphi 0, %s290
      %s293 = sphi 0, %s292
      %s307 = sphi 0, %s293
      %s313 = sphi 0, %s315
      %s316 = sphi 0, %s313
      %s317 = sphi 0, %s316
      %s333 = sphi 0, %s317
    $region4: #{tpu_custom_call.1} parent=1 // loop_header_branch
      %28 = sbr.rel (%p26) target = $region8
    $region5: #{tpu_custom_call.1} parent=1 // loop_body
      %s30 = ssub.s32 %s25, 1
      %s31 = ssub.s32 %s25, 2
      %s32 = sadd.s32 %s25, 1
      %s33 = ssub.s32 %s25, %s32
      %p34 = scmp.eq.s32.totalorder %s33, 0
      %s36 = sadd.s32 %s35, 1
      %s37 = scalar_select %p34, %s35, %s36
      %p40 = pneg %p34
      %p41 = scmp.eq.s32.totalorder %s25, 3
      %p42 = por %p40, %p41
      %p43 = scmp.ne.s32.totalorder %s35, %s38
      %p44 = scmp.eq.s32.totalorder %s25, 0
      %p45 = por %p43, %p44
      %p46 = scmp.ne.s32.totalorder %s35, %s38
      %p47 = scmp.eq.s32.totalorder %s30, 3
      %p48 = por %p46, %p47
      %p49 = scmp.ne.s32.totalorder %s38, %s39
      %p50 = scmp.eq.s32.totalorder %s30, 0
      %p51 = por %p49, %p50
      %p52 = scmp.ne.s32.totalorder %s38, %s39
      %p53 = scmp.eq.s32.totalorder %s31, 3
      %p54 = por %p52, %p53
      %p56 = scmp.ne.s32.totalorder %s39, %s55
      %p57 = scmp.eq.s32.totalorder %s31, 0
      %p58 = por %p56, %p57
      %s60 = sadd.s32 %s59, 1
      %p63 = scmp.eq.s32.totalorder %s25, 3
      %p64 = scmp.ne.s32.totalorder %s59, %s61
      %p65 = scmp.eq.s32.totalorder %s25, 0
      %p66 = por %p64, %p65
      %p67 = scmp.ne.s32.totalorder %s59, %s61
      %p68 = scmp.eq.s32.totalorder %s30, 3
      %p69 = por %p67, %p68
      %p70 = scmp.ne.s32.totalorder %s61, %s62
      %p71 = scmp.eq.s32.totalorder %s30, 0
      %p72 = por %p70, %p71
      %p73 = scmp.ne.s32.totalorder %s61, %s62
      %p74 = scmp.eq.s32.totalorder %s31, 3
      %p75 = por %p73, %p74
      %p77 = scmp.ne.s32.totalorder %s62, %s76
      %p78 = scmp.eq.s32.totalorder %s31, 0
      %p79 = por %p77, %p78
      %s81 = sadd.s32 %s80, 1
      %p84 = scmp.eq.s32.totalorder %s25, 3
      %p85 = scmp.ne.s32.totalorder %s80, %s82
      %p86 = scmp.eq.s32.totalorder %s25, 0
      %p87 = por %p85, %p86
      %p88 = scmp.ne.s32.totalorder %s80, %s82
      %p89 = scmp.eq.s32.totalorder %s30, 3
      %p90 = por %p88, %p89
      %p91 = scmp.ne.s32.totalorder %s82, %s83
      %p92 = scmp.eq.s32.totalorder %s30, 0
      %p93 = por %p91, %p92
      %p94 = scmp.ne.s32.totalorder %s82, %s83
      %p95 = scmp.eq.s32.totalorder %s31, 3
      %p96 = por %p94, %p95
      %p98 = scmp.ne.s32.totalorder %s83, %s97
      %p99 = scmp.eq.s32.totalorder %s31, 0
      %p100 = por %p98, %p99
      %s102 = sadd.s32 %s101, 1
      %p105 = scmp.eq.s32.totalorder %s25, 3
      %p106 = scmp.ne.s32.totalorder %s101, %s103
      %p107 = scmp.eq.s32.totalorder %s25, 0
      %p108 = por %p106, %p107
      %p109 = scmp.ne.s32.totalorder %s101, %s103
      %p110 = scmp.eq.s32.totalorder %s30, 3
      %p111 = por %p109, %p110
      %p112 = scmp.ne.s32.totalorder %s103, %s104
      %p113 = scmp.eq.s32.totalorder %s30, 0
      %p114 = por %p112, %p113
      %p115 = scmp.ne.s32.totalorder %s103, %s104
      %p116 = scmp.eq.s32.totalorder %s31, 3
      %p117 = por %p115, %p116
      %p119 = scmp.ne.s32.totalorder %s104, %s118
      %p120 = scmp.eq.s32.totalorder %s31, 0
      %p121 = por %p119, %p120
      %s123 = sadd.s32 %s122, 1
      %p126 = scmp.eq.s32.totalorder %s25, 3
      %p127 = scmp.ne.s32.totalorder %s122, %s124
      %p128 = scmp.eq.s32.totalorder %s25, 0
      %p129 = por %p127, %p128
      %p130 = scmp.ne.s32.totalorder %s122, %s124
      %p131 = scmp.eq.s32.totalorder %s30, 3
      %p132 = por %p130, %p131
      %p133 = scmp.ne.s32.totalorder %s124, %s125
      %p134 = scmp.eq.s32.totalorder %s30, 0
      %p135 = por %p133, %p134
      %p136 = scmp.ne.s32.totalorder %s124, %s125
      %p137 = scmp.eq.s32.totalorder %s31, 3
      %p138 = por %p136, %p137
      %p140 = scmp.ne.s32.totalorder %s125, %s139
      %p141 = scmp.eq.s32.totalorder %s31, 0
      %p142 = por %p140, %p141
      %s144 = sadd.s32 %s143, 1
      %p147 = scmp.eq.s32.totalorder %s25, 3
      %p148 = scmp.ne.s32.totalorder %s143, %s145
      %p149 = scmp.eq.s32.totalorder %s25, 0
      %p150 = por %p148, %p149
      %p151 = scmp.ne.s32.totalorder %s143, %s145
      %p152 = scmp.eq.s32.totalorder %s30, 3
      %p153 = por %p151, %p152
      %p154 = scmp.ne.s32.totalorder %s145, %s146
      %p155 = scmp.eq.s32.totalorder %s30, 0
      %p156 = por %p154, %p155
      %p157 = scmp.ne.s32.totalorder %s145, %s146
      %p158 = scmp.eq.s32.totalorder %s31, 3
      %p159 = por %p157, %p158
      %p161 = scmp.ne.s32.totalorder %s146, %s160
      %p162 = scmp.eq.s32.totalorder %s31, 0
      %p163 = por %p161, %p162
      %s165 = sadd.s32 %s164, 1
      %p168 = scmp.eq.s32.totalorder %s25, 3
      %p169 = scmp.ne.s32.totalorder %s164, %s166
      %p170 = scmp.eq.s32.totalorder %s25, 0
      %p171 = por %p169, %p170
      %p172 = scmp.ne.s32.totalorder %s164, %s166
      %p173 = scmp.eq.s32.totalorder %s30, 3
      %p174 = por %p172, %p173
      %p175 = scmp.ne.s32.totalorder %s166, %s167
      %p176 = scmp.eq.s32.totalorder %s30, 0
      %p177 = por %p175, %p176
      %p178 = scmp.ne.s32.totalorder %s166, %s167
      %p179 = scmp.eq.s32.totalorder %s31, 3
      %p180 = por %p178, %p179
      %p182 = scmp.ne.s32.totalorder %s167, %s181
      %p183 = scmp.eq.s32.totalorder %s31, 0
      %p184 = por %p182, %p183
      %s186 = sadd.s32 %s185, 1
      %p189 = scmp.eq.s32.totalorder %s25, 3
      %p190 = scmp.ne.s32.totalorder %s185, %s187
      %p191 = scmp.eq.s32.totalorder %s25, 0
      %p192 = por %p190, %p191
      %p193 = scmp.ne.s32.totalorder %s185, %s187
      %p194 = scmp.eq.s32.totalorder %s30, 3
      %p195 = por %p193, %p194
      %p196 = scmp.ne.s32.totalorder %s187, %s188
      %p197 = scmp.eq.s32.totalorder %s30, 0
      %p198 = por %p196, %p197
      %p199 = scmp.ne.s32.totalorder %s187, %s188
      %p200 = scmp.eq.s32.totalorder %s31, 3
      %p201 = por %p199, %p200
      %p203 = scmp.ne.s32.totalorder %s188, %s202
      %p204 = scmp.eq.s32.totalorder %s31, 0
      %p205 = por %p203, %p204
      %s207 = sadd.s32 %s206, 1
      %p210 = scmp.eq.s32.totalorder %s25, 3
      %p211 = scmp.ne.s32.totalorder %s206, %s208
      %p212 = scmp.eq.s32.totalorder %s25, 0
      %p213 = por %p211, %p212
      %p214 = scmp.ne.s32.totalorder %s206, %s208
      %p215 = scmp.eq.s32.totalorder %s30, 3
      %p216 = por %p214, %p215
      %p217 = scmp.ne.s32.totalorder %s208, %s209
      %p218 = scmp.eq.s32.totalorder %s30, 0
      %p219 = por %p217, %p218
      %p220 = scmp.ne.s32.totalorder %s208, %s209
      %p221 = scmp.eq.s32.totalorder %s31, 3
      %p222 = por %p220, %p221
      %p224 = scmp.ne.s32.totalorder %s209, %s223
      %p225 = scmp.eq.s32.totalorder %s31, 0
      %p226 = por %p224, %p225
      %s228 = sadd.s32 %s227, 1
      %p231 = scmp.eq.s32.totalorder %s25, 3
      %p232 = scmp.ne.s32.totalorder %s227, %s229
      %p233 = scmp.eq.s32.totalorder %s25, 0
      %p234 = por %p232, %p233
      %p235 = scmp.ne.s32.totalorder %s227, %s229
      %p236 = scmp.eq.s32.totalorder %s30, 3
      %p237 = por %p235, %p236
      %p238 = scmp.ne.s32.totalorder %s229, %s230
      %p239 = scmp.eq.s32.totalorder %s30, 0
      %p240 = por %p238, %p239
      %p241 = scmp.ne.s32.totalorder %s229, %s230
      %p242 = scmp.eq.s32.totalorder %s31, 3
      %p243 = por %p241, %p242
      %p245 = scmp.ne.s32.totalorder %s230, %s244
      %p246 = scmp.eq.s32.totalorder %s31, 0
      %p247 = por %p245, %p246
      %s249 = sadd.s32 %s248, 1
      %p252 = scmp.eq.s32.totalorder %s25, 3
      %p253 = scmp.ne.s32.totalorder %s248, %s250
      %p254 = scmp.eq.s32.totalorder %s25, 0
      %p255 = por %p253, %p254
      %p256 = scmp.ne.s32.totalorder %s248, %s250
      %p257 = scmp.eq.s32.totalorder %s30, 3
      %p258 = por %p256, %p257
      %p259 = scmp.ne.s32.totalorder %s250, %s251
      %p260 = scmp.eq.s32.totalorder %s30, 0
      %p261 = por %p259, %p260
      %p262 = scmp.ne.s32.totalorder %s250, %s251
      %p263 = scmp.eq.s32.totalorder %s31, 3
      %p264 = por %p262, %p263
      %p266 = scmp.ne.s32.totalorder %s251, %s265
      %p267 = scmp.eq.s32.totalorder %s31, 0
      %p268 = por %p266, %p267
      %s270 = sadd.s32 %s269, 1
      %p273 = scmp.eq.s32.totalorder %s25, 3
      %p274 = scmp.ne.s32.totalorder %s269, %s271
      %p275 = scmp.eq.s32.totalorder %s25, 0
      %p276 = por %p274, %p275
      %p277 = scmp.ne.s32.totalorder %s269, %s271
      %p278 = scmp.eq.s32.totalorder %s30, 3
      %p279 = por %p277, %p278
      %p280 = scmp.ne.s32.totalorder %s271, %s272
      %p281 = scmp.eq.s32.totalorder %s30, 0
      %p282 = por %p280, %p281
      %p283 = scmp.ne.s32.totalorder %s271, %s272
      %p284 = scmp.eq.s32.totalorder %s31, 3
      %p285 = por %p283, %p284
      %p287 = scmp.ne.s32.totalorder %s272, %s286
      %p288 = scmp.eq.s32.totalorder %s31, 0
      %p289 = por %p287, %p288
      %s291 = sadd.s32 %s290, 1
      %p294 = scmp.eq.s32.totalorder %s25, 3
      %p295 = scmp.ne.s32.totalorder %s290, %s292
      %p296 = scmp.eq.s32.totalorder %s25, 0
      %p297 = por %p295, %p296
      %p298 = scmp.ne.s32.totalorder %s290, %s292
      %p299 = scmp.eq.s32.totalorder %s30, 3
      %p300 = por %p298, %p299
      %p301 = scmp.ne.s32.totalorder %s292, %s293
      %p302 = scmp.eq.s32.totalorder %s30, 0
      %p303 = por %p301, %p302
      %p304 = scmp.ne.s32.totalorder %s292, %s293
      %p305 = scmp.eq.s32.totalorder %s31, 3
      %p306 = por %p304, %p305
      %p308 = scmp.ne.s32.totalorder %s293, %s307
      %p309 = scmp.eq.s32.totalorder %s31, 0
      %p310 = por %p308, %p309
      %s311 = ssub.s32 %s25, %s32
      %p312 = scmp.eq.s32.totalorder %s311, 0
      %s314 = sadd.s32 %s313, 1
      %s315 = scalar_select %p312, %s313, %s314
      %p318 = pneg %p312
      %p319 = scmp.eq.s32.totalorder %s25, 3
      %p320 = por %p318, %p319
      %p321 = scmp.ne.s32.totalorder %s313, %s316
      %p322 = scmp.eq.s32.totalorder %s25, 0
      %p323 = por %p321, %p322
      %p324 = scmp.ne.s32.totalorder %s313, %s316
      %p325 = scmp.eq.s32.totalorder %s30, 3
      %p326 = por %p324, %p325
      %p327 = scmp.ne.s32.totalorder %s316, %s317
      %p328 = scmp.eq.s32.totalorder %s30, 0
      %p329 = por %p327, %p328
      %p330 = scmp.ne.s32.totalorder %s316, %s317
      %p331 = scmp.eq.s32.totalorder %s31, 3
      %p332 = por %p330, %p331
      %p334 = scmp.ne.s32.totalorder %s317, %s333
      %p335 = scmp.eq.s32.totalorder %s31, 0
      %p336 = por %p334, %p335
      %p337 = scmp.le.s32.totalorder 1, %s25
      %p338 = scmp.lt.s32.totalorder %s25, 5
      %p339 = pnand %p337, %p338
      %p340 = pneg %p339
      // Predicated region
      $region9: #{tpu_custom_call.1} parent=5 // pred_check
        _
      $region10: #{tpu_custom_call.1} parent=5 // pred_check_branch
        %342 = sbr.rel (%p339) target = $region12
      $region11: #{tpu_custom_call.1} parent=5 // pred_region
        %s343 = ssub.s32 %s25, 1
        // Predicated region
        $region13: #{tpu_custom_call.1} parent=11 // pred_check
          %p344 = pneg %p72
        $region14: #{tpu_custom_call.1} parent=11 // pred_check_branch
          %346 = sbr.rel (%p344) target = $region16
        $region15: #{tpu_custom_call.1} parent=11 // pred_region
          _
        $region16: #{tpu_custom_call.1} parent=11 // pred_fallthru
          _
        // Predicated region
        $region17: #{tpu_custom_call.1} parent=11 // pred_check
          %p347 = pneg %p93
        $region18: #{tpu_custom_call.1} parent=11 // pred_check_branch
          %349 = sbr.rel (%p347) target = $region20
        $region19: #{tpu_custom_call.1} parent=11 // pred_region
          _
        $region20: #{tpu_custom_call.1} parent=11 // pred_fallthru
          _
        // Predicated region
        $region21: #{tpu_custom_call.1} parent=11 // pred_check
          %p350 = pneg %p114
        $region22: #{tpu_custom_call.1} parent=11 // pred_check_branch
          %352 = sbr.rel (%p350) target = $region24
        $region23: #{tpu_custom_call.1} parent=11 // pred_region
          _
        $region24: #{tpu_custom_call.1} parent=11 // pred_fallthru
          _
        // Predicated region
        $region25: #{tpu_custom_call.1} parent=11 // pred_check
          %p353 = pneg %p135
        $region26: #{tpu_custom_call.1} parent=11 // pred_check_branch
          %355 = sbr.rel (%p353) target = $region28
        $region27: #{tpu_custom_call.1} parent=11 // pred_region
          _
        $region28: #{tpu_custom_call.1} parent=11 // pred_fallthru
          _
        // Predicated region
        $region29: #{tpu_custom_call.1} parent=11 // pred_check
          %p356 = pneg %p156
        $region30: #{tpu_custom_call.1} parent=11 // pred_check_branch
          %358 = sbr.rel (%p356) target = $region32
        $region31: #{tpu_custom_call.1} parent=11 // pred_region
          _
        $region32: #{tpu_custom_call.1} parent=11 // pred_fallthru
          _
        // Predicated region
        $region33: #{tpu_custom_call.1} parent=11 // pred_check
          %p359 = pneg %p177
        $region34: #{tpu_custom_call.1} parent=11 // pred_check_branch
          %361 = sbr.rel (%p359) target = $region36
        $region35: #{tpu_custom_call.1} parent=11 // pred_region
          _
        $region36: #{tpu_custom_call.1} parent=11 // pred_fallthru
          _
        // Predicated region
        $region37: #{tpu_custom_call.1} parent=11 // pred_check
          %p362 = pneg %p198
        $region38: #{tpu_custom_call.1} parent=11 // pred_check_branch
          %364 = sbr.rel (%p362) target = $region40
        $region39: #{tpu_custom_call.1} parent=11 // pred_region
          _
        $region40: #{tpu_custom_call.1} parent=11 // pred_fallthru
          _
        // Predicated region
        $region41: #{tpu_custom_call.1} parent=11 // pred_check
          %p365 = pneg %p219
        $region42: #{tpu_custom_call.1} parent=11 // pred_check_branch
          %367 = sbr.rel (%p365) target = $region44
        $region43: #{tpu_custom_call.1} parent=11 // pred_region
          _
        $region44: #{tpu_custom_call.1} parent=11 // pred_fallthru
          _
        // Predicated region
        $region45: #{tpu_custom_call.1} parent=11 // pred_check
          %p368 = pneg %p240
        $region46: #{tpu_custom_call.1} parent=11 // pred_check_branch
          %370 = sbr.rel (%p368) target = $region48
        $region47: #{tpu_custom_call.1} parent=11 // pred_region
          _
        $region48: #{tpu_custom_call.1} parent=11 // pred_fallthru
          _
        // Predicated region
        $region49: #{tpu_custom_call.1} parent=11 // pred_check
          %p371 = pneg %p261
        $region50: #{tpu_custom_call.1} parent=11 // pred_check_branch
          %373 = sbr.rel (%p371) target = $region52
        $region51: #{tpu_custom_call.1} parent=11 // pred_region
          _
        $region52: #{tpu_custom_call.1} parent=11 // pred_fallthru
          _
        // Predicated region
        $region53: #{tpu_custom_call.1} parent=11 // pred_check
          %p374 = pneg %p282
        $region54: #{tpu_custom_call.1} parent=11 // pred_check_branch
          %376 = sbr.rel (%p374) target = $region56
        $region55: #{tpu_custom_call.1} parent=11 // pred_region
          _
        $region56: #{tpu_custom_call.1} parent=11 // pred_fallthru
          _
        // Predicated region
        $region57: #{tpu_custom_call.1} parent=11 // pred_check
          %p377 = pneg %p303
        $region58: #{tpu_custom_call.1} parent=11 // pred_check_branch
          %379 = sbr.rel (%p377) target = $region60
        $region59: #{tpu_custom_call.1} parent=11 // pred_region
          _
        $region60: #{tpu_custom_call.1} parent=11 // pred_fallthru
          _
      $region12: #{tpu_custom_call.1} parent=5 // pred_fallthru
        _
      %p380 = scmp.lt.s32.totalorder %s25, 4
      // Predicated region
      $region61: #{tpu_custom_call.1} parent=5 // pred_check
        %p381 = pneg %p380
      $region62: #{tpu_custom_call.1} parent=5 // pred_check_branch
        %383 = sbr.rel (%p381) target = $region64
      $region63: #{tpu_custom_call.1} parent=5 // pred_region
        // Predicated region
        $region65: #{tpu_custom_call.1} parent=63 // pred_check
          %p384 = pneg %p45
        $region66: #{tpu_custom_call.1} parent=63 // pred_check_branch
          %386 = sbr.rel (%p384) target = $region68
        $region67: #{tpu_custom_call.1} parent=63 // pred_region
          %s387 = sand.u32 %s35, 1
          %s388 = scalar_lea.sflag [#allocation3], %s387
          %s389 = sand.u32 %s35, 1
          %s390 = smul.addr %s389, 64
          %s391 = scalar_lea.vmem [#allocation2], %s390
          %s392 = smul.u32 8, %s25
          %394 = vsyncadd %s388, 0
          %s395 = smul.addr %s392, 8
          %s396 = scalar_lea.hbm %s0, %s395
          %s397 = sshll.u32 %s396, 4
          %s398 = int_to_ptr.hbm [resolvable:$true] %s397
          %s399 = sshll.u32 %s391, 4
          %s400 = int_to_ptr.vmem [resolvable:$true] %s399
          %405 = dma.hbm_to_vmem [thread:$0]  %s398, 1024, %s400, %s388, 128, 128, 8
        $region68: #{tpu_custom_call.1} parent=63 // pred_fallthru
          _
      $region64: #{tpu_custom_call.1} parent=5 // pred_fallthru
        _
      %p406 = scmp.le.s32.totalorder 1, %s25
      %p407 = scmp.lt.s32.totalorder %s25, 5
      %p408 = pnand %p406, %p407
      %p409 = pneg %p408
      // Predicated region
      $region69: #{tpu_custom_call.1} parent=5 // pred_check
        _
      $region70: #{tpu_custom_call.1} parent=5 // pred_check_branch
        %411 = sbr.rel (%p408) target = $region72
      $region71: #{tpu_custom_call.1} parent=5 // pred_region
        %s412 = ssub.s32 %s25, 1
        %s413 = sand.u32 %s38, 1
        %s414 = scalar_lea.sflag [#allocation3], %s413
        %s415 = sand.u32 %s38, 1
        %s416 = smul.addr %s415, 64
        %s417 = scalar_lea.vmem [#allocation2], %s416
        // Predicated region
        $region73: #{tpu_custom_call.1} parent=71 // pred_check
          %p418 = pneg %p51
        $region74: #{tpu_custom_call.1} parent=71 // pred_check_branch
          %420 = sbr.rel (%p418) target = $region76
        $region75: #{tpu_custom_call.1} parent=71 // pred_region
          %422 = dma.done %s414, 1024
        $region76: #{tpu_custom_call.1} parent=71 // pred_fallthru
          _
        %s423 = sand.u32 %s38, 1
        %s424 = scalar_lea.sflag [#allocation3], %s423
        %s425 = sand.u32 %s38, 1
        %s426 = smul.addr %s425, 64
        %s427 = scalar_lea.vmem [#allocation2], %s426
        %p428 = pneg %p51
        %p429 = pneg %p48
        %p430 = pneg %p72
        %p431 = pneg %p69
        %p432 = pneg %p93
        %p433 = pneg %p90
        %p434 = pneg %p114
        %p435 = pneg %p111
        %p436 = pneg %p135
        %p437 = pneg %p132
        %p438 = pneg %p156
        %p439 = pneg %p153
        %p440 = pneg %p177
        %p441 = pneg %p174
        %p442 = pneg %p198
        %p443 = pneg %p195
        %p444 = pneg %p219
        %p445 = pneg %p216
        %p446 = pneg %p240
        %p447 = pneg %p237
        %p448 = pneg %p261
        %p449 = pneg %p258
        %p450 = pneg %p282
        %p451 = pneg %p279
        %p452 = pneg %p303
        %p453 = pneg %p300
        %p454 = pneg %p329
        %p455 = pneg %p326
        %s456 = sand.u32 %s316, 1
        %s457 = scalar_lea.sflag [#allocation4], %s456
        %s458 = sand.u32 %s316, 1
        %s459 = smul.addr %s458, 64
        %s460 = scalar_lea.vmem [#allocation5], %s459
        %s461 = smul.u32 8, %s30
        %s462 = smul.u32 8, %s30
        %v463 = vld [vmem:[%s417] sm:$0xff]
        %v464 = vld [vmem:[%s417 + $0x8] sm:$0xff]
        %v465 = vld [vmem:[%s417 + $0x10] sm:$0xff]
        %v466 = vld [vmem:[%s417 + $0x18] sm:$0xff]
        %v467 = vld [vmem:[%s417 + $0x20] sm:$0xff]
        %v468 = vld [vmem:[%s417 + $0x28] sm:$0xff]
        %v469 = vld [vmem:[%s417 + $0x30] sm:$0xff]
        %v470 = vld [vmem:[%s417 + $0x38] sm:$0xff]
        %v471 = vld [vmem:[%s1] sm:$0xff]
        %v472 = vld [vmem:[%s1 + $0x8] sm:$0xff]
        %v473 = vld [vmem:[%s1 + $0x10] sm:$0xff]
        %v474 = vld [vmem:[%s1 + $0x18] sm:$0xff]
        %v475 = vld [vmem:[%s1 + $0x20] sm:$0xff]
        %v476 = vld [vmem:[%s1 + $0x28] sm:$0xff]
        %v477 = vld [vmem:[%s1 + $0x30] sm:$0xff]
        %v478 = vld [vmem:[%s1 + $0x38] sm:$0xff]
        %v479 = vld [vmem:[%s1 + $0x40] sm:$0xff]
        %v480 = vld [vmem:[%s1 + $0x48] sm:$0xff]
        %v481 = vld [vmem:[%s1 + $0x50] sm:$0xff]
        %v482 = vld [vmem:[%s1 + $0x58] sm:$0xff]
        %v483 = vld [vmem:[%s1 + $0x60] sm:$0xff]
        %v484 = vld [vmem:[%s1 + $0x68] sm:$0xff]
        %v485 = vld [vmem:[%s1 + $0x70] sm:$0xff]
        %v486 = vld [vmem:[%s1 + $0x78] sm:$0xff]
        %v487 = vld [vmem:[%s2] sm:$0x1]
        %v489 = vperm.slane %v487, 0
        %v491 = vand.u32 %v486, 4294901760
        %492 = vmatpush.msra.mxu0 %v491
        %v493 = vand.u32 %v485, 4294901760
        %494 = vmatpush.msra.mxu0 %v493
        %v495 = vand.u32 %v484, 4294901760
        %496 = vmatpush.msra.mxu0 %v495
        %v497 = vand.u32 %v483, 4294901760
        %498 = vmatpush.msra.mxu0 %v497
        %v499 = vand.u32 %v482, 4294901760
        %500 = vmatpush.msra.mxu0 %v499
        %v501 = vand.u32 %v481, 4294901760
        %502 = vmatpush.msra.mxu0 %v501
        %v503 = vand.u32 %v480, 4294901760
        %504 = vmatpush.msra.mxu0 %v503
        %v505 = vand.u32 %v479, 4294901760
        %506 = vmatpush.msra.mxu0 %v505
        %v507 = vand.u32 %v478, 4294901760
        %508 = vmatpush.msra.mxu0 %v507
        %v509 = vand.u32 %v477, 4294901760
        %510 = vmatpush.msra.mxu0 %v509
        %v511 = vand.u32 %v476, 4294901760
        %512 = vmatpush.msra.mxu0 %v511
        %v513 = vand.u32 %v475, 4294901760
        %514 = vmatpush.msra.mxu0 %v513
        %v515 = vand.u32 %v474, 4294901760
        %516 = vmatpush.msra.mxu0 %v515
        %v517 = vand.u32 %v473, 4294901760
        %518 = vmatpush.msra.mxu0 %v517
        %v519 = vand.u32 %v472, 4294901760
        %520 = vmatpush.msra.mxu0 %v519
        %v521 = vand.u32 %v471, 4294901760
        %522 = vmatpush.msra.mxu0 %v521
        %v523 = vand.u32 %v463, 4294901760
        %v524 = vsub.f32 %v463, %v523
        %v525 = vand.u32 %v524, 4294901760
        %v526 = vsub.f32 %v524, %v525
        %v527 = vand.u32 %v526, 4294901760
        %528 = vmatmul.f32.gmra.mxu0 %v527
        %v529 = vpop.f32.mrf.mxu0
        %v530 = vadd.f32 %v489, %v529
        %v531 = vand.u32 %v464, 4294901760
        %v532 = vsub.f32 %v464, %v531
        %v533 = vand.u32 %v532, 4294901760
        %v534 = vsub.f32 %v532, %v533
        %v535 = vand.u32 %v534, 4294901760
        %536 = vmatmul.f32.gmra.mxu0 %v535
        %v537 = vpop.f32.mrf.mxu0
        %v538 = vadd.f32 %v489, %v537
        %v539 = vand.u32 %v465, 4294901760
        %v540 = vsub.f32 %v465, %v539
        %v541 = vand.u32 %v540, 4294901760
        %v542 = vsub.f32 %v540, %v541
        %v543 = vand.u32 %v542, 4294901760
        %544 = vmatmul.f32.gmra.mxu0 %v543
        %v545 = vpop.f32.mrf.mxu0
        %v546 = vadd.f32 %v489, %v545
        %v547 = vand.u32 %v466, 4294901760
        %v548 = vsub.f32 %v466, %v547
        %v549 = vand.u32 %v548, 4294901760
        %v550 = vsub.f32 %v548, %v549
        %v551 = vand.u32 %v550, 4294901760
        %552 = vmatmul.f32.gmra.mxu0 %v551
        %v553 = vpop.f32.mrf.mxu0
        %v554 = vadd.f32 %v489, %v553
        %v555 = vand.u32 %v467, 4294901760
        %v556 = vsub.f32 %v467, %v555
        %v557 = vand.u32 %v556, 4294901760
        %v558 = vsub.f32 %v556, %v557
        %v559 = vand.u32 %v558, 4294901760
        %560 = vmatmul.f32.gmra.mxu0 %v559
        %v561 = vpop.f32.mrf.mxu0
        %v562 = vadd.f32 %v489, %v561
        %v563 = vand.u32 %v468, 4294901760
        %v564 = vsub.f32 %v468, %v563
        %v565 = vand.u32 %v564, 4294901760
        %v566 = vsub.f32 %v564, %v565
        %v567 = vand.u32 %v566, 4294901760
        %568 = vmatmul.f32.gmra.mxu0 %v567
        %v569 = vpop.f32.mrf.mxu0
        %v570 = vadd.f32 %v489, %v569
        %v571 = vand.u32 %v469, 4294901760
        %v572 = vsub.f32 %v469, %v571
        %v573 = vand.u32 %v572, 4294901760
        %v574 = vsub.f32 %v572, %v573
        %v575 = vand.u32 %v574, 4294901760
        %576 = vmatmul.f32.gmra.mxu0 %v575
        %v577 = vpop.f32.mrf.mxu0
        %v578 = vadd.f32 %v489, %v577
        %v579 = vand.u32 %v470, 4294901760
        %v580 = vsub.f32 %v470, %v579
        %v581 = vand.u32 %v580, 4294901760
        %v582 = vsub.f32 %v580, %v581
        %v583 = vand.u32 %v582, 4294901760
        %584 = vmatmul.f32.gmra.mxu0 %v583
        %v585 = vpop.f32.mrf.mxu0
        %v586 = vadd.f32 %v489, %v585
        %587 = vdwg.mxu0
        %v588 = vand.u32 %v486, 4294901760
        %v589 = vsub.f32 %v486, %v588
        %v590 = vand.u32 %v589, 4294901760
        %v591 = vsub.f32 %v589, %v590
        %v592 = vand.u32 %v591, 4294901760
        %593 = vmatpush.msra.mxu0 %v592
        %v594 = vand.u32 %v485, 4294901760
        %v595 = vsub.f32 %v485, %v594
        %v596 = vand.u32 %v595, 4294901760
        %v597 = vsub.f32 %v595, %v596
        %v598 = vand.u32 %v597, 4294901760
        %599 = vmatpush.msra.mxu0 %v598
        %v600 = vand.u32 %v484, 4294901760
        %v601 = vsub.f32 %v484, %v600
        %v602 = vand.u32 %v601, 4294901760
        %v603 = vsub.f32 %v601, %v602
        %v604 = vand.u32 %v603, 4294901760
        %605 = vmatpush.msra.mxu0 %v604
        %v606 = vand.u32 %v483, 4294901760
        %v607 = vsub.f32 %v483, %v606
        %v608 = vand.u32 %v607, 4294901760
        %v609 = vsub.f32 %v607, %v608
        %v610 = vand.u32 %v609, 4294901760
        %611 = vmatpush.msra.mxu0 %v610
        %v612 = vand.u32 %v482, 4294901760
        %v613 = vsub.f32 %v482, %v612
        %v614 = vand.u32 %v613, 4294901760
        %v615 = vsub.f32 %v613, %v614
        %v616 = vand.u32 %v615, 4294901760
        %617 = vmatpush.msra.mxu0 %v616
        %v618 = vand.u32 %v481, 4294901760
        %v619 = vsub.f32 %v481, %v618
        %v620 = vand.u32 %v619, 4294901760
        %v621 = vsub.f32 %v619, %v620
        %v622 = vand.u32 %v621, 4294901760
        %623 = vmatpush.msra.mxu0 %v622
        %v624 = vand.u32 %v480, 4294901760
        %v625 = vsub.f32 %v480, %v624
        %v626 = vand.u32 %v625, 4294901760
        %v627 = vsub.f32 %v625, %v626
        %v628 = vand.u32 %v627, 4294901760
        %629 = vmatpush.msra.mxu0 %v628
        %v630 = vand.u32 %v479, 4294901760
        %v631 = vsub.f32 %v479, %v630
        %v632 = vand.u32 %v631, 4294901760
        %v633 = vsub.f32 %v631, %v632
        %v634 = vand.u32 %v633, 4294901760
        %635 = vmatpush.msra.mxu0 %v634
        %v636 = vand.u32 %v478, 4294901760
        %v637 = vsub.f32 %v478, %v636
        %v638 = vand.u32 %v637, 4294901760
        %v639 = vsub.f32 %v637, %v638
        %v640 = vand.u32 %v639, 4294901760
        %641 = vmatpush.msra.mxu0 %v640
        %v642 = vand.u32 %v477, 4294901760
        %v643 = vsub.f32 %v477, %v642
        %v644 = vand.u32 %v643, 4294901760
        %v645 = vsub.f32 %v643, %v644
        %v646 = vand.u32 %v645, 4294901760
        %647 = vmatpush.msra.mxu0 %v646
        %v648 = vand.u32 %v476, 4294901760
        %v649 = vsub.f32 %v476, %v648
        %v650 = vand.u32 %v649, 4294901760
        %v651 = vsub.f32 %v649, %v650
        %v652 = vand.u32 %v651, 4294901760
        %653 = vmatpush.msra.mxu0 %v652
        %v654 = vand.u32 %v475, 4294901760
        %v655 = vsub.f32 %v475, %v654
        %v656 = vand.u32 %v655, 4294901760
        %v657 = vsub.f32 %v655, %v656
        %v658 = vand.u32 %v657, 4294901760
        %659 = vmatpush.msra.mxu0 %v658
        %v660 = vand.u32 %v474, 4294901760
        %v661 = vsub.f32 %v474, %v660
        %v662 = vand.u32 %v661, 4294901760
        %v663 = vsub.f32 %v661, %v662
        %v664 = vand.u32 %v663, 4294901760
        %665 = vmatpush.msra.mxu0 %v664
        %v666 = vand.u32 %v473, 4294901760
        %v667 = vsub.f32 %v473, %v666
        %v668 = vand.u32 %v667, 4294901760
        %v669 = vsub.f32 %v667, %v668
        %v670 = vand.u32 %v669, 4294901760
        %671 = vmatpush.msra.mxu0 %v670
        %v672 = vand.u32 %v472, 4294901760
        %v673 = vsub.f32 %v472, %v672
        %v674 = vand.u32 %v673, 4294901760
        %v675 = vsub.f32 %v673, %v674
        %v676 = vand.u32 %v675, 4294901760
        %677 = vmatpush.msra.mxu0 %v676
        %v678 = vand.u32 %v471, 4294901760
        %v679 = vsub.f32 %v471, %v678
        %v680 = vand.u32 %v679, 4294901760
        %v681 = vsub.f32 %v679, %v680
        %v682 = vand.u32 %v681, 4294901760
        %683 = vmatpush.msra.mxu0 %v682
        %v684 = vand.u32 %v463, 4294901760
        %685 = vmatmul.f32.gmra.mxu0 %v684
        %v686 = vpop.f32.mrf.mxu0
        %v687 = vadd.f32 %v530, %v686
        %v688 = vand.u32 %v464, 4294901760
        %689 = vmatmul.f32.gmra.mxu0 %v688
        %v690 = vpop.f32.mrf.mxu0
        %v691 = vadd.f32 %v538, %v690
        %v692 = vand.u32 %v465, 4294901760
        %693 = vmatmul.f32.gmra.mxu0 %v692
        %v694 = vpop.f32.mrf.mxu0
        %v695 = vadd.f32 %v546, %v694
        %v696 = vand.u32 %v466, 4294901760
        %697 = vmatmul.f32.gmra.mxu0 %v696
        %v698 = vpop.f32.mrf.mxu0
        %v699 = vadd.f32 %v554, %v698
        %v700 = vand.u32 %v467, 4294901760
        %701 = vmatmul.f32.gmra.mxu0 %v700
        %v702 = vpop.f32.mrf.mxu0
        %v703 = vadd.f32 %v562, %v702
        %v704 = vand.u32 %v468, 4294901760
        %705 = vmatmul.f32.gmra.mxu0 %v704
        %v706 = vpop.f32.mrf.mxu0
        %v707 = vadd.f32 %v570, %v706
        %v708 = vand.u32 %v469, 4294901760
        %709 = vmatmul.f32.gmra.mxu0 %v708
        %v710 = vpop.f32.mrf.mxu0
        %v711 = vadd.f32 %v578, %v710
        %v712 = vand.u32 %v470, 4294901760
        %713 = vmatmul.f32.gmra.mxu0 %v712
        %v714 = vpop.f32.mrf.mxu0
        %v715 = vadd.f32 %v586, %v714
        %716 = vdwg.mxu0
        %v717 = vand.u32 %v486, 4294901760
        %v718 = vsub.f32 %v486, %v717
        %719 = vmatpush.msra.mxu0 %v718
        %v720 = vand.u32 %v485, 4294901760
        %v721 = vsub.f32 %v485, %v720
        %722 = vmatpush.msra.mxu0 %v721
        %v723 = vand.u32 %v484, 4294901760
        %v724 = vsub.f32 %v484, %v723
        %725 = vmatpush.msra.mxu0 %v724
        %v726 = vand.u32 %v483, 4294901760
        %v727 = vsub.f32 %v483, %v726
        %728 = vmatpush.msra.mxu0 %v727
        %v729 = vand.u32 %v482, 4294901760
        %v730 = vsub.f32 %v482, %v729
        %731 = vmatpush.msra.mxu0 %v730
        %v732 = vand.u32 %v481, 4294901760
        %v733 = vsub.f32 %v481, %v732
        %734 = vmatpush.msra.mxu0 %v733
        %v735 = vand.u32 %v480, 4294901760
        %v736 = vsub.f32 %v480, %v735
        %737 = vmatpush.msra.mxu0 %v736
        %v738 = vand.u32 %v479, 4294901760
        %v739 = vsub.f32 %v479, %v738
        %740 = vmatpush.msra.mxu0 %v739
        %v741 = vand.u32 %v478, 4294901760
        %v742 = vsub.f32 %v478, %v741
        %743 = vmatpush.msra.mxu0 %v742
        %v744 = vand.u32 %v477, 4294901760
        %v745 = vsub.f32 %v477, %v744
        %746 = vmatpush.msra.mxu0 %v745
        %v747 = vand.u32 %v476, 4294901760
        %v748 = vsub.f32 %v476, %v747
        %749 = vmatpush.msra.mxu0 %v748
        %v750 = vand.u32 %v475, 4294901760
        %v751 = vsub.f32 %v475, %v750
        %752 = vmatpush.msra.mxu0 %v751
        %v753 = vand.u32 %v474, 4294901760
        %v754 = vsub.f32 %v474, %v753
        %755 = vmatpush.msra.mxu0 %v754
        %v756 = vand.u32 %v473, 4294901760
        %v757 = vsub.f32 %v473, %v756
        %758 = vmatpush.msra.mxu0 %v757
        %v759 = vand.u32 %v472, 4294901760
        %v760 = vsub.f32 %v472, %v759
        %761 = vmatpush.msra.mxu0 %v760
        %v762 = vand.u32 %v471, 4294901760
        %v763 = vsub.f32 %v471, %v762
        %764 = vmatpush.msra.mxu0 %v763
        %v765 = vand.u32 %v463, 4294901760
        %v766 = vsub.f32 %v463, %v765
        %767 = vmatmul.f32.gmra.mxu0 %v766
        %v768 = vpop.f32.mrf.mxu0
        %v769 = vadd.f32 %v687, %v768
        %v770 = vand.u32 %v464, 4294901760
        %v771 = vsub.f32 %v464, %v770
        %772 = vmatmul.f32.gmra.mxu0 %v771
        %v773 = vpop.f32.mrf.mxu0
        %v774 = vadd.f32 %v691, %v773
        %v775 = vand.u32 %v465, 4294901760
        %v776 = vsub.f32 %v465, %v775
        %777 = vmatmul.f32.gmra.mxu0 %v776
        %v778 = vpop.f32.mrf.mxu0
        %v779 = vadd.f32 %v695, %v778
        %v780 = vand.u32 %v466, 4294901760
        %v781 = vsub.f32 %v466, %v780
        %782 = vmatmul.f32.gmra.mxu0 %v781
        %v783 = vpop.f32.mrf.mxu0
        %v784 = vadd.f32 %v699, %v783
        %v785 = vand.u32 %v467, 4294901760
        %v786 = vsub.f32 %v467, %v785
        %787 = vmatmul.f32.gmra.mxu0 %v786
        %v788 = vpop.f32.mrf.mxu0
        %v789 = vadd.f32 %v703, %v788
        %v790 = vand.u32 %v468, 4294901760
        %v791 = vsub.f32 %v468, %v790
        %792 = vmatmul.f32.gmra.mxu0 %v791
        %v793 = vpop.f32.mrf.mxu0
        %v794 = vadd.f32 %v707, %v793
        %v795 = vand.u32 %v469, 4294901760
        %v796 = vsub.f32 %v469, %v795
        %797 = vmatmul.f32.gmra.mxu0 %v796
        %v798 = vpop.f32.mrf.mxu0
        %v799 = vadd.f32 %v711, %v798
        %v800 = vand.u32 %v470, 4294901760
        %v801 = vsub.f32 %v470, %v800
        %802 = vmatmul.f32.gmra.mxu0 %v801
        %v803 = vpop.f32.mrf.mxu0
        %v804 = vadd.f32 %v715, %v803
        %805 = vdwg.mxu0
        %v806 = vand.u32 %v486, 4294901760
        %807 = vmatpush.msra.mxu0 %v806
        %v808 = vand.u32 %v485, 4294901760
        %809 = vmatpush.msra.mxu0 %v808
        %v810 = vand.u32 %v484, 4294901760
        %811 = vmatpush.msra.mxu0 %v810
        %v812 = vand.u32 %v483, 4294901760
        %813 = vmatpush.msra.mxu0 %v812
        %v814 = vand.u32 %v482, 4294901760
        %815 = vmatpush.msra.mxu0 %v814
        %v816 = vand.u32 %v481, 4294901760
        %817 = vmatpush.msra.mxu0 %v816
        %v818 = vand.u32 %v480, 4294901760
        %819 = vmatpush.msra.mxu0 %v818
        %v820 = vand.u32 %v479, 4294901760
        %821 = vmatpush.msra.mxu0 %v820
        %v822 = vand.u32 %v478, 4294901760
        %823 = vmatpush.msra.mxu0 %v822
        %v824 = vand.u32 %v477, 4294901760
        %825 = vmatpush.msra.mxu0 %v824
        %v826 = vand.u32 %v476, 4294901760
        %827 = vmatpush.msra.mxu0 %v826
        %v828 = vand.u32 %v475, 4294901760
        %829 = vmatpush.msra.mxu0 %v828
        %v830 = vand.u32 %v474, 4294901760
        %831 = vmatpush.msra.mxu0 %v830
        %v832 = vand.u32 %v473, 4294901760
        %833 = vmatpush.msra.mxu0 %v832
        %v834 = vand.u32 %v472, 4294901760
        %835 = vmatpush.msra.mxu0 %v834
        %v836 = vand.u32 %v471, 4294901760
        %837 = vmatpush.msra.mxu0 %v836
        %v838 = vand.u32 %v463, 4294901760
        %v839 = vsub.f32 %v463, %v838
        %v840 = vand.u32 %v839, 4294901760
        %841 = vmatmul.f32.gmra.mxu0 %v840
        %v842 = vpop.f32.mrf.mxu0
        %v843 = vadd.f32 %v769, %v842
        %v844 = vand.u32 %v464, 4294901760
        %v845 = vsub.f32 %v464, %v844
        %v846 = vand.u32 %v845, 4294901760
        %847 = vmatmul.f32.gmra.mxu0 %v846
        %v848 = vpop.f32.mrf.mxu0
        %v849 = vadd.f32 %v774, %v848
        %v850 = vand.u32 %v465, 4294901760
        %v851 = vsub.f32 %v465, %v850
        %v852 = vand.u32 %v851, 4294901760
        %853 = vmatmul.f32.gmra.mxu0 %v852
        %v854 = vpop.f32.mrf.mxu0
        %v855 = vadd.f32 %v779, %v854
        %v856 = vand.u32 %v466, 4294901760
        %v857 = vsub.f32 %v466, %v856
        %v858 = vand.u32 %v857, 4294901760
        %859 = vmatmul.f32.gmra.mxu0 %v858
        %v860 = vpop.f32.mrf.mxu0
        %v861 = vadd.f32 %v784, %v860
        %v862 = vand.u32 %v467, 4294901760
        %v863 = vsub.f32 %v467, %v862
        %v864 = vand.u32 %v863, 4294901760
        %865 = vmatmul.f32.gmra.mxu0 %v864
        %v866 = vpop.f32.mrf.mxu0
        %v867 = vadd.f32 %v789, %v866
        %v868 = vand.u32 %v468, 4294901760
        %v869 = vsub.f32 %v468, %v868
        %v870 = vand.u32 %v869, 4294901760
        %871 = vmatmul.f32.gmra.mxu0 %v870
        %v872 = vpop.f32.mrf.mxu0
        %v873 = vadd.f32 %v794, %v872
        %v874 = vand.u32 %v469, 4294901760
        %v875 = vsub.f32 %v469, %v874
        %v876 = vand.u32 %v875, 4294901760
        %877 = vmatmul.f32.gmra.mxu0 %v876
        %v878 = vpop.f32.mrf.mxu0
        %v879 = vadd.f32 %v799, %v878
        %v880 = vand.u32 %v470, 4294901760
        %v881 = vsub.f32 %v470, %v880
        %v882 = vand.u32 %v881, 4294901760
        %883 = vmatmul.f32.gmra.mxu0 %v882
        %v884 = vpop.f32.mrf.mxu0
        %v885 = vadd.f32 %v804, %v884
        %886 = vdwg.mxu0
        %v887 = vand.u32 %v486, 4294901760
        %v888 = vsub.f32 %v486, %v887
        %v889 = vand.u32 %v888, 4294901760
        %890 = vmatpush.msra.mxu0 %v889
        %v891 = vand.u32 %v485, 4294901760
        %v892 = vsub.f32 %v485, %v891
        %v893 = vand.u32 %v892, 4294901760
        %894 = vmatpush.msra.mxu0 %v893
        %v895 = vand.u32 %v484, 4294901760
        %v896 = vsub.f32 %v484, %v895
        %v897 = vand.u32 %v896, 4294901760
        %898 = vmatpush.msra.mxu0 %v897
        %v899 = vand.u32 %v483, 4294901760
        %v900 = vsub.f32 %v483, %v899
        %v901 = vand.u32 %v900, 4294901760
        %902 = vmatpush.msra.mxu0 %v901
        %v903 = vand.u32 %v482, 4294901760
        %v904 = vsub.f32 %v482, %v903
        %v905 = vand.u32 %v904, 4294901760
        %906 = vmatpush.msra.mxu0 %v905
        %v907 = vand.u32 %v481, 4294901760
        %v908 = vsub.f32 %v481, %v907
        %v909 = vand.u32 %v908, 4294901760
        %910 = vmatpush.msra.mxu0 %v909
        %v911 = vand.u32 %v480, 4294901760
        %v912 = vsub.f32 %v480, %v911
        %v913 = vand.u32 %v912, 4294901760
        %914 = vmatpush.msra.mxu0 %v913
        %v915 = vand.u32 %v479, 4294901760
        %v916 = vsub.f32 %v479, %v915
        %v917 = vand.u32 %v916, 4294901760
        %918 = vmatpush.msra.mxu0 %v917
        %v919 = vand.u32 %v478, 4294901760
        %v920 = vsub.f32 %v478, %v919
        %v921 = vand.u32 %v920, 4294901760
        %922 = vmatpush.msra.mxu0 %v921
        %v923 = vand.u32 %v477, 4294901760
        %v924 = vsub.f32 %v477, %v923
        %v925 = vand.u32 %v924, 4294901760
        %926 = vmatpush.msra.mxu0 %v925
        %v927 = vand.u32 %v476, 4294901760
        %v928 = vsub.f32 %v476, %v927
        %v929 = vand.u32 %v928, 4294901760
        %930 = vmatpush.msra.mxu0 %v929
        %v931 = vand.u32 %v475, 4294901760
        %v932 = vsub.f32 %v475, %v931
        %v933 = vand.u32 %v932, 4294901760
        %934 = vmatpush.msra.mxu0 %v933
        %v935 = vand.u32 %v474, 4294901760
        %v936 = vsub.f32 %v474, %v935
        %v937 = vand.u32 %v936, 4294901760
        %938 = vmatpush.msra.mxu0 %v937
        %v939 = vand.u32 %v473, 4294901760
        %v940 = vsub.f32 %v473, %v939
        %v941 = vand.u32 %v940, 4294901760
        %942 = vmatpush.msra.mxu0 %v941
        %v943 = vand.u32 %v472, 4294901760
        %v944 = vsub.f32 %v472, %v943
        %v945 = vand.u32 %v944, 4294901760
        %946 = vmatpush.msra.mxu0 %v945
        %v947 = vand.u32 %v471, 4294901760
        %v948 = vsub.f32 %v471, %v947
        %v949 = vand.u32 %v948, 4294901760
        %950 = vmatpush.msra.mxu0 %v949
        %v951 = vand.u32 %v463, 4294901760
        %952 = vmatmul.f32.gmra.mxu0 %v951
        %v953 = vpop.f32.mrf.mxu0
        %v954 = vadd.f32 %v843, %v953
        %v955 = vand.u32 %v464, 4294901760
        %956 = vmatmul.f32.gmra.mxu0 %v955
        %v957 = vpop.f32.mrf.mxu0
        %v958 = vadd.f32 %v849, %v957
        %v959 = vand.u32 %v465, 4294901760
        %960 = vmatmul.f32.gmra.mxu0 %v959
        %v961 = vpop.f32.mrf.mxu0
        %v962 = vadd.f32 %v855, %v961
        %v963 = vand.u32 %v466, 4294901760
        %964 = vmatmul.f32.gmra.mxu0 %v963
        %v965 = vpop.f32.mrf.mxu0
        %v966 = vadd.f32 %v861, %v965
        %v967 = vand.u32 %v467, 4294901760
        %968 = vmatmul.f32.gmra.mxu0 %v967
        %v969 = vpop.f32.mrf.mxu0
        %v970 = vadd.f32 %v867, %v969
        %v971 = vand.u32 %v468, 4294901760
        %972 = vmatmul.f32.gmra.mxu0 %v971
        %v973 = vpop.f32.mrf.mxu0
        %v974 = vadd.f32 %v873, %v973
        %v975 = vand.u32 %v469, 4294901760
        %976 = vmatmul.f32.gmra.mxu0 %v975
        %v977 = vpop.f32.mrf.mxu0
        %v978 = vadd.f32 %v879, %v977
        %v979 = vand.u32 %v470, 4294901760
        %980 = vmatmul.f32.gmra.mxu0 %v979
        %v981 = vpop.f32.mrf.mxu0
        %v982 = vadd.f32 %v885, %v981
        %983 = vdwg.mxu0
        %v984 = vand.u32 %v486, 4294901760
        %985 = vmatpush.msra.mxu0 %v984
        %v986 = vand.u32 %v485, 4294901760
        %987 = vmatpush.msra.mxu0 %v986
        %v988 = vand.u32 %v484, 4294901760
        %989 = vmatpush.msra.mxu0 %v988
        %v990 = vand.u32 %v483, 4294901760
        %991 = vmatpush.msra.mxu0 %v990
        %v992 = vand.u32 %v482, 4294901760
        %993 = vmatpush.msra.mxu0 %v992
        %v994 = vand.u32 %v481, 4294901760
        %995 = vmatpush.msra.mxu0 %v994
        %v996 = vand.u32 %v480, 4294901760
        %997 = vmatpush.msra.mxu0 %v996
        %v998 = vand.u32 %v479, 4294901760
        %999 = vmatpush.msra.mxu0 %v998
        %v1000 = vand.u32 %v478, 4294901760
        %1001 = vmatpush.msra.mxu0 %v1000
        %v1002 = vand.u32 %v477, 4294901760
        %1003 = vmatpush.msra.mxu0 %v1002
        %v1004 = vand.u32 %v476, 4294901760
        %1005 = vmatpush.msra.mxu0 %v1004
        %v1006 = vand.u32 %v475, 4294901760
        %1007 = vmatpush.msra.mxu0 %v1006
        %v1008 = vand.u32 %v474, 4294901760
        %1009 = vmatpush.msra.mxu0 %v1008
        %v1010 = vand.u32 %v473, 4294901760
        %1011 = vmatpush.msra.mxu0 %v1010
        %v1012 = vand.u32 %v472, 4294901760
        %1013 = vmatpush.msra.mxu0 %v1012
        %v1014 = vand.u32 %v471, 4294901760
        %1015 = vmatpush.msra.mxu0 %v1014
        %v1016 = vand.u32 %v463, 4294901760
        %1017 = vmatmul.f32.gmra.mxu0 %v1016
        %v1018 = vpop.f32.mrf.mxu0
        %v1019 = vadd.f32 %v954, %v1018
        %v1020 = vand.u32 %v464, 4294901760
        %1021 = vmatmul.f32.gmra.mxu0 %v1020
        %v1022 = vpop.f32.mrf.mxu0
        %v1023 = vadd.f32 %v958, %v1022
        %v1024 = vand.u32 %v465, 4294901760
        %1025 = vmatmul.f32.gmra.mxu0 %v1024
        %v1026 = vpop.f32.mrf.mxu0
        %v1027 = vadd.f32 %v962, %v1026
        %v1028 = vand.u32 %v466, 4294901760
        %1029 = vmatmul.f32.gmra.mxu0 %v1028
        %v1030 = vpop.f32.mrf.mxu0
        %v1031 = vadd.f32 %v966, %v1030
        %v1032 = vand.u32 %v467, 4294901760
        %1033 = vmatmul.f32.gmra.mxu0 %v1032
        %v1034 = vpop.f32.mrf.mxu0
        %v1035 = vadd.f32 %v970, %v1034
        %v1036 = vand.u32 %v468, 4294901760
        %1037 = vmatmul.f32.gmra.mxu0 %v1036
        %v1038 = vpop.f32.mrf.mxu0
        %v1039 = vadd.f32 %v974, %v1038
        %v1040 = vand.u32 %v469, 4294901760
        %1041 = vmatmul.f32.gmra.mxu0 %v1040
        %v1042 = vpop.f32.mrf.mxu0
        %v1043 = vadd.f32 %v978, %v1042
        %v1044 = vand.u32 %v470, 4294901760
        %1045 = vmatmul.f32.gmra.mxu0 %v1044
        %v1046 = vpop.f32.mrf.mxu0
        %v1047 = vadd.f32 %v982, %v1046
        %1048 = vdwg.mxu0
        %v1049 = vtanh.pop %v1019
        %v1050 = vtanh.pop %v1023
        %v1051 = vtanh.pop %v1027
        %v1052 = vtanh.pop %v1031
        %v1053 = vtanh.pop %v1035
        %v1054 = vtanh.pop %v1039
        %v1055 = vtanh.pop %v1043
        %v1056 = vtanh.pop %v1047
        %v1057 = vld [vmem:[%s3] sm:$0xff]
        %v1058 = vld [vmem:[%s3 + $0x8] sm:$0xff]
        %v1059 = vld [vmem:[%s3 + $0x10] sm:$0xff]
        %v1060 = vld [vmem:[%s3 + $0x18] sm:$0xff]
        %v1061 = vld [vmem:[%s3 + $0x20] sm:$0xff]
        %v1062 = vld [vmem:[%s3 + $0x28] sm:$0xff]
        %v1063 = vld [vmem:[%s3 + $0x30] sm:$0xff]
        %v1064 = vld [vmem:[%s3 + $0x38] sm:$0xff]
        %v1065 = vld [vmem:[%s4] sm:$0x1]
        %v1067 = vperm.slane %v1065, 0
        %vm1069 = vcmask 523264
        %v1071 = vsel %vm1069, %v1049, 0
        %v1074 = vsel %vm1069, %v1050, 0
        %v1077 = vsel %vm1069, %v1051, 0
        %v1080 = vsel %vm1069, %v1052, 0
        %v1083 = vsel %vm1069, %v1053, 0
        %v1086 = vsel %vm1069, %v1054, 0
        %v1089 = vsel %vm1069, %v1055, 0
        %v1092 = vsel %vm1069, %v1056, 0
        %1094 = vmatpush.msra.mxu0 0.0
        %1095 = vmatpush.msra.mxu0 0.0
        %1096 = vmatpush.msra.mxu0 0.0
        %1097 = vmatpush.msra.mxu0 0.0
        %1098 = vmatpush.msra.mxu0 0.0
        %1099 = vmatpush.msra.mxu0 0.0
        %1100 = vmatpush.msra.mxu0 0.0
        %1101 = vmatpush.msra.mxu0 0.0
        %v1102 = vand.u32 %v1064, 4294901760
        %1103 = vmatpush.msra.mxu0 %v1102
        %v1104 = vand.u32 %v1063, 4294901760
        %1105 = vmatpush.msra.mxu0 %v1104
        %v1106 = vand.u32 %v1062, 4294901760
        %1107 = vmatpush.msra.mxu0 %v1106
        %v1108 = vand.u32 %v1061, 4294901760
        %1109 = vmatpush.msra.mxu0 %v1108
        %v1110 = vand.u32 %v1060, 4294901760
        %1111 = vmatpush.msra.mxu0 %v1110
        %v1112 = vand.u32 %v1059, 4294901760
        %1113 = vmatpush.msra.mxu0 %v1112
        %v1114 = vand.u32 %v1058, 4294901760
        %1115 = vmatpush.msra.mxu0 %v1114
        %v1116 = vand.u32 %v1057, 4294901760
        %1117 = vmatpush.msra.mxu0 %v1116
        %v1118 = vand.u32 %v1071, 4294901760
        %v1119 = vsub.f32 %v1071, %v1118
        %v1120 = vand.u32 %v1119, 4294901760
        %v1121 = vsub.f32 %v1119, %v1120
        %v1122 = vand.u32 %v1121, 4294901760
        %1123 = vmatmul.f32.gmra.mxu0 %v1122
        %v1124 = vpop.f32.mrf.mxu0
        %v1125 = vadd.f32 %v1067, %v1124
        %v1126 = vand.u32 %v1074, 4294901760
        %v1127 = vsub.f32 %v1074, %v1126
        %v1128 = vand.u32 %v1127, 4294901760
        %v1129 = vsub.f32 %v1127, %v1128
        %v1130 = vand.u32 %v1129, 4294901760
        %1131 = vmatmul.f32.gmra.mxu0 %v1130
        %v1132 = vpop.f32.mrf.mxu0
        %v1133 = vadd.f32 %v1067, %v1132
        %v1134 = vand.u32 %v1077, 4294901760
        %v1135 = vsub.f32 %v1077, %v1134
        %v1136 = vand.u32 %v1135, 4294901760
        %v1137 = vsub.f32 %v1135, %v1136
        %v1138 = vand.u32 %v1137, 4294901760
        %1139 = vmatmul.f32.gmra.mxu0 %v1138
        %v1140 = vpop.f32.mrf.mxu0
        %v1141 = vadd.f32 %v1067, %v1140
        %v1142 = vand.u32 %v1080, 4294901760
        %v1143 = vsub.f32 %v1080, %v1142
        %v1144 = vand.u32 %v1143, 4294901760
        %v1145 = vsub.f32 %v1143, %v1144
        %v1146 = vand.u32 %v1145, 4294901760
        %1147 = vmatmul.f32.gmra.mxu0 %v1146
        %v1148 = vpop.f32.mrf.mxu0
        %v1149 = vadd.f32 %v1067, %v1148
        %v1150 = vand.u32 %v1083, 4294901760
        %v1151 = vsub.f32 %v1083, %v1150
        %v1152 = vand.u32 %v1151, 4294901760
        %v1153 = vsub.f32 %v1151, %v1152
        %v1154 = vand.u32 %v1153, 4294901760
        %1155 = vmatmul.f32.gmra.mxu0 %v1154
        %v1156 = vpop.f32.mrf.mxu0
        %v1157 = vadd.f32 %v1067, %v1156
        %v1158 = vand.u32 %v1086, 4294901760
        %v1159 = vsub.f32 %v1086, %v1158
        %v1160 = vand.u32 %v1159, 4294901760
        %v1161 = vsub.f32 %v1159, %v1160
        %v1162 = vand.u32 %v1161, 4294901760
        %1163 = vmatmul.f32.gmra.mxu0 %v1162
        %v1164 = vpop.f32.mrf.mxu0
        %v1165 = vadd.f32 %v1067, %v1164
        %v1166 = vand.u32 %v1089, 4294901760
        %v1167 = vsub.f32 %v1089, %v1166
        %v1168 = vand.u32 %v1167, 4294901760
        %v1169 = vsub.f32 %v1167, %v1168
        %v1170 = vand.u32 %v1169, 4294901760
        %1171 = vmatmul.f32.gmra.mxu0 %v1170
        %v1172 = vpop.f32.mrf.mxu0
        %v1173 = vadd.f32 %v1067, %v1172
        %v1174 = vand.u32 %v1092, 4294901760
        %v1175 = vsub.f32 %v1092, %v1174
        %v1176 = vand.u32 %v1175, 4294901760
        %v1177 = vsub.f32 %v1175, %v1176
        %v1178 = vand.u32 %v1177, 4294901760
        %1179 = vmatmul.f32.gmra.mxu0 %v1178
        %v1180 = vpop.f32.mrf.mxu0
        %v1181 = vadd.f32 %v1067, %v1180
        %1182 = vdwg.mxu0
        %1183 = vmatpush.msra.mxu0 0.0
        %1184 = vmatpush.msra.mxu0 0.0
        %1185 = vmatpush.msra.mxu0 0.0
        %1186 = vmatpush.msra.mxu0 0.0
        %1187 = vmatpush.msra.mxu0 0.0
        %1188 = vmatpush.msra.mxu0 0.0
        %1189 = vmatpush.msra.mxu0 0.0
        %1190 = vmatpush.msra.mxu0 0.0
        %v1191 = vand.u32 %v1064, 4294901760
        %v1192 = vsub.f32 %v1064, %v1191
        %v1193 = vand.u32 %v1192, 4294901760
        %v1194 = vsub.f32 %v1192, %v1193
        %v1195 = vand.u32 %v1194, 4294901760
        %1196 = vmatpush.msra.mxu0 %v1195
        %v1197 = vand.u32 %v1063, 4294901760
        %v1198 = vsub.f32 %v1063, %v1197
        %v1199 = vand.u32 %v1198, 4294901760
        %v1200 = vsub.f32 %v1198, %v1199
        %v1201 = vand.u32 %v1200, 4294901760
        %1202 = vmatpush.msra.mxu0 %v1201
        %v1203 = vand.u32 %v1062, 4294901760
        %v1204 = vsub.f32 %v1062, %v1203
        %v1205 = vand.u32 %v1204, 4294901760
        %v1206 = vsub.f32 %v1204, %v1205
        %v1207 = vand.u32 %v1206, 4294901760
        %1208 = vmatpush.msra.mxu0 %v1207
        %v1209 = vand.u32 %v1061, 4294901760
        %v1210 = vsub.f32 %v1061, %v1209
        %v1211 = vand.u32 %v1210, 4294901760
        %v1212 = vsub.f32 %v1210, %v1211
        %v1213 = vand.u32 %v1212, 4294901760
        %1214 = vmatpush.msra.mxu0 %v1213
        %v1215 = vand.u32 %v1060, 4294901760
        %v1216 = vsub.f32 %v1060, %v1215
        %v1217 = vand.u32 %v1216, 4294901760
        %v1218 = vsub.f32 %v1216, %v1217
        %v1219 = vand.u32 %v1218, 4294901760
        %1220 = vmatpush.msra.mxu0 %v1219
        %v1221 = vand.u32 %v1059, 4294901760
        %v1222 = vsub.f32 %v1059, %v1221
        %v1223 = vand.u32 %v1222, 4294901760
        %v1224 = vsub.f32 %v1222, %v1223
        %v1225 = vand.u32 %v1224, 4294901760
        %1226 = vmatpush.msra.mxu0 %v1225
        %v1227 = vand.u32 %v1058, 4294901760
        %v1228 = vsub.f32 %v1058, %v1227
        %v1229 = vand.u32 %v1228, 4294901760
        %v1230 = vsub.f32 %v1228, %v1229
        %v1231 = vand.u32 %v1230, 4294901760
        %1232 = vmatpush.msra.mxu0 %v1231
        %v1233 = vand.u32 %v1057, 4294901760
        %v1234 = vsub.f32 %v1057, %v1233
        %v1235 = vand.u32 %v1234, 4294901760
        %v1236 = vsub.f32 %v1234, %v1235
        %v1237 = vand.u32 %v1236, 4294901760
        %1238 = vmatpush.msra.mxu0 %v1237
        %v1239 = vand.u32 %v1071, 4294901760
        %1240 = vmatmul.f32.gmra.mxu0 %v1239
        %v1241 = vpop.f32.mrf.mxu0
        %v1242 = vadd.f32 %v1125, %v1241
        %v1243 = vand.u32 %v1074, 4294901760
        %1244 = vmatmul.f32.gmra.mxu0 %v1243
        %v1245 = vpop.f32.mrf.mxu0
        %v1246 = vadd.f32 %v1133, %v1245
        %v1247 = vand.u32 %v1077, 4294901760
        %1248 = vmatmul.f32.gmra.mxu0 %v1247
        %v1249 = vpop.f32.mrf.mxu0
        %v1250 = vadd.f32 %v1141, %v1249
        %v1251 = vand.u32 %v1080, 4294901760
        %1252 = vmatmul.f32.gmra.mxu0 %v1251
        %v1253 = vpop.f32.mrf.mxu0
        %v1254 = vadd.f32 %v1149, %v1253
        %v1255 = vand.u32 %v1083, 4294901760
        %1256 = vmatmul.f32.gmra.mxu0 %v1255
        %v1257 = vpop.f32.mrf.mxu0
        %v1258 = vadd.f32 %v1157, %v1257
        %v1259 = vand.u32 %v1086, 4294901760
        %1260 = vmatmul.f32.gmra.mxu0 %v1259
        %v1261 = vpop.f32.mrf.mxu0
        %v1262 = vadd.f32 %v1165, %v1261
        %v1263 = vand.u32 %v1089, 4294901760
        %1264 = vmatmul.f32.gmra.mxu0 %v1263
        %v1265 = vpop.f32.mrf.mxu0
        %v1266 = vadd.f32 %v1173, %v1265
        %v1267 = vand.u32 %v1092, 4294901760
        %1268 = vmatmul.f32.gmra.mxu0 %v1267
        %v1269 = vpop.f32.mrf.mxu0
        %v1270 = vadd.f32 %v1181, %v1269
        %1271 = vdwg.mxu0
        %1272 = vmatpush.msra.mxu0 0.0
        %1273 = vmatpush.msra.mxu0 0.0
        %1274 = vmatpush.msra.mxu0 0.0
        %1275 = vmatpush.msra.mxu0 0.0
        %1276 = vmatpush.msra.mxu0 0.0
        %1277 = vmatpush.msra.mxu0 0.0
        %1278 = vmatpush.msra.mxu0 0.0
        %1279 = vmatpush.msra.mxu0 0.0
        %v1280 = vand.u32 %v1064, 4294901760
        %v1281 = vsub.f32 %v1064, %v1280
        %1282 = vmatpush.msra.mxu0 %v1281
        %v1283 = vand.u32 %v1063, 4294901760
        %v1284 = vsub.f32 %v1063, %v1283
        %1285 = vmatpush.msra.mxu0 %v1284
        %v1286 = vand.u32 %v1062, 4294901760
        %v1287 = vsub.f32 %v1062, %v1286
        %1288 = vmatpush.msra.mxu0 %v1287
        %v1289 = vand.u32 %v1061, 4294901760
        %v1290 = vsub.f32 %v1061, %v1289
        %1291 = vmatpush.msra.mxu0 %v1290
        %v1292 = vand.u32 %v1060, 4294901760
        %v1293 = vsub.f32 %v1060, %v1292
        %1294 = vmatpush.msra.mxu0 %v1293
        %v1295 = vand.u32 %v1059, 4294901760
        %v1296 = vsub.f32 %v1059, %v1295
        %1297 = vmatpush.msra.mxu0 %v1296
        %v1298 = vand.u32 %v1058, 4294901760
        %v1299 = vsub.f32 %v1058, %v1298
        %1300 = vmatpush.msra.mxu0 %v1299
        %v1301 = vand.u32 %v1057, 4294901760
        %v1302 = vsub.f32 %v1057, %v1301
        %1303 = vmatpush.msra.mxu0 %v1302
        %v1304 = vand.u32 %v1071, 4294901760
        %v1305 = vsub.f32 %v1071, %v1304
        %1306 = vmatmul.f32.gmra.mxu0 %v1305
        %v1307 = vpop.f32.mrf.mxu0
        %v1308 = vadd.f32 %v1242, %v1307
        %v1309 = vand.u32 %v1074, 4294901760
        %v1310 = vsub.f32 %v1074, %v1309
        %1311 = vmatmul.f32.gmra.mxu0 %v1310
        %v1312 = vpop.f32.mrf.mxu0
        %v1313 = vadd.f32 %v1246, %v1312
        %v1314 = vand.u32 %v1077, 4294901760
        %v1315 = vsub.f32 %v1077, %v1314
        %1316 = vmatmul.f32.gmra.mxu0 %v1315
        %v1317 = vpop.f32.mrf.mxu0
        %v1318 = vadd.f32 %v1250, %v1317
        %v1319 = vand.u32 %v1080, 4294901760
        %v1320 = vsub.f32 %v1080, %v1319
        %1321 = vmatmul.f32.gmra.mxu0 %v1320
        %v1322 = vpop.f32.mrf.mxu0
        %v1323 = vadd.f32 %v1254, %v1322
        %v1324 = vand.u32 %v1083, 4294901760
        %v1325 = vsub.f32 %v1083, %v1324
        %1326 = vmatmul.f32.gmra.mxu0 %v1325
        %v1327 = vpop.f32.mrf.mxu0
        %v1328 = vadd.f32 %v1258, %v1327
        %v1329 = vand.u32 %v1086, 4294901760
        %v1330 = vsub.f32 %v1086, %v1329
        %1331 = vmatmul.f32.gmra.mxu0 %v1330
        %v1332 = vpop.f32.mrf.mxu0
        %v1333 = vadd.f32 %v1262, %v1332
        %v1334 = vand.u32 %v1089, 4294901760
        %v1335 = vsub.f32 %v1089, %v1334
        %1336 = vmatmul.f32.gmra.mxu0 %v1335
        %v1337 = vpop.f32.mrf.mxu0
        %v1338 = vadd.f32 %v1266, %v1337
        %v1339 = vand.u32 %v1092, 4294901760
        %v1340 = vsub.f32 %v1092, %v1339
        %1341 = vmatmul.f32.gmra.mxu0 %v1340
        %v1342 = vpop.f32.mrf.mxu0
        %v1343 = vadd.f32 %v1270, %v1342
        %1344 = vdwg.mxu0
        %1345 = vmatpush.msra.mxu0 0.0
        %1346 = vmatpush.msra.mxu0 0.0
        %1347 = vmatpush.msra.mxu0 0.0
        %1348 = vmatpush.msra.mxu0 0.0
        %1349 = vmatpush.msra.mxu0 0.0
        %1350 = vmatpush.msra.mxu0 0.0
        %1351 = vmatpush.msra.mxu0 0.0
        %1352 = vmatpush.msra.mxu0 0.0
        %v1353 = vand.u32 %v1064, 4294901760
        %1354 = vmatpush.msra.mxu0 %v1353
        %v1355 = vand.u32 %v1063, 4294901760
        %1356 = vmatpush.msra.mxu0 %v1355
        %v1357 = vand.u32 %v1062, 4294901760
        %1358 = vmatpush.msra.mxu0 %v1357
        %v1359 = vand.u32 %v1061, 4294901760
        %1360 = vmatpush.msra.mxu0 %v1359
        %v1361 = vand.u32 %v1060, 4294901760
        %1362 = vmatpush.msra.mxu0 %v1361
        %v1363 = vand.u32 %v1059, 4294901760
        %1364 = vmatpush.msra.mxu0 %v1363
        %v1365 = vand.u32 %v1058, 4294901760
        %1366 = vmatpush.msra.mxu0 %v1365
        %v1367 = vand.u32 %v1057, 4294901760
        %1368 = vmatpush.msra.mxu0 %v1367
        %v1369 = vand.u32 %v1071, 4294901760
        %v1370 = vsub.f32 %v1071, %v1369
        %v1371 = vand.u32 %v1370, 4294901760
        %1372 = vmatmul.f32.gmra.mxu0 %v1371
        %v1373 = vpop.f32.mrf.mxu0
        %v1374 = vadd.f32 %v1308, %v1373
        %v1375 = vand.u32 %v1074, 4294901760
        %v1376 = vsub.f32 %v1074, %v1375
        %v1377 = vand.u32 %v1376, 4294901760
        %1378 = vmatmul.f32.gmra.mxu0 %v1377
        %v1379 = vpop.f32.mrf.mxu0
        %v1380 = vadd.f32 %v1313, %v1379
        %v1381 = vand.u32 %v1077, 4294901760
        %v1382 = vsub.f32 %v1077, %v1381
        %v1383 = vand.u32 %v1382, 4294901760
        %1384 = vmatmul.f32.gmra.mxu0 %v1383
        %v1385 = vpop.f32.mrf.mxu0
        %v1386 = vadd.f32 %v1318, %v1385
        %v1387 = vand.u32 %v1080, 4294901760
        %v1388 = vsub.f32 %v1080, %v1387
        %v1389 = vand.u32 %v1388, 4294901760
        %1390 = vmatmul.f32.gmra.mxu0 %v1389
        %v1391 = vpop.f32.mrf.mxu0
        %v1392 = vadd.f32 %v1323, %v1391
        %v1393 = vand.u32 %v1083, 4294901760
        %v1394 = vsub.f32 %v1083, %v1393
        %v1395 = vand.u32 %v1394, 4294901760
        %1396 = vmatmul.f32.gmra.mxu0 %v1395
        %v1397 = vpop.f32.mrf.mxu0
        %v1398 = vadd.f32 %v1328, %v1397
        %v1399 = vand.u32 %v1086, 4294901760
        %v1400 = vsub.f32 %v1086, %v1399
        %v1401 = vand.u32 %v1400, 4294901760
        %1402 = vmatmul.f32.gmra.mxu0 %v1401
        %v1403 = vpop.f32.mrf.mxu0
        %v1404 = vadd.f32 %v1333, %v1403
        %v1405 = vand.u32 %v1089, 4294901760
        %v1406 = vsub.f32 %v1089, %v1405
        %v1407 = vand.u32 %v1406, 4294901760
        %1408 = vmatmul.f32.gmra.mxu0 %v1407
        %v1409 = vpop.f32.mrf.mxu0
        %v1410 = vadd.f32 %v1338, %v1409
        %v1411 = vand.u32 %v1092, 4294901760
        %v1412 = vsub.f32 %v1092, %v1411
        %v1413 = vand.u32 %v1412, 4294901760
        %1414 = vmatmul.f32.gmra.mxu0 %v1413
        %v1415 = vpop.f32.mrf.mxu0
        %v1416 = vadd.f32 %v1343, %v1415
        %1417 = vdwg.mxu0
        %1418 = vmatpush.msra.mxu0 0.0
        %1419 = vmatpush.msra.mxu0 0.0
        %1420 = vmatpush.msra.mxu0 0.0
        %1421 = vmatpush.msra.mxu0 0.0
        %1422 = vmatpush.msra.mxu0 0.0
        %1423 = vmatpush.msra.mxu0 0.0
        %1424 = vmatpush.msra.mxu0 0.0
        %1425 = vmatpush.msra.mxu0 0.0
        %v1426 = vand.u32 %v1064, 4294901760
        %v1427 = vsub.f32 %v1064, %v1426
        %v1428 = vand.u32 %v1427, 4294901760
        %1429 = vmatpush.msra.mxu0 %v1428
        %v1430 = vand.u32 %v1063, 4294901760
        %v1431 = vsub.f32 %v1063, %v1430
        %v1432 = vand.u32 %v1431, 4294901760
        %1433 = vmatpush.msra.mxu0 %v1432
        %v1434 = vand.u32 %v1062, 4294901760
        %v1435 = vsub.f32 %v1062, %v1434
        %v1436 = vand.u32 %v1435, 4294901760
        %1437 = vmatpush.msra.mxu0 %v1436
        %v1438 = vand.u32 %v1061, 4294901760
        %v1439 = vsub.f32 %v1061, %v1438
        %v1440 = vand.u32 %v1439, 4294901760
        %1441 = vmatpush.msra.mxu0 %v1440
        %v1442 = vand.u32 %v1060, 4294901760
        %v1443 = vsub.f32 %v1060, %v1442
        %v1444 = vand.u32 %v1443, 4294901760
        %1445 = vmatpush.msra.mxu0 %v1444
        %v1446 = vand.u32 %v1059, 4294901760
        %v1447 = vsub.f32 %v1059, %v1446
        %v1448 = vand.u32 %v1447, 4294901760
        %1449 = vmatpush.msra.mxu0 %v1448
        %v1450 = vand.u32 %v1058, 4294901760
        %v1451 = vsub.f32 %v1058, %v1450
        %v1452 = vand.u32 %v1451, 4294901760
        %1453 = vmatpush.msra.mxu0 %v1452
        %v1454 = vand.u32 %v1057, 4294901760
        %v1455 = vsub.f32 %v1057, %v1454
        %v1456 = vand.u32 %v1455, 4294901760
        %1457 = vmatpush.msra.mxu0 %v1456
        %v1458 = vand.u32 %v1071, 4294901760
        %1459 = vmatmul.f32.gmra.mxu0 %v1458
        %v1460 = vpop.f32.mrf.mxu0
        %v1461 = vadd.f32 %v1374, %v1460
        %v1462 = vand.u32 %v1074, 4294901760
        %1463 = vmatmul.f32.gmra.mxu0 %v1462
        %v1464 = vpop.f32.mrf.mxu0
        %v1465 = vadd.f32 %v1380, %v1464
        %v1466 = vand.u32 %v1077, 4294901760
        %1467 = vmatmul.f32.gmra.mxu0 %v1466
        %v1468 = vpop.f32.mrf.mxu0
        %v1469 = vadd.f32 %v1386, %v1468
        %v1470 = vand.u32 %v1080, 4294901760
        %1471 = vmatmul.f32.gmra.mxu0 %v1470
        %v1472 = vpop.f32.mrf.mxu0
        %v1473 = vadd.f32 %v1392, %v1472
        %v1474 = vand.u32 %v1083, 4294901760
        %1475 = vmatmul.f32.gmra.mxu0 %v1474
        %v1476 = vpop.f32.mrf.mxu0
        %v1477 = vadd.f32 %v1398, %v1476
        %v1478 = vand.u32 %v1086, 4294901760
        %1479 = vmatmul.f32.gmra.mxu0 %v1478
        %v1480 = vpop.f32.mrf.mxu0
        %v1481 = vadd.f32 %v1404, %v1480
        %v1482 = vand.u32 %v1089, 4294901760
        %1483 = vmatmul.f32.gmra.mxu0 %v1482
        %v1484 = vpop.f32.mrf.mxu0
        %v1485 = vadd.f32 %v1410, %v1484
        %v1486 = vand.u32 %v1092, 4294901760
        %1487 = vmatmul.f32.gmra.mxu0 %v1486
        %v1488 = vpop.f32.mrf.mxu0
        %v1489 = vadd.f32 %v1416, %v1488
        %1490 = vdwg.mxu0
        %1491 = vmatpush.msra.mxu0 0.0
        %1492 = vmatpush.msra.mxu0 0.0
        %1493 = vmatpush.msra.mxu0 0.0
        %1494 = vmatpush.msra.mxu0 0.0
        %1495 = vmatpush.msra.mxu0 0.0
        %1496 = vmatpush.msra.mxu0 0.0
        %1497 = vmatpush.msra.mxu0 0.0
        %1498 = vmatpush.msra.mxu0 0.0
        %v1499 = vand.u32 %v1064, 4294901760
        %1500 = vmatpush.msra.mxu0 %v1499
        %v1501 = vand.u32 %v1063, 4294901760
        %1502 = vmatpush.msra.mxu0 %v1501
        %v1503 = vand.u32 %v1062, 4294901760
        %1504 = vmatpush.msra.mxu0 %v1503
        %v1505 = vand.u32 %v1061, 4294901760
        %1506 = vmatpush.msra.mxu0 %v1505
        %v1507 = vand.u32 %v1060, 4294901760
        %1508 = vmatpush.msra.mxu0 %v1507
        %v1509 = vand.u32 %v1059, 4294901760
        %1510 = vmatpush.msra.mxu0 %v1509
        %v1511 = vand.u32 %v1058, 4294901760
        %1512 = vmatpush.msra.mxu0 %v1511
        %v1513 = vand.u32 %v1057, 4294901760
        %1514 = vmatpush.msra.mxu0 %v1513
        %v1515 = vand.u32 %v1071, 4294901760
        %1516 = vmatmul.f32.gmra.mxu0 %v1515
        %v1517 = vpop.f32.mrf.mxu0
        %v1518 = vadd.f32 %v1461, %v1517
        %v1519 = vand.u32 %v1074, 4294901760
        %1520 = vmatmul.f32.gmra.mxu0 %v1519
        %v1521 = vpop.f32.mrf.mxu0
        %v1522 = vadd.f32 %v1465, %v1521
        %v1523 = vand.u32 %v1077, 4294901760
        %1524 = vmatmul.f32.gmra.mxu0 %v1523
        %v1525 = vpop.f32.mrf.mxu0
        %v1526 = vadd.f32 %v1469, %v1525
        %v1527 = vand.u32 %v1080, 4294901760
        %1528 = vmatmul.f32.gmra.mxu0 %v1527
        %v1529 = vpop.f32.mrf.mxu0
        %v1530 = vadd.f32 %v1473, %v1529
        %v1531 = vand.u32 %v1083, 4294901760
        %1532 = vmatmul.f32.gmra.mxu0 %v1531
        %v1533 = vpop.f32.mrf.mxu0
        %v1534 = vadd.f32 %v1477, %v1533
        %v1535 = vand.u32 %v1086, 4294901760
        %1536 = vmatmul.f32.gmra.mxu0 %v1535
        %v1537 = vpop.f32.mrf.mxu0
        %v1538 = vadd.f32 %v1481, %v1537
        %v1539 = vand.u32 %v1089, 4294901760
        %1540 = vmatmul.f32.gmra.mxu0 %v1539
        %v1541 = vpop.f32.mrf.mxu0
        %v1542 = vadd.f32 %v1485, %v1541
        %v1543 = vand.u32 %v1092, 4294901760
        %1544 = vmatmul.f32.gmra.mxu0 %v1543
        %v1545 = vpop.f32.mrf.mxu0
        %v1546 = vadd.f32 %v1489, %v1545
        %1547 = vdwg.mxu0
        %v1548 = vtanh.pop %v1518
        %v1549 = vtanh.pop %v1522
        %v1550 = vtanh.pop %v1526
        %v1551 = vtanh.pop %v1530
        %v1552 = vtanh.pop %v1534
        %v1553 = vtanh.pop %v1538
        %v1554 = vtanh.pop %v1542
        %v1555 = vtanh.pop %v1546
        %v1556 = vld [vmem:[%s5] sm:$0xff]
        %v1557 = vld [vmem:[%s5 + $0x8] sm:$0xff]
        %v1558 = vld [vmem:[%s5 + $0x10] sm:$0xff]
        %v1559 = vld [vmem:[%s5 + $0x18] sm:$0xff]
        %v1560 = vld [vmem:[%s6] sm:$0x1]
        %v1562 = vperm.slane %v1560, 0
        %vm1564 = vcmask 261120
        %v1566 = vsel %vm1564, %v1548, 0
        %v1569 = vsel %vm1564, %v1549, 0
        %v1572 = vsel %vm1564, %v1550, 0
        %v1575 = vsel %vm1564, %v1551, 0
        %v1578 = vsel %vm1564, %v1552, 0
        %v1581 = vsel %vm1564, %v1553, 0
        %v1584 = vsel %vm1564, %v1554, 0
        %v1587 = vsel %vm1564, %v1555, 0
        %1589 = vmatpush.msra.mxu0 0.0
        %1590 = vmatpush.msra.mxu0 0.0
        %1591 = vmatpush.msra.mxu0 0.0
        %1592 = vmatpush.msra.mxu0 0.0
        %1593 = vmatpush.msra.mxu0 0.0
        %1594 = vmatpush.msra.mxu0 0.0
        %1595 = vmatpush.msra.mxu0 0.0
        %1596 = vmatpush.msra.mxu0 0.0
        %1597 = vmatpush.msra.mxu0 0.0
        %1598 = vmatpush.msra.mxu0 0.0
        %1599 = vmatpush.msra.mxu0 0.0
        %1600 = vmatpush.msra.mxu0 0.0
        %v1601 = vand.u32 %v1559, 4294901760
        %1602 = vmatpush.msra.mxu0 %v1601
        %v1603 = vand.u32 %v1558, 4294901760
        %1604 = vmatpush.msra.mxu0 %v1603
        %v1605 = vand.u32 %v1557, 4294901760
        %1606 = vmatpush.msra.mxu0 %v1605
        %v1607 = vand.u32 %v1556, 4294901760
        %1608 = vmatpush.msra.mxu0 %v1607
        %v1609 = vand.u32 %v1566, 4294901760
        %v1610 = vsub.f32 %v1566, %v1609
        %v1611 = vand.u32 %v1610, 4294901760
        %v1612 = vsub.f32 %v1610, %v1611
        %v1613 = vand.u32 %v1612, 4294901760
        %1614 = vmatmul.f32.gmra.mxu0 %v1613
        %v1615 = vpop.f32.mrf.mxu0
        %v1616 = vadd.f32 %v1562, %v1615
        %v1617 = vand.u32 %v1569, 4294901760
        %v1618 = vsub.f32 %v1569, %v1617
        %v1619 = vand.u32 %v1618, 4294901760
        %v1620 = vsub.f32 %v1618, %v1619
        %v1621 = vand.u32 %v1620, 4294901760
        %1622 = vmatmul.f32.gmra.mxu0 %v1621
        %v1623 = vpop.f32.mrf.mxu0
        %v1624 = vadd.f32 %v1562, %v1623
        %v1625 = vand.u32 %v1572, 4294901760
        %v1626 = vsub.f32 %v1572, %v1625
        %v1627 = vand.u32 %v1626, 4294901760
        %v1628 = vsub.f32 %v1626, %v1627
        %v1629 = vand.u32 %v1628, 4294901760
        %1630 = vmatmul.f32.gmra.mxu0 %v1629
        %v1631 = vpop.f32.mrf.mxu0
        %v1632 = vadd.f32 %v1562, %v1631
        %v1633 = vand.u32 %v1575, 4294901760
        %v1634 = vsub.f32 %v1575, %v1633
        %v1635 = vand.u32 %v1634, 4294901760
        %v1636 = vsub.f32 %v1634, %v1635
        %v1637 = vand.u32 %v1636, 4294901760
        %1638 = vmatmul.f32.gmra.mxu0 %v1637
        %v1639 = vpop.f32.mrf.mxu0
        %v1640 = vadd.f32 %v1562, %v1639
        %v1641 = vand.u32 %v1578, 4294901760
        %v1642 = vsub.f32 %v1578, %v1641
        %v1643 = vand.u32 %v1642, 4294901760
        %v1644 = vsub.f32 %v1642, %v1643
        %v1645 = vand.u32 %v1644, 4294901760
        %1646 = vmatmul.f32.gmra.mxu0 %v1645
        %v1647 = vpop.f32.mrf.mxu0
        %v1648 = vadd.f32 %v1562, %v1647
        %v1649 = vand.u32 %v1581, 4294901760
        %v1650 = vsub.f32 %v1581, %v1649
        %v1651 = vand.u32 %v1650, 4294901760
        %v1652 = vsub.f32 %v1650, %v1651
        %v1653 = vand.u32 %v1652, 4294901760
        %1654 = vmatmul.f32.gmra.mxu0 %v1653
        %v1655 = vpop.f32.mrf.mxu0
        %v1656 = vadd.f32 %v1562, %v1655
        %v1657 = vand.u32 %v1584, 4294901760
        %v1658 = vsub.f32 %v1584, %v1657
        %v1659 = vand.u32 %v1658, 4294901760
        %v1660 = vsub.f32 %v1658, %v1659
        %v1661 = vand.u32 %v1660, 4294901760
        %1662 = vmatmul.f32.gmra.mxu0 %v1661
        %v1663 = vpop.f32.mrf.mxu0
        %v1664 = vadd.f32 %v1562, %v1663
        %v1665 = vand.u32 %v1587, 4294901760
        %v1666 = vsub.f32 %v1587, %v1665
        %v1667 = vand.u32 %v1666, 4294901760
        %v1668 = vsub.f32 %v1666, %v1667
        %v1669 = vand.u32 %v1668, 4294901760
        %1670 = vmatmul.f32.gmra.mxu0 %v1669
        %v1671 = vpop.f32.mrf.mxu0
        %v1672 = vadd.f32 %v1562, %v1671
        %1673 = vdwg.mxu0
        %1674 = vmatpush.msra.mxu0 0.0
        %1675 = vmatpush.msra.mxu0 0.0
        %1676 = vmatpush.msra.mxu0 0.0
        %1677 = vmatpush.msra.mxu0 0.0
        %1678 = vmatpush.msra.mxu0 0.0
        %1679 = vmatpush.msra.mxu0 0.0
        %1680 = vmatpush.msra.mxu0 0.0
        %1681 = vmatpush.msra.mxu0 0.0
        %1682 = vmatpush.msra.mxu0 0.0
        %1683 = vmatpush.msra.mxu0 0.0
        %1684 = vmatpush.msra.mxu0 0.0
        %1685 = vmatpush.msra.mxu0 0.0
        %v1686 = vand.u32 %v1559, 4294901760
        %v1687 = vsub.f32 %v1559, %v1686
        %v1688 = vand.u32 %v1687, 4294901760
        %v1689 = vsub.f32 %v1687, %v1688
        %v1690 = vand.u32 %v1689, 4294901760
        %1691 = vmatpush.msra.mxu0 %v1690
        %v1692 = vand.u32 %v1558, 4294901760
        %v1693 = vsub.f32 %v1558, %v1692
        %v1694 = vand.u32 %v1693, 4294901760
        %v1695 = vsub.f32 %v1693, %v1694
        %v1696 = vand.u32 %v1695, 4294901760
        %1697 = vmatpush.msra.mxu0 %v1696
        %v1698 = vand.u32 %v1557, 4294901760
        %v1699 = vsub.f32 %v1557, %v1698
        %v1700 = vand.u32 %v1699, 4294901760
        %v1701 = vsub.f32 %v1699, %v1700
        %v1702 = vand.u32 %v1701, 4294901760
        %1703 = vmatpush.msra.mxu0 %v1702
        %v1704 = vand.u32 %v1556, 4294901760
        %v1705 = vsub.f32 %v1556, %v1704
        %v1706 = vand.u32 %v1705, 4294901760
        %v1707 = vsub.f32 %v1705, %v1706
        %v1708 = vand.u32 %v1707, 4294901760
        %1709 = vmatpush.msra.mxu0 %v1708
        %v1710 = vand.u32 %v1566, 4294901760
        %1711 = vmatmul.f32.gmra.mxu0 %v1710
        %v1712 = vpop.f32.mrf.mxu0
        %v1713 = vadd.f32 %v1616, %v1712
        %v1714 = vand.u32 %v1569, 4294901760
        %1715 = vmatmul.f32.gmra.mxu0 %v1714
        %v1716 = vpop.f32.mrf.mxu0
        %v1717 = vadd.f32 %v1624, %v1716
        %v1718 = vand.u32 %v1572, 4294901760
        %1719 = vmatmul.f32.gmra.mxu0 %v1718
        %v1720 = vpop.f32.mrf.mxu0
        %v1721 = vadd.f32 %v1632, %v1720
        %v1722 = vand.u32 %v1575, 4294901760
        %1723 = vmatmul.f32.gmra.mxu0 %v1722
        %v1724 = vpop.f32.mrf.mxu0
        %v1725 = vadd.f32 %v1640, %v1724
        %v1726 = vand.u32 %v1578, 4294901760
        %1727 = vmatmul.f32.gmra.mxu0 %v1726
        %v1728 = vpop.f32.mrf.mxu0
        %v1729 = vadd.f32 %v1648, %v1728
        %v1730 = vand.u32 %v1581, 4294901760
        %1731 = vmatmul.f32.gmra.mxu0 %v1730
        %v1732 = vpop.f32.mrf.mxu0
        %v1733 = vadd.f32 %v1656, %v1732
        %v1734 = vand.u32 %v1584, 4294901760
        %1735 = vmatmul.f32.gmra.mxu0 %v1734
        %v1736 = vpop.f32.mrf.mxu0
        %v1737 = vadd.f32 %v1664, %v1736
        %v1738 = vand.u32 %v1587, 4294901760
        %1739 = vmatmul.f32.gmra.mxu0 %v1738
        %v1740 = vpop.f32.mrf.mxu0
        %v1741 = vadd.f32 %v1672, %v1740
        %1742 = vdwg.mxu0
        %1743 = vmatpush.msra.mxu0 0.0
        %1744 = vmatpush.msra.mxu0 0.0
        %1745 = vmatpush.msra.mxu0 0.0
        %1746 = vmatpush.msra.mxu0 0.0
        %1747 = vmatpush.msra.mxu0 0.0
        %1748 = vmatpush.msra.mxu0 0.0
        %1749 = vmatpush.msra.mxu0 0.0
        %1750 = vmatpush.msra.mxu0 0.0
        %1751 = vmatpush.msra.mxu0 0.0
        %1752 = vmatpush.msra.mxu0 0.0
        %1753 = vmatpush.msra.mxu0 0.0
        %1754 = vmatpush.msra.mxu0 0.0
        %v1755 = vand.u32 %v1559, 4294901760
        %v1756 = vsub.f32 %v1559, %v1755
        %1757 = vmatpush.msra.mxu0 %v1756
        %v1758 = vand.u32 %v1558, 4294901760
        %v1759 = vsub.f32 %v1558, %v1758
        %1760 = vmatpush.msra.mxu0 %v1759
        %v1761 = vand.u32 %v1557, 4294901760
        %v1762 = vsub.f32 %v1557, %v1761
        %1763 = vmatpush.msra.mxu0 %v1762
        %v1764 = vand.u32 %v1556, 4294901760
        %v1765 = vsub.f32 %v1556, %v1764
        %1766 = vmatpush.msra.mxu0 %v1765
        %v1767 = vand.u32 %v1566, 4294901760
        %v1768 = vsub.f32 %v1566, %v1767
        %1769 = vmatmul.f32.gmra.mxu0 %v1768
        %v1770 = vpop.f32.mrf.mxu0
        %v1771 = vadd.f32 %v1713, %v1770
        %v1772 = vand.u32 %v1569, 4294901760
        %v1773 = vsub.f32 %v1569, %v1772
        %1774 = vmatmul.f32.gmra.mxu0 %v1773
        %v1775 = vpop.f32.mrf.mxu0
        %v1776 = vadd.f32 %v1717, %v1775
        %v1777 = vand.u32 %v1572, 4294901760
        %v1778 = vsub.f32 %v1572, %v1777
        %1779 = vmatmul.f32.gmra.mxu0 %v1778
        %v1780 = vpop.f32.mrf.mxu0
        %v1781 = vadd.f32 %v1721, %v1780
        %v1782 = vand.u32 %v1575, 4294901760
        %v1783 = vsub.f32 %v1575, %v1782
        %1784 = vmatmul.f32.gmra.mxu0 %v1783
        %v1785 = vpop.f32.mrf.mxu0
        %v1786 = vadd.f32 %v1725, %v1785
        %v1787 = vand.u32 %v1578, 4294901760
        %v1788 = vsub.f32 %v1578, %v1787
        %1789 = vmatmul.f32.gmra.mxu0 %v1788
        %v1790 = vpop.f32.mrf.mxu0
        %v1791 = vadd.f32 %v1729, %v1790
        %v1792 = vand.u32 %v1581, 4294901760
        %v1793 = vsub.f32 %v1581, %v1792
        %1794 = vmatmul.f32.gmra.mxu0 %v1793
        %v1795 = vpop.f32.mrf.mxu0
        %v1796 = vadd.f32 %v1733, %v1795
        %v1797 = vand.u32 %v1584, 4294901760
        %v1798 = vsub.f32 %v1584, %v1797
        %1799 = vmatmul.f32.gmra.mxu0 %v1798
        %v1800 = vpop.f32.mrf.mxu0
        %v1801 = vadd.f32 %v1737, %v1800
        %v1802 = vand.u32 %v1587, 4294901760
        %v1803 = vsub.f32 %v1587, %v1802
        %1804 = vmatmul.f32.gmra.mxu0 %v1803
        %v1805 = vpop.f32.mrf.mxu0
        %v1806 = vadd.f32 %v1741, %v1805
        %1807 = vdwg.mxu0
        %1808 = vmatpush.msra.mxu0 0.0
        %1809 = vmatpush.msra.mxu0 0.0
        %1810 = vmatpush.msra.mxu0 0.0
        %1811 = vmatpush.msra.mxu0 0.0
        %1812 = vmatpush.msra.mxu0 0.0
        %1813 = vmatpush.msra.mxu0 0.0
        %1814 = vmatpush.msra.mxu0 0.0
        %1815 = vmatpush.msra.mxu0 0.0
        %1816 = vmatpush.msra.mxu0 0.0
        %1817 = vmatpush.msra.mxu0 0.0
        %1818 = vmatpush.msra.mxu0 0.0
        %1819 = vmatpush.msra.mxu0 0.0
        %v1820 = vand.u32 %v1559, 4294901760
        %1821 = vmatpush.msra.mxu0 %v1820
        %v1822 = vand.u32 %v1558, 4294901760
        %1823 = vmatpush.msra.mxu0 %v1822
        %v1824 = vand.u32 %v1557, 4294901760
        %1825 = vmatpush.msra.mxu0 %v1824
        %v1826 = vand.u32 %v1556, 4294901760
        %1827 = vmatpush.msra.mxu0 %v1826
        %v1828 = vand.u32 %v1566, 4294901760
        %v1829 = vsub.f32 %v1566, %v1828
        %v1830 = vand.u32 %v1829, 4294901760
        %1831 = vmatmul.f32.gmra.mxu0 %v1830
        %v1832 = vpop.f32.mrf.mxu0
        %v1833 = vadd.f32 %v1771, %v1832
        %v1834 = vand.u32 %v1569, 4294901760
        %v1835 = vsub.f32 %v1569, %v1834
        %v1836 = vand.u32 %v1835, 4294901760
        %1837 = vmatmul.f32.gmra.mxu0 %v1836
        %v1838 = vpop.f32.mrf.mxu0
        %v1839 = vadd.f32 %v1776, %v1838
        %v1840 = vand.u32 %v1572, 4294901760
        %v1841 = vsub.f32 %v1572, %v1840
        %v1842 = vand.u32 %v1841, 4294901760
        %1843 = vmatmul.f32.gmra.mxu0 %v1842
        %v1844 = vpop.f32.mrf.mxu0
        %v1845 = vadd.f32 %v1781, %v1844
        %v1846 = vand.u32 %v1575, 4294901760
        %v1847 = vsub.f32 %v1575, %v1846
        %v1848 = vand.u32 %v1847, 4294901760
        %1849 = vmatmul.f32.gmra.mxu0 %v1848
        %v1850 = vpop.f32.mrf.mxu0
        %v1851 = vadd.f32 %v1786, %v1850
        %v1852 = vand.u32 %v1578, 4294901760
        %v1853 = vsub.f32 %v1578, %v1852
        %v1854 = vand.u32 %v1853, 4294901760
        %1855 = vmatmul.f32.gmra.mxu0 %v1854
        %v1856 = vpop.f32.mrf.mxu0
        %v1857 = vadd.f32 %v1791, %v1856
        %v1858 = vand.u32 %v1581, 4294901760
        %v1859 = vsub.f32 %v1581, %v1858
        %v1860 = vand.u32 %v1859, 4294901760
        %1861 = vmatmul.f32.gmra.mxu0 %v1860
        %v1862 = vpop.f32.mrf.mxu0
        %v1863 = vadd.f32 %v1796, %v1862
        %v1864 = vand.u32 %v1584, 4294901760
        %v1865 = vsub.f32 %v1584, %v1864
        %v1866 = vand.u32 %v1865, 4294901760
        %1867 = vmatmul.f32.gmra.mxu0 %v1866
        %v1868 = vpop.f32.mrf.mxu0
        %v1869 = vadd.f32 %v1801, %v1868
        %v1870 = vand.u32 %v1587, 4294901760
        %v1871 = vsub.f32 %v1587, %v1870
        %v1872 = vand.u32 %v1871, 4294901760
        %1873 = vmatmul.f32.gmra.mxu0 %v1872
        %v1874 = vpop.f32.mrf.mxu0
        %v1875 = vadd.f32 %v1806, %v1874
        %1876 = vdwg.mxu0
        %1877 = vmatpush.msra.mxu0 0.0
        %1878 = vmatpush.msra.mxu0 0.0
        %1879 = vmatpush.msra.mxu0 0.0
        %1880 = vmatpush.msra.mxu0 0.0
        %1881 = vmatpush.msra.mxu0 0.0
        %1882 = vmatpush.msra.mxu0 0.0
        %1883 = vmatpush.msra.mxu0 0.0
        %1884 = vmatpush.msra.mxu0 0.0
        %1885 = vmatpush.msra.mxu0 0.0
        %1886 = vmatpush.msra.mxu0 0.0
        %1887 = vmatpush.msra.mxu0 0.0
        %1888 = vmatpush.msra.mxu0 0.0
        %v1889 = vand.u32 %v1559, 4294901760
        %v1890 = vsub.f32 %v1559, %v1889
        %v1891 = vand.u32 %v1890, 4294901760
        %1892 = vmatpush.msra.mxu0 %v1891
        %v1893 = vand.u32 %v1558, 4294901760
        %v1894 = vsub.f32 %v1558, %v1893
        %v1895 = vand.u32 %v1894, 4294901760
        %1896 = vmatpush.msra.mxu0 %v1895
        %v1897 = vand.u32 %v1557, 4294901760
        %v1898 = vsub.f32 %v1557, %v1897
        %v1899 = vand.u32 %v1898, 4294901760
        %1900 = vmatpush.msra.mxu0 %v1899
        %v1901 = vand.u32 %v1556, 4294901760
        %v1902 = vsub.f32 %v1556, %v1901
        %v1903 = vand.u32 %v1902, 4294901760
        %1904 = vmatpush.msra.mxu0 %v1903
        %v1905 = vand.u32 %v1566, 4294901760
        %1906 = vmatmul.f32.gmra.mxu0 %v1905
        %v1907 = vpop.f32.mrf.mxu0
        %v1908 = vadd.f32 %v1833, %v1907
        %v1909 = vand.u32 %v1569, 4294901760
        %1910 = vmatmul.f32.gmra.mxu0 %v1909
        %v1911 = vpop.f32.mrf.mxu0
        %v1912 = vadd.f32 %v1839, %v1911
        %v1913 = vand.u32 %v1572, 4294901760
        %1914 = vmatmul.f32.gmra.mxu0 %v1913
        %v1915 = vpop.f32.mrf.mxu0
        %v1916 = vadd.f32 %v1845, %v1915
        %v1917 = vand.u32 %v1575, 4294901760
        %1918 = vmatmul.f32.gmra.mxu0 %v1917
        %v1919 = vpop.f32.mrf.mxu0
        %v1920 = vadd.f32 %v1851, %v1919
        %v1921 = vand.u32 %v1578, 4294901760
        %1922 = vmatmul.f32.gmra.mxu0 %v1921
        %v1923 = vpop.f32.mrf.mxu0
        %v1924 = vadd.f32 %v1857, %v1923
        %v1925 = vand.u32 %v1581, 4294901760
        %1926 = vmatmul.f32.gmra.mxu0 %v1925
        %v1927 = vpop.f32.mrf.mxu0
        %v1928 = vadd.f32 %v1863, %v1927
        %v1929 = vand.u32 %v1584, 4294901760
        %1930 = vmatmul.f32.gmra.mxu0 %v1929
        %v1931 = vpop.f32.mrf.mxu0
        %v1932 = vadd.f32 %v1869, %v1931
        %v1933 = vand.u32 %v1587, 4294901760
        %1934 = vmatmul.f32.gmra.mxu0 %v1933
        %v1935 = vpop.f32.mrf.mxu0
        %v1936 = vadd.f32 %v1875, %v1935
        %1937 = vdwg.mxu0
        %1938 = vmatpush.msra.mxu0 0.0
        %1939 = vmatpush.msra.mxu0 0.0
        %1940 = vmatpush.msra.mxu0 0.0
        %1941 = vmatpush.msra.mxu0 0.0
        %1942 = vmatpush.msra.mxu0 0.0
        %1943 = vmatpush.msra.mxu0 0.0
        %1944 = vmatpush.msra.mxu0 0.0
        %1945 = vmatpush.msra.mxu0 0.0
        %1946 = vmatpush.msra.mxu0 0.0
        %1947 = vmatpush.msra.mxu0 0.0
        %1948 = vmatpush.msra.mxu0 0.0
        %1949 = vmatpush.msra.mxu0 0.0
        %v1950 = vand.u32 %v1559, 4294901760
        %1951 = vmatpush.msra.mxu0 %v1950
        %v1952 = vand.u32 %v1558, 4294901760
        %1953 = vmatpush.msra.mxu0 %v1952
        %v1954 = vand.u32 %v1557, 4294901760
        %1955 = vmatpush.msra.mxu0 %v1954
        %v1956 = vand.u32 %v1556, 4294901760
        %1957 = vmatpush.msra.mxu0 %v1956
        %v1958 = vand.u32 %v1566, 4294901760
        %1959 = vmatmul.f32.gmra.mxu0 %v1958
        %v1960 = vpop.f32.mrf.mxu0
        %v1961 = vadd.f32 %v1908, %v1960
        %v1962 = vand.u32 %v1569, 4294901760
        %1963 = vmatmul.f32.gmra.mxu0 %v1962
        %v1964 = vpop.f32.mrf.mxu0
        %v1965 = vadd.f32 %v1912, %v1964
        %v1966 = vand.u32 %v1572, 4294901760
        %1967 = vmatmul.f32.gmra.mxu0 %v1966
        %v1968 = vpop.f32.mrf.mxu0
        %v1969 = vadd.f32 %v1916, %v1968
        %v1970 = vand.u32 %v1575, 4294901760
        %1971 = vmatmul.f32.gmra.mxu0 %v1970
        %v1972 = vpop.f32.mrf.mxu0
        %v1973 = vadd.f32 %v1920, %v1972
        %v1974 = vand.u32 %v1578, 4294901760
        %1975 = vmatmul.f32.gmra.mxu0 %v1974
        %v1976 = vpop.f32.mrf.mxu0
        %v1977 = vadd.f32 %v1924, %v1976
        %v1978 = vand.u32 %v1581, 4294901760
        %1979 = vmatmul.f32.gmra.mxu0 %v1978
        %v1980 = vpop.f32.mrf.mxu0
        %v1981 = vadd.f32 %v1928, %v1980
        %v1982 = vand.u32 %v1584, 4294901760
        %1983 = vmatmul.f32.gmra.mxu0 %v1982
        %v1984 = vpop.f32.mrf.mxu0
        %v1985 = vadd.f32 %v1932, %v1984
        %v1986 = vand.u32 %v1587, 4294901760
        %1987 = vmatmul.f32.gmra.mxu0 %v1986
        %v1988 = vpop.f32.mrf.mxu0
        %v1989 = vadd.f32 %v1936, %v1988
        %1990 = vdwg.mxu0
        %v1991 = vtanh.pop %v1961
        %v1992 = vtanh.pop %v1965
        %v1993 = vtanh.pop %v1969
        %v1994 = vtanh.pop %v1973
        %v1995 = vtanh.pop %v1977
        %v1996 = vtanh.pop %v1981
        %v1997 = vtanh.pop %v1985
        %v1998 = vtanh.pop %v1989
        %v1999 = vld [vmem:[%s7] sm:$0xff]
        %v2000 = vld [vmem:[%s7 + $0x8] sm:$0xff]
        %v2001 = vld [vmem:[%s8] sm:$0x1]
        %v2003 = vperm.slane %v2001, 0
        %vm2005 = vcmask 130048
        %v2007 = vsel %vm2005, %v1991, 0
        %v2010 = vsel %vm2005, %v1992, 0
        %v2013 = vsel %vm2005, %v1993, 0
        %v2016 = vsel %vm2005, %v1994, 0
        %v2019 = vsel %vm2005, %v1995, 0
        %v2022 = vsel %vm2005, %v1996, 0
        %v2025 = vsel %vm2005, %v1997, 0
        %v2028 = vsel %vm2005, %v1998, 0
        %2030 = vmatpush.msra.mxu0 0.0
        %2031 = vmatpush.msra.mxu0 0.0
        %2032 = vmatpush.msra.mxu0 0.0
        %2033 = vmatpush.msra.mxu0 0.0
        %2034 = vmatpush.msra.mxu0 0.0
        %2035 = vmatpush.msra.mxu0 0.0
        %2036 = vmatpush.msra.mxu0 0.0
        %2037 = vmatpush.msra.mxu0 0.0
        %2038 = vmatpush.msra.mxu0 0.0
        %2039 = vmatpush.msra.mxu0 0.0
        %2040 = vmatpush.msra.mxu0 0.0
        %2041 = vmatpush.msra.mxu0 0.0
        %2042 = vmatpush.msra.mxu0 0.0
        %2043 = vmatpush.msra.mxu0 0.0
        %v2044 = vand.u32 %v2000, 4294901760
        %2045 = vmatpush.msra.mxu0 %v2044
        %v2046 = vand.u32 %v1999, 4294901760
        %2047 = vmatpush.msra.mxu0 %v2046
        %v2048 = vand.u32 %v2007, 4294901760
        %v2049 = vsub.f32 %v2007, %v2048
        %v2050 = vand.u32 %v2049, 4294901760
        %v2051 = vsub.f32 %v2049, %v2050
        %v2052 = vand.u32 %v2051, 4294901760
        %2053 = vmatmul.f32.gmra.mxu0 %v2052
        %v2054 = vpop.f32.mrf.mxu0
        %v2055 = vadd.f32 %v2003, %v2054
        %v2056 = vand.u32 %v2010, 4294901760
        %v2057 = vsub.f32 %v2010, %v2056
        %v2058 = vand.u32 %v2057, 4294901760
        %v2059 = vsub.f32 %v2057, %v2058
        %v2060 = vand.u32 %v2059, 4294901760
        %2061 = vmatmul.f32.gmra.mxu0 %v2060
        %v2062 = vpop.f32.mrf.mxu0
        %v2063 = vadd.f32 %v2003, %v2062
        %v2064 = vand.u32 %v2013, 4294901760
        %v2065 = vsub.f32 %v2013, %v2064
        %v2066 = vand.u32 %v2065, 4294901760
        %v2067 = vsub.f32 %v2065, %v2066
        %v2068 = vand.u32 %v2067, 4294901760
        %2069 = vmatmul.f32.gmra.mxu0 %v2068
        %v2070 = vpop.f32.mrf.mxu0
        %v2071 = vadd.f32 %v2003, %v2070
        %v2072 = vand.u32 %v2016, 4294901760
        %v2073 = vsub.f32 %v2016, %v2072
        %v2074 = vand.u32 %v2073, 4294901760
        %v2075 = vsub.f32 %v2073, %v2074
        %v2076 = vand.u32 %v2075, 4294901760
        %2077 = vmatmul.f32.gmra.mxu0 %v2076
        %v2078 = vpop.f32.mrf.mxu0
        %v2079 = vadd.f32 %v2003, %v2078
        %v2080 = vand.u32 %v2019, 4294901760
        %v2081 = vsub.f32 %v2019, %v2080
        %v2082 = vand.u32 %v2081, 4294901760
        %v2083 = vsub.f32 %v2081, %v2082
        %v2084 = vand.u32 %v2083, 4294901760
        %2085 = vmatmul.f32.gmra.mxu0 %v2084
        %v2086 = vpop.f32.mrf.mxu0
        %v2087 = vadd.f32 %v2003, %v2086
        %v2088 = vand.u32 %v2022, 4294901760
        %v2089 = vsub.f32 %v2022, %v2088
        %v2090 = vand.u32 %v2089, 4294901760
        %v2091 = vsub.f32 %v2089, %v2090
        %v2092 = vand.u32 %v2091, 4294901760
        %2093 = vmatmul.f32.gmra.mxu0 %v2092
        %v2094 = vpop.f32.mrf.mxu0
        %v2095 = vadd.f32 %v2003, %v2094
        %v2096 = vand.u32 %v2025, 4294901760
        %v2097 = vsub.f32 %v2025, %v2096
        %v2098 = vand.u32 %v2097, 4294901760
        %v2099 = vsub.f32 %v2097, %v2098
        %v2100 = vand.u32 %v2099, 4294901760
        %2101 = vmatmul.f32.gmra.mxu0 %v2100
        %v2102 = vpop.f32.mrf.mxu0
        %v2103 = vadd.f32 %v2003, %v2102
        %v2104 = vand.u32 %v2028, 4294901760
        %v2105 = vsub.f32 %v2028, %v2104
        %v2106 = vand.u32 %v2105, 4294901760
        %v2107 = vsub.f32 %v2105, %v2106
        %v2108 = vand.u32 %v2107, 4294901760
        %2109 = vmatmul.f32.gmra.mxu0 %v2108
        %v2110 = vpop.f32.mrf.mxu0
        %v2111 = vadd.f32 %v2003, %v2110
        %2112 = vdwg.mxu0
        %2113 = vmatpush.msra.mxu0 0.0
        %2114 = vmatpush.msra.mxu0 0.0
        %2115 = vmatpush.msra.mxu0 0.0
        %2116 = vmatpush.msra.mxu0 0.0
        %2117 = vmatpush.msra.mxu0 0.0
        %2118 = vmatpush.msra.mxu0 0.0
        %2119 = vmatpush.msra.mxu0 0.0
        %2120 = vmatpush.msra.mxu0 0.0
        %2121 = vmatpush.msra.mxu0 0.0
        %2122 = vmatpush.msra.mxu0 0.0
        %2123 = vmatpush.msra.mxu0 0.0
        %2124 = vmatpush.msra.mxu0 0.0
        %2125 = vmatpush.msra.mxu0 0.0
        %2126 = vmatpush.msra.mxu0 0.0
        %v2127 = vand.u32 %v2000, 4294901760
        %v2128 = vsub.f32 %v2000, %v2127
        %v2129 = vand.u32 %v2128, 4294901760
        %v2130 = vsub.f32 %v2128, %v2129
        %v2131 = vand.u32 %v2130, 4294901760
        %2132 = vmatpush.msra.mxu0 %v2131
        %v2133 = vand.u32 %v1999, 4294901760
        %v2134 = vsub.f32 %v1999, %v2133
        %v2135 = vand.u32 %v2134, 4294901760
        %v2136 = vsub.f32 %v2134, %v2135
        %v2137 = vand.u32 %v2136, 4294901760
        %2138 = vmatpush.msra.mxu0 %v2137
        %v2139 = vand.u32 %v2007, 4294901760
        %2140 = vmatmul.f32.gmra.mxu0 %v2139
        %v2141 = vpop.f32.mrf.mxu0
        %v2142 = vadd.f32 %v2055, %v2141
        %v2143 = vand.u32 %v2010, 4294901760
        %2144 = vmatmul.f32.gmra.mxu0 %v2143
        %v2145 = vpop.f32.mrf.mxu0
        %v2146 = vadd.f32 %v2063, %v2145
        %v2147 = vand.u32 %v2013, 4294901760
        %2148 = vmatmul.f32.gmra.mxu0 %v2147
        %v2149 = vpop.f32.mrf.mxu0
        %v2150 = vadd.f32 %v2071, %v2149
        %v2151 = vand.u32 %v2016, 4294901760
        %2152 = vmatmul.f32.gmra.mxu0 %v2151
        %v2153 = vpop.f32.mrf.mxu0
        %v2154 = vadd.f32 %v2079, %v2153
        %v2155 = vand.u32 %v2019, 4294901760
        %2156 = vmatmul.f32.gmra.mxu0 %v2155
        %v2157 = vpop.f32.mrf.mxu0
        %v2158 = vadd.f32 %v2087, %v2157
        %v2159 = vand.u32 %v2022, 4294901760
        %2160 = vmatmul.f32.gmra.mxu0 %v2159
        %v2161 = vpop.f32.mrf.mxu0
        %v2162 = vadd.f32 %v2095, %v2161
        %v2163 = vand.u32 %v2025, 4294901760
        %2164 = vmatmul.f32.gmra.mxu0 %v2163
        %v2165 = vpop.f32.mrf.mxu0
        %v2166 = vadd.f32 %v2103, %v2165
        %v2167 = vand.u32 %v2028, 4294901760
        %2168 = vmatmul.f32.gmra.mxu0 %v2167
        %v2169 = vpop.f32.mrf.mxu0
        %v2170 = vadd.f32 %v2111, %v2169
        %2171 = vdwg.mxu0
        %2172 = vmatpush.msra.mxu0 0.0
        %2173 = vmatpush.msra.mxu0 0.0
        %2174 = vmatpush.msra.mxu0 0.0
        %2175 = vmatpush.msra.mxu0 0.0
        %2176 = vmatpush.msra.mxu0 0.0
        %2177 = vmatpush.msra.mxu0 0.0
        %2178 = vmatpush.msra.mxu0 0.0
        %2179 = vmatpush.msra.mxu0 0.0
        %2180 = vmatpush.msra.mxu0 0.0
        %2181 = vmatpush.msra.mxu0 0.0
        %2182 = vmatpush.msra.mxu0 0.0
        %2183 = vmatpush.msra.mxu0 0.0
        %2184 = vmatpush.msra.mxu0 0.0
        %2185 = vmatpush.msra.mxu0 0.0
        %v2186 = vand.u32 %v2000, 4294901760
        %v2187 = vsub.f32 %v2000, %v2186
        %2188 = vmatpush.msra.mxu0 %v2187
        %v2189 = vand.u32 %v1999, 4294901760
        %v2190 = vsub.f32 %v1999, %v2189
        %2191 = vmatpush.msra.mxu0 %v2190
        %v2192 = vand.u32 %v2007, 4294901760
        %v2193 = vsub.f32 %v2007, %v2192
        %2194 = vmatmul.f32.gmra.mxu0 %v2193
        %v2195 = vpop.f32.mrf.mxu0
        %v2196 = vadd.f32 %v2142, %v2195
        %v2197 = vand.u32 %v2010, 4294901760
        %v2198 = vsub.f32 %v2010, %v2197
        %2199 = vmatmul.f32.gmra.mxu0 %v2198
        %v2200 = vpop.f32.mrf.mxu0
        %v2201 = vadd.f32 %v2146, %v2200
        %v2202 = vand.u32 %v2013, 4294901760
        %v2203 = vsub.f32 %v2013, %v2202
        %2204 = vmatmul.f32.gmra.mxu0 %v2203
        %v2205 = vpop.f32.mrf.mxu0
        %v2206 = vadd.f32 %v2150, %v2205
        %v2207 = vand.u32 %v2016, 4294901760
        %v2208 = vsub.f32 %v2016, %v2207
        %2209 = vmatmul.f32.gmra.mxu0 %v2208
        %v2210 = vpop.f32.mrf.mxu0
        %v2211 = vadd.f32 %v2154, %v2210
        %v2212 = vand.u32 %v2019, 4294901760
        %v2213 = vsub.f32 %v2019, %v2212
        %2214 = vmatmul.f32.gmra.mxu0 %v2213
        %v2215 = vpop.f32.mrf.mxu0
        %v2216 = vadd.f32 %v2158, %v2215
        %v2217 = vand.u32 %v2022, 4294901760
        %v2218 = vsub.f32 %v2022, %v2217
        %2219 = vmatmul.f32.gmra.mxu0 %v2218
        %v2220 = vpop.f32.mrf.mxu0
        %v2221 = vadd.f32 %v2162, %v2220
        %v2222 = vand.u32 %v2025, 4294901760
        %v2223 = vsub.f32 %v2025, %v2222
        %2224 = vmatmul.f32.gmra.mxu0 %v2223
        %v2225 = vpop.f32.mrf.mxu0
        %v2226 = vadd.f32 %v2166, %v2225
        %v2227 = vand.u32 %v2028, 4294901760
        %v2228 = vsub.f32 %v2028, %v2227
        %2229 = vmatmul.f32.gmra.mxu0 %v2228
        %v2230 = vpop.f32.mrf.mxu0
        %v2231 = vadd.f32 %v2170, %v2230
        %2232 = vdwg.mxu0
        %2233 = vmatpush.msra.mxu0 0.0
        %2234 = vmatpush.msra.mxu0 0.0
        %2235 = vmatpush.msra.mxu0 0.0
        %2236 = vmatpush.msra.mxu0 0.0
        %2237 = vmatpush.msra.mxu0 0.0
        %2238 = vmatpush.msra.mxu0 0.0
        %2239 = vmatpush.msra.mxu0 0.0
        %2240 = vmatpush.msra.mxu0 0.0
        %2241 = vmatpush.msra.mxu0 0.0
        %2242 = vmatpush.msra.mxu0 0.0
        %2243 = vmatpush.msra.mxu0 0.0
        %2244 = vmatpush.msra.mxu0 0.0
        %2245 = vmatpush.msra.mxu0 0.0
        %2246 = vmatpush.msra.mxu0 0.0
        %v2247 = vand.u32 %v2000, 4294901760
        %2248 = vmatpush.msra.mxu0 %v2247
        %v2249 = vand.u32 %v1999, 4294901760
        %2250 = vmatpush.msra.mxu0 %v2249
        %v2251 = vand.u32 %v2007, 4294901760
        %v2252 = vsub.f32 %v2007, %v2251
        %v2253 = vand.u32 %v2252, 4294901760
        %2254 = vmatmul.f32.gmra.mxu0 %v2253
        %v2255 = vpop.f32.mrf.mxu0
        %v2256 = vadd.f32 %v2196, %v2255
        %v2257 = vand.u32 %v2010, 4294901760
        %v2258 = vsub.f32 %v2010, %v2257
        %v2259 = vand.u32 %v2258, 4294901760
        %2260 = vmatmul.f32.gmra.mxu0 %v2259
        %v2261 = vpop.f32.mrf.mxu0
        %v2262 = vadd.f32 %v2201, %v2261
        %v2263 = vand.u32 %v2013, 4294901760
        %v2264 = vsub.f32 %v2013, %v2263
        %v2265 = vand.u32 %v2264, 4294901760
        %2266 = vmatmul.f32.gmra.mxu0 %v2265
        %v2267 = vpop.f32.mrf.mxu0
        %v2268 = vadd.f32 %v2206, %v2267
        %v2269 = vand.u32 %v2016, 4294901760
        %v2270 = vsub.f32 %v2016, %v2269
        %v2271 = vand.u32 %v2270, 4294901760
        %2272 = vmatmul.f32.gmra.mxu0 %v2271
        %v2273 = vpop.f32.mrf.mxu0
        %v2274 = vadd.f32 %v2211, %v2273
        %v2275 = vand.u32 %v2019, 4294901760
        %v2276 = vsub.f32 %v2019, %v2275
        %v2277 = vand.u32 %v2276, 4294901760
        %2278 = vmatmul.f32.gmra.mxu0 %v2277
        %v2279 = vpop.f32.mrf.mxu0
        %v2280 = vadd.f32 %v2216, %v2279
        %v2281 = vand.u32 %v2022, 4294901760
        %v2282 = vsub.f32 %v2022, %v2281
        %v2283 = vand.u32 %v2282, 4294901760
        %2284 = vmatmul.f32.gmra.mxu0 %v2283
        %v2285 = vpop.f32.mrf.mxu0
        %v2286 = vadd.f32 %v2221, %v2285
        %v2287 = vand.u32 %v2025, 4294901760
        %v2288 = vsub.f32 %v2025, %v2287
        %v2289 = vand.u32 %v2288, 4294901760
        %2290 = vmatmul.f32.gmra.mxu0 %v2289
        %v2291 = vpop.f32.mrf.mxu0
        %v2292 = vadd.f32 %v2226, %v2291
        %v2293 = vand.u32 %v2028, 4294901760
        %v2294 = vsub.f32 %v2028, %v2293
        %v2295 = vand.u32 %v2294, 4294901760
        %2296 = vmatmul.f32.gmra.mxu0 %v2295
        %v2297 = vpop.f32.mrf.mxu0
        %v2298 = vadd.f32 %v2231, %v2297
        %2299 = vdwg.mxu0
        %2300 = vmatpush.msra.mxu0 0.0
        %2301 = vmatpush.msra.mxu0 0.0
        %2302 = vmatpush.msra.mxu0 0.0
        %2303 = vmatpush.msra.mxu0 0.0
        %2304 = vmatpush.msra.mxu0 0.0
        %2305 = vmatpush.msra.mxu0 0.0
        %2306 = vmatpush.msra.mxu0 0.0
        %2307 = vmatpush.msra.mxu0 0.0
        %2308 = vmatpush.msra.mxu0 0.0
        %2309 = vmatpush.msra.mxu0 0.0
        %2310 = vmatpush.msra.mxu0 0.0
        %2311 = vmatpush.msra.mxu0 0.0
        %2312 = vmatpush.msra.mxu0 0.0
        %2313 = vmatpush.msra.mxu0 0.0
        %v2314 = vand.u32 %v2000, 4294901760
        %v2315 = vsub.f32 %v2000, %v2314
        %v2316 = vand.u32 %v2315, 4294901760
        %2317 = vmatpush.msra.mxu0 %v2316
        %v2318 = vand.u32 %v1999, 4294901760
        %v2319 = vsub.f32 %v1999, %v2318
        %v2320 = vand.u32 %v2319, 4294901760
        %2321 = vmatpush.msra.mxu0 %v2320
        %v2322 = vand.u32 %v2007, 4294901760
        %2323 = vmatmul.f32.gmra.mxu0 %v2322
        %v2324 = vpop.f32.mrf.mxu0
        %v2325 = vadd.f32 %v2256, %v2324
        %v2326 = vand.u32 %v2010, 4294901760
        %2327 = vmatmul.f32.gmra.mxu0 %v2326
        %v2328 = vpop.f32.mrf.mxu0
        %v2329 = vadd.f32 %v2262, %v2328
        %v2330 = vand.u32 %v2013, 4294901760
        %2331 = vmatmul.f32.gmra.mxu0 %v2330
        %v2332 = vpop.f32.mrf.mxu0
        %v2333 = vadd.f32 %v2268, %v2332
        %v2334 = vand.u32 %v2016, 4294901760
        %2335 = vmatmul.f32.gmra.mxu0 %v2334
        %v2336 = vpop.f32.mrf.mxu0
        %v2337 = vadd.f32 %v2274, %v2336
        %v2338 = vand.u32 %v2019, 4294901760
        %2339 = vmatmul.f32.gmra.mxu0 %v2338
        %v2340 = vpop.f32.mrf.mxu0
        %v2341 = vadd.f32 %v2280, %v2340
        %v2342 = vand.u32 %v2022, 4294901760
        %2343 = vmatmul.f32.gmra.mxu0 %v2342
        %v2344 = vpop.f32.mrf.mxu0
        %v2345 = vadd.f32 %v2286, %v2344
        %v2346 = vand.u32 %v2025, 4294901760
        %2347 = vmatmul.f32.gmra.mxu0 %v2346
        %v2348 = vpop.f32.mrf.mxu0
        %v2349 = vadd.f32 %v2292, %v2348
        %v2350 = vand.u32 %v2028, 4294901760
        %2351 = vmatmul.f32.gmra.mxu0 %v2350
        %v2352 = vpop.f32.mrf.mxu0
        %v2353 = vadd.f32 %v2298, %v2352
        %2354 = vdwg.mxu0
        %2355 = vmatpush.msra.mxu0 0.0
        %2356 = vmatpush.msra.mxu0 0.0
        %2357 = vmatpush.msra.mxu0 0.0
        %2358 = vmatpush.msra.mxu0 0.0
        %2359 = vmatpush.msra.mxu0 0.0
        %2360 = vmatpush.msra.mxu0 0.0
        %2361 = vmatpush.msra.mxu0 0.0
        %2362 = vmatpush.msra.mxu0 0.0
        %2363 = vmatpush.msra.mxu0 0.0
        %2364 = vmatpush.msra.mxu0 0.0
        %2365 = vmatpush.msra.mxu0 0.0
        %2366 = vmatpush.msra.mxu0 0.0
        %2367 = vmatpush.msra.mxu0 0.0
        %2368 = vmatpush.msra.mxu0 0.0
        %v2369 = vand.u32 %v2000, 4294901760
        %2370 = vmatpush.msra.mxu0 %v2369
        %v2371 = vand.u32 %v1999, 4294901760
        %2372 = vmatpush.msra.mxu0 %v2371
        %v2373 = vand.u32 %v2007, 4294901760
        %2374 = vmatmul.f32.gmra.mxu0 %v2373
        %v2375 = vpop.f32.mrf.mxu0
        %v2376 = vadd.f32 %v2325, %v2375
        %v2377 = vand.u32 %v2010, 4294901760
        %2378 = vmatmul.f32.gmra.mxu0 %v2377
        %v2379 = vpop.f32.mrf.mxu0
        %v2380 = vadd.f32 %v2329, %v2379
        %v2381 = vand.u32 %v2013, 4294901760
        %2382 = vmatmul.f32.gmra.mxu0 %v2381
        %v2383 = vpop.f32.mrf.mxu0
        %v2384 = vadd.f32 %v2333, %v2383
        %v2385 = vand.u32 %v2016, 4294901760
        %2386 = vmatmul.f32.gmra.mxu0 %v2385
        %v2387 = vpop.f32.mrf.mxu0
        %v2388 = vadd.f32 %v2337, %v2387
        %v2389 = vand.u32 %v2019, 4294901760
        %2390 = vmatmul.f32.gmra.mxu0 %v2389
        %v2391 = vpop.f32.mrf.mxu0
        %v2392 = vadd.f32 %v2341, %v2391
        %v2393 = vand.u32 %v2022, 4294901760
        %2394 = vmatmul.f32.gmra.mxu0 %v2393
        %v2395 = vpop.f32.mrf.mxu0
        %v2396 = vadd.f32 %v2345, %v2395
        %v2397 = vand.u32 %v2025, 4294901760
        %2398 = vmatmul.f32.gmra.mxu0 %v2397
        %v2399 = vpop.f32.mrf.mxu0
        %v2400 = vadd.f32 %v2349, %v2399
        %v2401 = vand.u32 %v2028, 4294901760
        %2402 = vmatmul.f32.gmra.mxu0 %v2401
        %v2403 = vpop.f32.mrf.mxu0
        %v2404 = vadd.f32 %v2353, %v2403
        %2405 = vdwg.mxu0
        %v2406 = vtanh.pop %v2376
        %v2407 = vtanh.pop %v2380
        %v2408 = vtanh.pop %v2384
        %v2409 = vtanh.pop %v2388
        %v2410 = vtanh.pop %v2392
        %v2411 = vtanh.pop %v2396
        %v2412 = vtanh.pop %v2400
        %v2413 = vtanh.pop %v2404
        %v2414 = vld [vmem:[%s9] sm:$0xff]
        %v2415 = vld [vmem:[%s9 + $0x8] sm:$0xff]
        %v2416 = vld [vmem:[%s9 + $0x10] sm:$0xff]
        %v2417 = vld [vmem:[%s9 + $0x18] sm:$0xff]
        %v2418 = vld [vmem:[%s10] sm:$0x1]
        %v2420 = vperm.slane %v2418, 0
        %v2423 = vsel %vm1564, %v2406, 0
        %v2426 = vsel %vm1564, %v2407, 0
        %v2429 = vsel %vm1564, %v2408, 0
        %v2432 = vsel %vm1564, %v2409, 0
        %v2435 = vsel %vm1564, %v2410, 0
        %v2438 = vsel %vm1564, %v2411, 0
        %v2441 = vsel %vm1564, %v2412, 0
        %v2444 = vsel %vm1564, %v2413, 0
        %2446 = vmatpush.msra.mxu0 0.0
        %2447 = vmatpush.msra.mxu0 0.0
        %2448 = vmatpush.msra.mxu0 0.0
        %2449 = vmatpush.msra.mxu0 0.0
        %2450 = vmatpush.msra.mxu0 0.0
        %2451 = vmatpush.msra.mxu0 0.0
        %2452 = vmatpush.msra.mxu0 0.0
        %2453 = vmatpush.msra.mxu0 0.0
        %2454 = vmatpush.msra.mxu0 0.0
        %2455 = vmatpush.msra.mxu0 0.0
        %2456 = vmatpush.msra.mxu0 0.0
        %2457 = vmatpush.msra.mxu0 0.0
        %v2458 = vand.u32 %v2417, 4294901760
        %2459 = vmatpush.msra.mxu0 %v2458
        %v2460 = vand.u32 %v2416, 4294901760
        %2461 = vmatpush.msra.mxu0 %v2460
        %v2462 = vand.u32 %v2415, 4294901760
        %2463 = vmatpush.msra.mxu0 %v2462
        %v2464 = vand.u32 %v2414, 4294901760
        %2465 = vmatpush.msra.mxu0 %v2464
        %v2466 = vand.u32 %v2423, 4294901760
        %v2467 = vsub.f32 %v2423, %v2466
        %v2468 = vand.u32 %v2467, 4294901760
        %v2469 = vsub.f32 %v2467, %v2468
        %v2470 = vand.u32 %v2469, 4294901760
        %2471 = vmatmul.f32.gmra.mxu0 %v2470
        %v2472 = vpop.f32.mrf.mxu0
        %v2473 = vadd.f32 %v2420, %v2472
        %v2474 = vand.u32 %v2426, 4294901760
        %v2475 = vsub.f32 %v2426, %v2474
        %v2476 = vand.u32 %v2475, 4294901760
        %v2477 = vsub.f32 %v2475, %v2476
        %v2478 = vand.u32 %v2477, 4294901760
        %2479 = vmatmul.f32.gmra.mxu0 %v2478
        %v2480 = vpop.f32.mrf.mxu0
        %v2481 = vadd.f32 %v2420, %v2480
        %v2482 = vand.u32 %v2429, 4294901760
        %v2483 = vsub.f32 %v2429, %v2482
        %v2484 = vand.u32 %v2483, 4294901760
        %v2485 = vsub.f32 %v2483, %v2484
        %v2486 = vand.u32 %v2485, 4294901760
        %2487 = vmatmul.f32.gmra.mxu0 %v2486
        %v2488 = vpop.f32.mrf.mxu0
        %v2489 = vadd.f32 %v2420, %v2488
        %v2490 = vand.u32 %v2432, 4294901760
        %v2491 = vsub.f32 %v2432, %v2490
        %v2492 = vand.u32 %v2491, 4294901760
        %v2493 = vsub.f32 %v2491, %v2492
        %v2494 = vand.u32 %v2493, 4294901760
        %2495 = vmatmul.f32.gmra.mxu0 %v2494
        %v2496 = vpop.f32.mrf.mxu0
        %v2497 = vadd.f32 %v2420, %v2496
        %v2498 = vand.u32 %v2435, 4294901760
        %v2499 = vsub.f32 %v2435, %v2498
        %v2500 = vand.u32 %v2499, 4294901760
        %v2501 = vsub.f32 %v2499, %v2500
        %v2502 = vand.u32 %v2501, 4294901760
        %2503 = vmatmul.f32.gmra.mxu0 %v2502
        %v2504 = vpop.f32.mrf.mxu0
        %v2505 = vadd.f32 %v2420, %v2504
        %v2506 = vand.u32 %v2438, 4294901760
        %v2507 = vsub.f32 %v2438, %v2506
        %v2508 = vand.u32 %v2507, 4294901760
        %v2509 = vsub.f32 %v2507, %v2508
        %v2510 = vand.u32 %v2509, 4294901760
        %2511 = vmatmul.f32.gmra.mxu0 %v2510
        %v2512 = vpop.f32.mrf.mxu0
        %v2513 = vadd.f32 %v2420, %v2512
        %v2514 = vand.u32 %v2441, 4294901760
        %v2515 = vsub.f32 %v2441, %v2514
        %v2516 = vand.u32 %v2515, 4294901760
        %v2517 = vsub.f32 %v2515, %v2516
        %v2518 = vand.u32 %v2517, 4294901760
        %2519 = vmatmul.f32.gmra.mxu0 %v2518
        %v2520 = vpop.f32.mrf.mxu0
        %v2521 = vadd.f32 %v2420, %v2520
        %v2522 = vand.u32 %v2444, 4294901760
        %v2523 = vsub.f32 %v2444, %v2522
        %v2524 = vand.u32 %v2523, 4294901760
        %v2525 = vsub.f32 %v2523, %v2524
        %v2526 = vand.u32 %v2525, 4294901760
        %2527 = vmatmul.f32.gmra.mxu0 %v2526
        %v2528 = vpop.f32.mrf.mxu0
        %v2529 = vadd.f32 %v2420, %v2528
        %2530 = vdwg.mxu0
        %2531 = vmatpush.msra.mxu0 0.0
        %2532 = vmatpush.msra.mxu0 0.0
        %2533 = vmatpush.msra.mxu0 0.0
        %2534 = vmatpush.msra.mxu0 0.0
        %2535 = vmatpush.msra.mxu0 0.0
        %2536 = vmatpush.msra.mxu0 0.0
        %2537 = vmatpush.msra.mxu0 0.0
        %2538 = vmatpush.msra.mxu0 0.0
        %2539 = vmatpush.msra.mxu0 0.0
        %2540 = vmatpush.msra.mxu0 0.0
        %2541 = vmatpush.msra.mxu0 0.0
        %2542 = vmatpush.msra.mxu0 0.0
        %v2543 = vand.u32 %v2417, 4294901760
        %v2544 = vsub.f32 %v2417, %v2543
        %v2545 = vand.u32 %v2544, 4294901760
        %v2546 = vsub.f32 %v2544, %v2545
        %v2547 = vand.u32 %v2546, 4294901760
        %2548 = vmatpush.msra.mxu0 %v2547
        %v2549 = vand.u32 %v2416, 4294901760
        %v2550 = vsub.f32 %v2416, %v2549
        %v2551 = vand.u32 %v2550, 4294901760
        %v2552 = vsub.f32 %v2550, %v2551
        %v2553 = vand.u32 %v2552, 4294901760
        %2554 = vmatpush.msra.mxu0 %v2553
        %v2555 = vand.u32 %v2415, 4294901760
        %v2556 = vsub.f32 %v2415, %v2555
        %v2557 = vand.u32 %v2556, 4294901760
        %v2558 = vsub.f32 %v2556, %v2557
        %v2559 = vand.u32 %v2558, 4294901760
        %2560 = vmatpush.msra.mxu0 %v2559
        %v2561 = vand.u32 %v2414, 4294901760
        %v2562 = vsub.f32 %v2414, %v2561
        %v2563 = vand.u32 %v2562, 4294901760
        %v2564 = vsub.f32 %v2562, %v2563
        %v2565 = vand.u32 %v2564, 4294901760
        %2566 = vmatpush.msra.mxu0 %v2565
        %v2567 = vand.u32 %v2423, 4294901760
        %2568 = vmatmul.f32.gmra.mxu0 %v2567
        %v2569 = vpop.f32.mrf.mxu0
        %v2570 = vadd.f32 %v2473, %v2569
        %v2571 = vand.u32 %v2426, 4294901760
        %2572 = vmatmul.f32.gmra.mxu0 %v2571
        %v2573 = vpop.f32.mrf.mxu0
        %v2574 = vadd.f32 %v2481, %v2573
        %v2575 = vand.u32 %v2429, 4294901760
        %2576 = vmatmul.f32.gmra.mxu0 %v2575
        %v2577 = vpop.f32.mrf.mxu0
        %v2578 = vadd.f32 %v2489, %v2577
        %v2579 = vand.u32 %v2432, 4294901760
        %2580 = vmatmul.f32.gmra.mxu0 %v2579
        %v2581 = vpop.f32.mrf.mxu0
        %v2582 = vadd.f32 %v2497, %v2581
        %v2583 = vand.u32 %v2435, 4294901760
        %2584 = vmatmul.f32.gmra.mxu0 %v2583
        %v2585 = vpop.f32.mrf.mxu0
        %v2586 = vadd.f32 %v2505, %v2585
        %v2587 = vand.u32 %v2438, 4294901760
        %2588 = vmatmul.f32.gmra.mxu0 %v2587
        %v2589 = vpop.f32.mrf.mxu0
        %v2590 = vadd.f32 %v2513, %v2589
        %v2591 = vand.u32 %v2441, 4294901760
        %2592 = vmatmul.f32.gmra.mxu0 %v2591
        %v2593 = vpop.f32.mrf.mxu0
        %v2594 = vadd.f32 %v2521, %v2593
        %v2595 = vand.u32 %v2444, 4294901760
        %2596 = vmatmul.f32.gmra.mxu0 %v2595
        %v2597 = vpop.f32.mrf.mxu0
        %v2598 = vadd.f32 %v2529, %v2597
        %2599 = vdwg.mxu0
        %2600 = vmatpush.msra.mxu0 0.0
        %2601 = vmatpush.msra.mxu0 0.0
        %2602 = vmatpush.msra.mxu0 0.0
        %2603 = vmatpush.msra.mxu0 0.0
        %2604 = vmatpush.msra.mxu0 0.0
        %2605 = vmatpush.msra.mxu0 0.0
        %2606 = vmatpush.msra.mxu0 0.0
        %2607 = vmatpush.msra.mxu0 0.0
        %2608 = vmatpush.msra.mxu0 0.0
        %2609 = vmatpush.msra.mxu0 0.0
        %2610 = vmatpush.msra.mxu0 0.0
        %2611 = vmatpush.msra.mxu0 0.0
        %v2612 = vand.u32 %v2417, 4294901760
        %v2613 = vsub.f32 %v2417, %v2612
        %2614 = vmatpush.msra.mxu0 %v2613
        %v2615 = vand.u32 %v2416, 4294901760
        %v2616 = vsub.f32 %v2416, %v2615
        %2617 = vmatpush.msra.mxu0 %v2616
        %v2618 = vand.u32 %v2415, 4294901760
        %v2619 = vsub.f32 %v2415, %v2618
        %2620 = vmatpush.msra.mxu0 %v2619
        %v2621 = vand.u32 %v2414, 4294901760
        %v2622 = vsub.f32 %v2414, %v2621
        %2623 = vmatpush.msra.mxu0 %v2622
        %v2624 = vand.u32 %v2423, 4294901760
        %v2625 = vsub.f32 %v2423, %v2624
        %2626 = vmatmul.f32.gmra.mxu0 %v2625
        %v2627 = vpop.f32.mrf.mxu0
        %v2628 = vadd.f32 %v2570, %v2627
        %v2629 = vand.u32 %v2426, 4294901760
        %v2630 = vsub.f32 %v2426, %v2629
        %2631 = vmatmul.f32.gmra.mxu0 %v2630
        %v2632 = vpop.f32.mrf.mxu0
        %v2633 = vadd.f32 %v2574, %v2632
        %v2634 = vand.u32 %v2429, 4294901760
        %v2635 = vsub.f32 %v2429, %v2634
        %2636 = vmatmul.f32.gmra.mxu0 %v2635
        %v2637 = vpop.f32.mrf.mxu0
        %v2638 = vadd.f32 %v2578, %v2637
        %v2639 = vand.u32 %v2432, 4294901760
        %v2640 = vsub.f32 %v2432, %v2639
        %2641 = vmatmul.f32.gmra.mxu0 %v2640
        %v2642 = vpop.f32.mrf.mxu0
        %v2643 = vadd.f32 %v2582, %v2642
        %v2644 = vand.u32 %v2435, 4294901760
        %v2645 = vsub.f32 %v2435, %v2644
        %2646 = vmatmul.f32.gmra.mxu0 %v2645
        %v2647 = vpop.f32.mrf.mxu0
        %v2648 = vadd.f32 %v2586, %v2647
        %v2649 = vand.u32 %v2438, 4294901760
        %v2650 = vsub.f32 %v2438, %v2649
        %2651 = vmatmul.f32.gmra.mxu0 %v2650
        %v2652 = vpop.f32.mrf.mxu0
        %v2653 = vadd.f32 %v2590, %v2652
        %v2654 = vand.u32 %v2441, 4294901760
        %v2655 = vsub.f32 %v2441, %v2654
        %2656 = vmatmul.f32.gmra.mxu0 %v2655
        %v2657 = vpop.f32.mrf.mxu0
        %v2658 = vadd.f32 %v2594, %v2657
        %v2659 = vand.u32 %v2444, 4294901760
        %v2660 = vsub.f32 %v2444, %v2659
        %2661 = vmatmul.f32.gmra.mxu0 %v2660
        %v2662 = vpop.f32.mrf.mxu0
        %v2663 = vadd.f32 %v2598, %v2662
        %2664 = vdwg.mxu0
        %2665 = vmatpush.msra.mxu0 0.0
        %2666 = vmatpush.msra.mxu0 0.0
        %2667 = vmatpush.msra.mxu0 0.0
        %2668 = vmatpush.msra.mxu0 0.0
        %2669 = vmatpush.msra.mxu0 0.0
        %2670 = vmatpush.msra.mxu0 0.0
        %2671 = vmatpush.msra.mxu0 0.0
        %2672 = vmatpush.msra.mxu0 0.0
        %2673 = vmatpush.msra.mxu0 0.0
        %2674 = vmatpush.msra.mxu0 0.0
        %2675 = vmatpush.msra.mxu0 0.0
        %2676 = vmatpush.msra.mxu0 0.0
        %v2677 = vand.u32 %v2417, 4294901760
        %2678 = vmatpush.msra.mxu0 %v2677
        %v2679 = vand.u32 %v2416, 4294901760
        %2680 = vmatpush.msra.mxu0 %v2679
        %v2681 = vand.u32 %v2415, 4294901760
        %2682 = vmatpush.msra.mxu0 %v2681
        %v2683 = vand.u32 %v2414, 4294901760
        %2684 = vmatpush.msra.mxu0 %v2683
        %v2685 = vand.u32 %v2423, 4294901760
        %v2686 = vsub.f32 %v2423, %v2685
        %v2687 = vand.u32 %v2686, 4294901760
        %2688 = vmatmul.f32.gmra.mxu0 %v2687
        %v2689 = vpop.f32.mrf.mxu0
        %v2690 = vadd.f32 %v2628, %v2689
        %v2691 = vand.u32 %v2426, 4294901760
        %v2692 = vsub.f32 %v2426, %v2691
        %v2693 = vand.u32 %v2692, 4294901760
        %2694 = vmatmul.f32.gmra.mxu0 %v2693
        %v2695 = vpop.f32.mrf.mxu0
        %v2696 = vadd.f32 %v2633, %v2695
        %v2697 = vand.u32 %v2429, 4294901760
        %v2698 = vsub.f32 %v2429, %v2697
        %v2699 = vand.u32 %v2698, 4294901760
        %2700 = vmatmul.f32.gmra.mxu0 %v2699
        %v2701 = vpop.f32.mrf.mxu0
        %v2702 = vadd.f32 %v2638, %v2701
        %v2703 = vand.u32 %v2432, 4294901760
        %v2704 = vsub.f32 %v2432, %v2703
        %v2705 = vand.u32 %v2704, 4294901760
        %2706 = vmatmul.f32.gmra.mxu0 %v2705
        %v2707 = vpop.f32.mrf.mxu0
        %v2708 = vadd.f32 %v2643, %v2707
        %v2709 = vand.u32 %v2435, 4294901760
        %v2710 = vsub.f32 %v2435, %v2709
        %v2711 = vand.u32 %v2710, 4294901760
        %2712 = vmatmul.f32.gmra.mxu0 %v2711
        %v2713 = vpop.f32.mrf.mxu0
        %v2714 = vadd.f32 %v2648, %v2713
        %v2715 = vand.u32 %v2438, 4294901760
        %v2716 = vsub.f32 %v2438, %v2715
        %v2717 = vand.u32 %v2716, 4294901760
        %2718 = vmatmul.f32.gmra.mxu0 %v2717
        %v2719 = vpop.f32.mrf.mxu0
        %v2720 = vadd.f32 %v2653, %v2719
        %v2721 = vand.u32 %v2441, 4294901760
        %v2722 = vsub.f32 %v2441, %v2721
        %v2723 = vand.u32 %v2722, 4294901760
        %2724 = vmatmul.f32.gmra.mxu0 %v2723
        %v2725 = vpop.f32.mrf.mxu0
        %v2726 = vadd.f32 %v2658, %v2725
        %v2727 = vand.u32 %v2444, 4294901760
        %v2728 = vsub.f32 %v2444, %v2727
        %v2729 = vand.u32 %v2728, 4294901760
        %2730 = vmatmul.f32.gmra.mxu0 %v2729
        %v2731 = vpop.f32.mrf.mxu0
        %v2732 = vadd.f32 %v2663, %v2731
        %2733 = vdwg.mxu0
        %2734 = vmatpush.msra.mxu0 0.0
        %2735 = vmatpush.msra.mxu0 0.0
        %2736 = vmatpush.msra.mxu0 0.0
        %2737 = vmatpush.msra.mxu0 0.0
        %2738 = vmatpush.msra.mxu0 0.0
        %2739 = vmatpush.msra.mxu0 0.0
        %2740 = vmatpush.msra.mxu0 0.0
        %2741 = vmatpush.msra.mxu0 0.0
        %2742 = vmatpush.msra.mxu0 0.0
        %2743 = vmatpush.msra.mxu0 0.0
        %2744 = vmatpush.msra.mxu0 0.0
        %2745 = vmatpush.msra.mxu0 0.0
        %v2746 = vand.u32 %v2417, 4294901760
        %v2747 = vsub.f32 %v2417, %v2746
        %v2748 = vand.u32 %v2747, 4294901760
        %2749 = vmatpush.msra.mxu0 %v2748
        %v2750 = vand.u32 %v2416, 4294901760
        %v2751 = vsub.f32 %v2416, %v2750
        %v2752 = vand.u32 %v2751, 4294901760
        %2753 = vmatpush.msra.mxu0 %v2752
        %v2754 = vand.u32 %v2415, 4294901760
        %v2755 = vsub.f32 %v2415, %v2754
        %v2756 = vand.u32 %v2755, 4294901760
        %2757 = vmatpush.msra.mxu0 %v2756
        %v2758 = vand.u32 %v2414, 4294901760
        %v2759 = vsub.f32 %v2414, %v2758
        %v2760 = vand.u32 %v2759, 4294901760
        %2761 = vmatpush.msra.mxu0 %v2760
        %v2762 = vand.u32 %v2423, 4294901760
        %2763 = vmatmul.f32.gmra.mxu0 %v2762
        %v2764 = vpop.f32.mrf.mxu0
        %v2765 = vadd.f32 %v2690, %v2764
        %v2766 = vand.u32 %v2426, 4294901760
        %2767 = vmatmul.f32.gmra.mxu0 %v2766
        %v2768 = vpop.f32.mrf.mxu0
        %v2769 = vadd.f32 %v2696, %v2768
        %v2770 = vand.u32 %v2429, 4294901760
        %2771 = vmatmul.f32.gmra.mxu0 %v2770
        %v2772 = vpop.f32.mrf.mxu0
        %v2773 = vadd.f32 %v2702, %v2772
        %v2774 = vand.u32 %v2432, 4294901760
        %2775 = vmatmul.f32.gmra.mxu0 %v2774
        %v2776 = vpop.f32.mrf.mxu0
        %v2777 = vadd.f32 %v2708, %v2776
        %v2778 = vand.u32 %v2435, 4294901760
        %2779 = vmatmul.f32.gmra.mxu0 %v2778
        %v2780 = vpop.f32.mrf.mxu0
        %v2781 = vadd.f32 %v2714, %v2780
        %v2782 = vand.u32 %v2438, 4294901760
        %2783 = vmatmul.f32.gmra.mxu0 %v2782
        %v2784 = vpop.f32.mrf.mxu0
        %v2785 = vadd.f32 %v2720, %v2784
        %v2786 = vand.u32 %v2441, 4294901760
        %2787 = vmatmul.f32.gmra.mxu0 %v2786
        %v2788 = vpop.f32.mrf.mxu0
        %v2789 = vadd.f32 %v2726, %v2788
        %v2790 = vand.u32 %v2444, 4294901760
        %2791 = vmatmul.f32.gmra.mxu0 %v2790
        %v2792 = vpop.f32.mrf.mxu0
        %v2793 = vadd.f32 %v2732, %v2792
        %2794 = vdwg.mxu0
        %2795 = vmatpush.msra.mxu0 0.0
        %2796 = vmatpush.msra.mxu0 0.0
        %2797 = vmatpush.msra.mxu0 0.0
        %2798 = vmatpush.msra.mxu0 0.0
        %2799 = vmatpush.msra.mxu0 0.0
        %2800 = vmatpush.msra.mxu0 0.0
        %2801 = vmatpush.msra.mxu0 0.0
        %2802 = vmatpush.msra.mxu0 0.0
        %2803 = vmatpush.msra.mxu0 0.0
        %2804 = vmatpush.msra.mxu0 0.0
        %2805 = vmatpush.msra.mxu0 0.0
        %2806 = vmatpush.msra.mxu0 0.0
        %v2807 = vand.u32 %v2417, 4294901760
        %2808 = vmatpush.msra.mxu0 %v2807
        %v2809 = vand.u32 %v2416, 4294901760
        %2810 = vmatpush.msra.mxu0 %v2809
        %v2811 = vand.u32 %v2415, 4294901760
        %2812 = vmatpush.msra.mxu0 %v2811
        %v2813 = vand.u32 %v2414, 4294901760
        %2814 = vmatpush.msra.mxu0 %v2813
        %v2815 = vand.u32 %v2423, 4294901760
        %2816 = vmatmul.f32.gmra.mxu0 %v2815
        %v2817 = vpop.f32.mrf.mxu0
        %v2818 = vadd.f32 %v2765, %v2817
        %v2819 = vand.u32 %v2426, 4294901760
        %2820 = vmatmul.f32.gmra.mxu0 %v2819
        %v2821 = vpop.f32.mrf.mxu0
        %v2822 = vadd.f32 %v2769, %v2821
        %v2823 = vand.u32 %v2429, 4294901760
        %2824 = vmatmul.f32.gmra.mxu0 %v2823
        %v2825 = vpop.f32.mrf.mxu0
        %v2826 = vadd.f32 %v2773, %v2825
        %v2827 = vand.u32 %v2432, 4294901760
        %2828 = vmatmul.f32.gmra.mxu0 %v2827
        %v2829 = vpop.f32.mrf.mxu0
        %v2830 = vadd.f32 %v2777, %v2829
        %v2831 = vand.u32 %v2435, 4294901760
        %2832 = vmatmul.f32.gmra.mxu0 %v2831
        %v2833 = vpop.f32.mrf.mxu0
        %v2834 = vadd.f32 %v2781, %v2833
        %v2835 = vand.u32 %v2438, 4294901760
        %2836 = vmatmul.f32.gmra.mxu0 %v2835
        %v2837 = vpop.f32.mrf.mxu0
        %v2838 = vadd.f32 %v2785, %v2837
        %v2839 = vand.u32 %v2441, 4294901760
        %2840 = vmatmul.f32.gmra.mxu0 %v2839
        %v2841 = vpop.f32.mrf.mxu0
        %v2842 = vadd.f32 %v2789, %v2841
        %v2843 = vand.u32 %v2444, 4294901760
        %2844 = vmatmul.f32.gmra.mxu0 %v2843
        %v2845 = vpop.f32.mrf.mxu0
        %v2846 = vadd.f32 %v2793, %v2845
        %2847 = vdwg.mxu0
        %v2848 = vtanh.pop %v2818
        %v2849 = vtanh.pop %v2822
        %v2850 = vtanh.pop %v2826
        %v2851 = vtanh.pop %v2830
        %v2852 = vtanh.pop %v2834
        %v2853 = vtanh.pop %v2838
        %v2854 = vtanh.pop %v2842
        %v2855 = vtanh.pop %v2846
        %v2856 = vld [vmem:[%s11] sm:$0xff]
        %v2857 = vld [vmem:[%s11 + $0x8] sm:$0xff]
        %v2858 = vld [vmem:[%s11 + $0x10] sm:$0xff]
        %v2859 = vld [vmem:[%s11 + $0x18] sm:$0xff]
        %v2860 = vld [vmem:[%s11 + $0x20] sm:$0xff]
        %v2861 = vld [vmem:[%s11 + $0x28] sm:$0xff]
        %v2862 = vld [vmem:[%s11 + $0x30] sm:$0xff]
        %v2863 = vld [vmem:[%s11 + $0x38] sm:$0xff]
        %v2864 = vld [vmem:[%s12] sm:$0x1]
        %v2866 = vperm.slane %v2864, 0
        %v2869 = vsel %vm1069, %v2848, 0
        %v2872 = vsel %vm1069, %v2849, 0
        %v2875 = vsel %vm1069, %v2850, 0
        %v2878 = vsel %vm1069, %v2851, 0
        %v2881 = vsel %vm1069, %v2852, 0
        %v2884 = vsel %vm1069, %v2853, 0
        %v2887 = vsel %vm1069, %v2854, 0
        %v2890 = vsel %vm1069, %v2855, 0
        %2892 = vmatpush.msra.mxu0 0.0
        %2893 = vmatpush.msra.mxu0 0.0
        %2894 = vmatpush.msra.mxu0 0.0
        %2895 = vmatpush.msra.mxu0 0.0
        %2896 = vmatpush.msra.mxu0 0.0
        %2897 = vmatpush.msra.mxu0 0.0
        %2898 = vmatpush.msra.mxu0 0.0
        %2899 = vmatpush.msra.mxu0 0.0
        %v2900 = vand.u32 %v2863, 4294901760
        %2901 = vmatpush.msra.mxu0 %v2900
        %v2902 = vand.u32 %v2862, 4294901760
        %2903 = vmatpush.msra.mxu0 %v2902
        %v2904 = vand.u32 %v2861, 4294901760
        %2905 = vmatpush.msra.mxu0 %v2904
        %v2906 = vand.u32 %v2860, 4294901760
        %2907 = vmatpush.msra.mxu0 %v2906
        %v2908 = vand.u32 %v2859, 4294901760
        %2909 = vmatpush.msra.mxu0 %v2908
        %v2910 = vand.u32 %v2858, 4294901760
        %2911 = vmatpush.msra.mxu0 %v2910
        %v2912 = vand.u32 %v2857, 4294901760
        %2913 = vmatpush.msra.mxu0 %v2912
        %v2914 = vand.u32 %v2856, 4294901760
        %2915 = vmatpush.msra.mxu0 %v2914
        %v2916 = vand.u32 %v2869, 4294901760
        %v2917 = vsub.f32 %v2869, %v2916
        %v2918 = vand.u32 %v2917, 4294901760
        %v2919 = vsub.f32 %v2917, %v2918
        %v2920 = vand.u32 %v2919, 4294901760
        %2921 = vmatmul.f32.gmra.mxu0 %v2920
        %v2922 = vpop.f32.mrf.mxu0
        %v2923 = vadd.f32 %v2866, %v2922
        %v2924 = vand.u32 %v2872, 4294901760
        %v2925 = vsub.f32 %v2872, %v2924
        %v2926 = vand.u32 %v2925, 4294901760
        %v2927 = vsub.f32 %v2925, %v2926
        %v2928 = vand.u32 %v2927, 4294901760
        %2929 = vmatmul.f32.gmra.mxu0 %v2928
        %v2930 = vpop.f32.mrf.mxu0
        %v2931 = vadd.f32 %v2866, %v2930
        %v2932 = vand.u32 %v2875, 4294901760
        %v2933 = vsub.f32 %v2875, %v2932
        %v2934 = vand.u32 %v2933, 4294901760
        %v2935 = vsub.f32 %v2933, %v2934
        %v2936 = vand.u32 %v2935, 4294901760
        %2937 = vmatmul.f32.gmra.mxu0 %v2936
        %v2938 = vpop.f32.mrf.mxu0
        %v2939 = vadd.f32 %v2866, %v2938
        %v2940 = vand.u32 %v2878, 4294901760
        %v2941 = vsub.f32 %v2878, %v2940
        %v2942 = vand.u32 %v2941, 4294901760
        %v2943 = vsub.f32 %v2941, %v2942
        %v2944 = vand.u32 %v2943, 4294901760
        %2945 = vmatmul.f32.gmra.mxu0 %v2944
        %v2946 = vpop.f32.mrf.mxu0
        %v2947 = vadd.f32 %v2866, %v2946
        %v2948 = vand.u32 %v2881, 4294901760
        %v2949 = vsub.f32 %v2881, %v2948
        %v2950 = vand.u32 %v2949, 4294901760
        %v2951 = vsub.f32 %v2949, %v2950
        %v2952 = vand.u32 %v2951, 4294901760
        %2953 = vmatmul.f32.gmra.mxu0 %v2952
        %v2954 = vpop.f32.mrf.mxu0
        %v2955 = vadd.f32 %v2866, %v2954
        %v2956 = vand.u32 %v2884, 4294901760
        %v2957 = vsub.f32 %v2884, %v2956
        %v2958 = vand.u32 %v2957, 4294901760
        %v2959 = vsub.f32 %v2957, %v2958
        %v2960 = vand.u32 %v2959, 4294901760
        %2961 = vmatmul.f32.gmra.mxu0 %v2960
        %v2962 = vpop.f32.mrf.mxu0
        %v2963 = vadd.f32 %v2866, %v2962
        %v2964 = vand.u32 %v2887, 4294901760
        %v2965 = vsub.f32 %v2887, %v2964
        %v2966 = vand.u32 %v2965, 4294901760
        %v2967 = vsub.f32 %v2965, %v2966
        %v2968 = vand.u32 %v2967, 4294901760
        %2969 = vmatmul.f32.gmra.mxu0 %v2968
        %v2970 = vpop.f32.mrf.mxu0
        %v2971 = vadd.f32 %v2866, %v2970
        %v2972 = vand.u32 %v2890, 4294901760
        %v2973 = vsub.f32 %v2890, %v2972
        %v2974 = vand.u32 %v2973, 4294901760
        %v2975 = vsub.f32 %v2973, %v2974
        %v2976 = vand.u32 %v2975, 4294901760
        %2977 = vmatmul.f32.gmra.mxu0 %v2976
        %v2978 = vpop.f32.mrf.mxu0
        %v2979 = vadd.f32 %v2866, %v2978
        %2980 = vdwg.mxu0
        %2981 = vmatpush.msra.mxu0 0.0
        %2982 = vmatpush.msra.mxu0 0.0
        %2983 = vmatpush.msra.mxu0 0.0
        %2984 = vmatpush.msra.mxu0 0.0
        %2985 = vmatpush.msra.mxu0 0.0
        %2986 = vmatpush.msra.mxu0 0.0
        %2987 = vmatpush.msra.mxu0 0.0
        %2988 = vmatpush.msra.mxu0 0.0
        %v2989 = vand.u32 %v2863, 4294901760
        %v2990 = vsub.f32 %v2863, %v2989
        %v2991 = vand.u32 %v2990, 4294901760
        %v2992 = vsub.f32 %v2990, %v2991
        %v2993 = vand.u32 %v2992, 4294901760
        %2994 = vmatpush.msra.mxu0 %v2993
        %v2995 = vand.u32 %v2862, 4294901760
        %v2996 = vsub.f32 %v2862, %v2995
        %v2997 = vand.u32 %v2996, 4294901760
        %v2998 = vsub.f32 %v2996, %v2997
        %v2999 = vand.u32 %v2998, 4294901760
        %3000 = vmatpush.msra.mxu0 %v2999
        %v3001 = vand.u32 %v2861, 4294901760
        %v3002 = vsub.f32 %v2861, %v3001
        %v3003 = vand.u32 %v3002, 4294901760
        %v3004 = vsub.f32 %v3002, %v3003
        %v3005 = vand.u32 %v3004, 4294901760
        %3006 = vmatpush.msra.mxu0 %v3005
        %v3007 = vand.u32 %v2860, 4294901760
        %v3008 = vsub.f32 %v2860, %v3007
        %v3009 = vand.u32 %v3008, 4294901760
        %v3010 = vsub.f32 %v3008, %v3009
        %v3011 = vand.u32 %v3010, 4294901760
        %3012 = vmatpush.msra.mxu0 %v3011
        %v3013 = vand.u32 %v2859, 4294901760
        %v3014 = vsub.f32 %v2859, %v3013
        %v3015 = vand.u32 %v3014, 4294901760
        %v3016 = vsub.f32 %v3014, %v3015
        %v3017 = vand.u32 %v3016, 4294901760
        %3018 = vmatpush.msra.mxu0 %v3017
        %v3019 = vand.u32 %v2858, 4294901760
        %v3020 = vsub.f32 %v2858, %v3019
        %v3021 = vand.u32 %v3020, 4294901760
        %v3022 = vsub.f32 %v3020, %v3021
        %v3023 = vand.u32 %v3022, 4294901760
        %3024 = vmatpush.msra.mxu0 %v3023
        %v3025 = vand.u32 %v2857, 4294901760
        %v3026 = vsub.f32 %v2857, %v3025
        %v3027 = vand.u32 %v3026, 4294901760
        %v3028 = vsub.f32 %v3026, %v3027
        %v3029 = vand.u32 %v3028, 4294901760
        %3030 = vmatpush.msra.mxu0 %v3029
        %v3031 = vand.u32 %v2856, 4294901760
        %v3032 = vsub.f32 %v2856, %v3031
        %v3033 = vand.u32 %v3032, 4294901760
        %v3034 = vsub.f32 %v3032, %v3033
        %v3035 = vand.u32 %v3034, 4294901760
        %3036 = vmatpush.msra.mxu0 %v3035
        %v3037 = vand.u32 %v2869, 4294901760
        %3038 = vmatmul.f32.gmra.mxu0 %v3037
        %v3039 = vpop.f32.mrf.mxu0
        %v3040 = vadd.f32 %v2923, %v3039
        %v3041 = vand.u32 %v2872, 4294901760
        %3042 = vmatmul.f32.gmra.mxu0 %v3041
        %v3043 = vpop.f32.mrf.mxu0
        %v3044 = vadd.f32 %v2931, %v3043
        %v3045 = vand.u32 %v2875, 4294901760
        %3046 = vmatmul.f32.gmra.mxu0 %v3045
        %v3047 = vpop.f32.mrf.mxu0
        %v3048 = vadd.f32 %v2939, %v3047
        %v3049 = vand.u32 %v2878, 4294901760
        %3050 = vmatmul.f32.gmra.mxu0 %v3049
        %v3051 = vpop.f32.mrf.mxu0
        %v3052 = vadd.f32 %v2947, %v3051
        %v3053 = vand.u32 %v2881, 4294901760
        %3054 = vmatmul.f32.gmra.mxu0 %v3053
        %v3055 = vpop.f32.mrf.mxu0
        %v3056 = vadd.f32 %v2955, %v3055
        %v3057 = vand.u32 %v2884, 4294901760
        %3058 = vmatmul.f32.gmra.mxu0 %v3057
        %v3059 = vpop.f32.mrf.mxu0
        %v3060 = vadd.f32 %v2963, %v3059
        %v3061 = vand.u32 %v2887, 4294901760
        %3062 = vmatmul.f32.gmra.mxu0 %v3061
        %v3063 = vpop.f32.mrf.mxu0
        %v3064 = vadd.f32 %v2971, %v3063
        %v3065 = vand.u32 %v2890, 4294901760
        %3066 = vmatmul.f32.gmra.mxu0 %v3065
        %v3067 = vpop.f32.mrf.mxu0
        %v3068 = vadd.f32 %v2979, %v3067
        %3069 = vdwg.mxu0
        %3070 = vmatpush.msra.mxu0 0.0
        %3071 = vmatpush.msra.mxu0 0.0
        %3072 = vmatpush.msra.mxu0 0.0
        %3073 = vmatpush.msra.mxu0 0.0
        %3074 = vmatpush.msra.mxu0 0.0
        %3075 = vmatpush.msra.mxu0 0.0
        %3076 = vmatpush.msra.mxu0 0.0
        %3077 = vmatpush.msra.mxu0 0.0
        %v3078 = vand.u32 %v2863, 4294901760
        %v3079 = vsub.f32 %v2863, %v3078
        %3080 = vmatpush.msra.mxu0 %v3079
        %v3081 = vand.u32 %v2862, 4294901760
        %v3082 = vsub.f32 %v2862, %v3081
        %3083 = vmatpush.msra.mxu0 %v3082
        %v3084 = vand.u32 %v2861, 4294901760
        %v3085 = vsub.f32 %v2861, %v3084
        %3086 = vmatpush.msra.mxu0 %v3085
        %v3087 = vand.u32 %v2860, 4294901760
        %v3088 = vsub.f32 %v2860, %v3087
        %3089 = vmatpush.msra.mxu0 %v3088
        %v3090 = vand.u32 %v2859, 4294901760
        %v3091 = vsub.f32 %v2859, %v3090
        %3092 = vmatpush.msra.mxu0 %v3091
        %v3093 = vand.u32 %v2858, 4294901760
        %v3094 = vsub.f32 %v2858, %v3093
        %3095 = vmatpush.msra.mxu0 %v3094
        %v3096 = vand.u32 %v2857, 4294901760
        %v3097 = vsub.f32 %v2857, %v3096
        %3098 = vmatpush.msra.mxu0 %v3097
        %v3099 = vand.u32 %v2856, 4294901760
        %v3100 = vsub.f32 %v2856, %v3099
        %3101 = vmatpush.msra.mxu0 %v3100
        %v3102 = vand.u32 %v2869, 4294901760
        %v3103 = vsub.f32 %v2869, %v3102
        %3104 = vmatmul.f32.gmra.mxu0 %v3103
        %v3105 = vpop.f32.mrf.mxu0
        %v3106 = vadd.f32 %v3040, %v3105
        %v3107 = vand.u32 %v2872, 4294901760
        %v3108 = vsub.f32 %v2872, %v3107
        %3109 = vmatmul.f32.gmra.mxu0 %v3108
        %v3110 = vpop.f32.mrf.mxu0
        %v3111 = vadd.f32 %v3044, %v3110
        %v3112 = vand.u32 %v2875, 4294901760
        %v3113 = vsub.f32 %v2875, %v3112
        %3114 = vmatmul.f32.gmra.mxu0 %v3113
        %v3115 = vpop.f32.mrf.mxu0
        %v3116 = vadd.f32 %v3048, %v3115
        %v3117 = vand.u32 %v2878, 4294901760
        %v3118 = vsub.f32 %v2878, %v3117
        %3119 = vmatmul.f32.gmra.mxu0 %v3118
        %v3120 = vpop.f32.mrf.mxu0
        %v3121 = vadd.f32 %v3052, %v3120
        %v3122 = vand.u32 %v2881, 4294901760
        %v3123 = vsub.f32 %v2881, %v3122
        %3124 = vmatmul.f32.gmra.mxu0 %v3123
        %v3125 = vpop.f32.mrf.mxu0
        %v3126 = vadd.f32 %v3056, %v3125
        %v3127 = vand.u32 %v2884, 4294901760
        %v3128 = vsub.f32 %v2884, %v3127
        %3129 = vmatmul.f32.gmra.mxu0 %v3128
        %v3130 = vpop.f32.mrf.mxu0
        %v3131 = vadd.f32 %v3060, %v3130
        %v3132 = vand.u32 %v2887, 4294901760
        %v3133 = vsub.f32 %v2887, %v3132
        %3134 = vmatmul.f32.gmra.mxu0 %v3133
        %v3135 = vpop.f32.mrf.mxu0
        %v3136 = vadd.f32 %v3064, %v3135
        %v3137 = vand.u32 %v2890, 4294901760
        %v3138 = vsub.f32 %v2890, %v3137
        %3139 = vmatmul.f32.gmra.mxu0 %v3138
        %v3140 = vpop.f32.mrf.mxu0
        %v3141 = vadd.f32 %v3068, %v3140
        %3142 = vdwg.mxu0
        %3143 = vmatpush.msra.mxu0 0.0
        %3144 = vmatpush.msra.mxu0 0.0
        %3145 = vmatpush.msra.mxu0 0.0
        %3146 = vmatpush.msra.mxu0 0.0
        %3147 = vmatpush.msra.mxu0 0.0
        %3148 = vmatpush.msra.mxu0 0.0
        %3149 = vmatpush.msra.mxu0 0.0
        %3150 = vmatpush.msra.mxu0 0.0
        %v3151 = vand.u32 %v2863, 4294901760
        %3152 = vmatpush.msra.mxu0 %v3151
        %v3153 = vand.u32 %v2862, 4294901760
        %3154 = vmatpush.msra.mxu0 %v3153
        %v3155 = vand.u32 %v2861, 4294901760
        %3156 = vmatpush.msra.mxu0 %v3155
        %v3157 = vand.u32 %v2860, 4294901760
        %3158 = vmatpush.msra.mxu0 %v3157
        %v3159 = vand.u32 %v2859, 4294901760
        %3160 = vmatpush.msra.mxu0 %v3159
        %v3161 = vand.u32 %v2858, 4294901760
        %3162 = vmatpush.msra.mxu0 %v3161
        %v3163 = vand.u32 %v2857, 4294901760
        %3164 = vmatpush.msra.mxu0 %v3163
        %v3165 = vand.u32 %v2856, 4294901760
        %3166 = vmatpush.msra.mxu0 %v3165
        %v3167 = vand.u32 %v2869, 4294901760
        %v3168 = vsub.f32 %v2869, %v3167
        %v3169 = vand.u32 %v3168, 4294901760
        %3170 = vmatmul.f32.gmra.mxu0 %v3169
        %v3171 = vpop.f32.mrf.mxu0
        %v3172 = vadd.f32 %v3106, %v3171
        %v3173 = vand.u32 %v2872, 4294901760
        %v3174 = vsub.f32 %v2872, %v3173
        %v3175 = vand.u32 %v3174, 4294901760
        %3176 = vmatmul.f32.gmra.mxu0 %v3175
        %v3177 = vpop.f32.mrf.mxu0
        %v3178 = vadd.f32 %v3111, %v3177
        %v3179 = vand.u32 %v2875, 4294901760
        %v3180 = vsub.f32 %v2875, %v3179
        %v3181 = vand.u32 %v3180, 4294901760
        %3182 = vmatmul.f32.gmra.mxu0 %v3181
        %v3183 = vpop.f32.mrf.mxu0
        %v3184 = vadd.f32 %v3116, %v3183
        %v3185 = vand.u32 %v2878, 4294901760
        %v3186 = vsub.f32 %v2878, %v3185
        %v3187 = vand.u32 %v3186, 4294901760
        %3188 = vmatmul.f32.gmra.mxu0 %v3187
        %v3189 = vpop.f32.mrf.mxu0
        %v3190 = vadd.f32 %v3121, %v3189
        %v3191 = vand.u32 %v2881, 4294901760
        %v3192 = vsub.f32 %v2881, %v3191
        %v3193 = vand.u32 %v3192, 4294901760
        %3194 = vmatmul.f32.gmra.mxu0 %v3193
        %v3195 = vpop.f32.mrf.mxu0
        %v3196 = vadd.f32 %v3126, %v3195
        %v3197 = vand.u32 %v2884, 4294901760
        %v3198 = vsub.f32 %v2884, %v3197
        %v3199 = vand.u32 %v3198, 4294901760
        %3200 = vmatmul.f32.gmra.mxu0 %v3199
        %v3201 = vpop.f32.mrf.mxu0
        %v3202 = vadd.f32 %v3131, %v3201
        %v3203 = vand.u32 %v2887, 4294901760
        %v3204 = vsub.f32 %v2887, %v3203
        %v3205 = vand.u32 %v3204, 4294901760
        %3206 = vmatmul.f32.gmra.mxu0 %v3205
        %v3207 = vpop.f32.mrf.mxu0
        %v3208 = vadd.f32 %v3136, %v3207
        %v3209 = vand.u32 %v2890, 4294901760
        %v3210 = vsub.f32 %v2890, %v3209
        %v3211 = vand.u32 %v3210, 4294901760
        %3212 = vmatmul.f32.gmra.mxu0 %v3211
        %v3213 = vpop.f32.mrf.mxu0
        %v3214 = vadd.f32 %v3141, %v3213
        %3215 = vdwg.mxu0
        %3216 = vmatpush.msra.mxu0 0.0
        %3217 = vmatpush.msra.mxu0 0.0
        %3218 = vmatpush.msra.mxu0 0.0
        %3219 = vmatpush.msra.mxu0 0.0
        %3220 = vmatpush.msra.mxu0 0.0
        %3221 = vmatpush.msra.mxu0 0.0
        %3222 = vmatpush.msra.mxu0 0.0
        %3223 = vmatpush.msra.mxu0 0.0
        %v3224 = vand.u32 %v2863, 4294901760
        %v3225 = vsub.f32 %v2863, %v3224
        %v3226 = vand.u32 %v3225, 4294901760
        %3227 = vmatpush.msra.mxu0 %v3226
        %v3228 = vand.u32 %v2862, 4294901760
        %v3229 = vsub.f32 %v2862, %v3228
        %v3230 = vand.u32 %v3229, 4294901760
        %3231 = vmatpush.msra.mxu0 %v3230
        %v3232 = vand.u32 %v2861, 4294901760
        %v3233 = vsub.f32 %v2861, %v3232
        %v3234 = vand.u32 %v3233, 4294901760
        %3235 = vmatpush.msra.mxu0 %v3234
        %v3236 = vand.u32 %v2860, 4294901760
        %v3237 = vsub.f32 %v2860, %v3236
        %v3238 = vand.u32 %v3237, 4294901760
        %3239 = vmatpush.msra.mxu0 %v3238
        %v3240 = vand.u32 %v2859, 4294901760
        %v3241 = vsub.f32 %v2859, %v3240
        %v3242 = vand.u32 %v3241, 4294901760
        %3243 = vmatpush.msra.mxu0 %v3242
        %v3244 = vand.u32 %v2858, 4294901760
        %v3245 = vsub.f32 %v2858, %v3244
        %v3246 = vand.u32 %v3245, 4294901760
        %3247 = vmatpush.msra.mxu0 %v3246
        %v3248 = vand.u32 %v2857, 4294901760
        %v3249 = vsub.f32 %v2857, %v3248
        %v3250 = vand.u32 %v3249, 4294901760
        %3251 = vmatpush.msra.mxu0 %v3250
        %v3252 = vand.u32 %v2856, 4294901760
        %v3253 = vsub.f32 %v2856, %v3252
        %v3254 = vand.u32 %v3253, 4294901760
        %3255 = vmatpush.msra.mxu0 %v3254
        %v3256 = vand.u32 %v2869, 4294901760
        %3257 = vmatmul.f32.gmra.mxu0 %v3256
        %v3258 = vpop.f32.mrf.mxu0
        %v3259 = vadd.f32 %v3172, %v3258
        %v3260 = vand.u32 %v2872, 4294901760
        %3261 = vmatmul.f32.gmra.mxu0 %v3260
        %v3262 = vpop.f32.mrf.mxu0
        %v3263 = vadd.f32 %v3178, %v3262
        %v3264 = vand.u32 %v2875, 4294901760
        %3265 = vmatmul.f32.gmra.mxu0 %v3264
        %v3266 = vpop.f32.mrf.mxu0
        %v3267 = vadd.f32 %v3184, %v3266
        %v3268 = vand.u32 %v2878, 4294901760
        %3269 = vmatmul.f32.gmra.mxu0 %v3268
        %v3270 = vpop.f32.mrf.mxu0
        %v3271 = vadd.f32 %v3190, %v3270
        %v3272 = vand.u32 %v2881, 4294901760
        %3273 = vmatmul.f32.gmra.mxu0 %v3272
        %v3274 = vpop.f32.mrf.mxu0
        %v3275 = vadd.f32 %v3196, %v3274
        %v3276 = vand.u32 %v2884, 4294901760
        %3277 = vmatmul.f32.gmra.mxu0 %v3276
        %v3278 = vpop.f32.mrf.mxu0
        %v3279 = vadd.f32 %v3202, %v3278
        %v3280 = vand.u32 %v2887, 4294901760
        %3281 = vmatmul.f32.gmra.mxu0 %v3280
        %v3282 = vpop.f32.mrf.mxu0
        %v3283 = vadd.f32 %v3208, %v3282
        %v3284 = vand.u32 %v2890, 4294901760
        %3285 = vmatmul.f32.gmra.mxu0 %v3284
        %v3286 = vpop.f32.mrf.mxu0
        %v3287 = vadd.f32 %v3214, %v3286
        %3288 = vdwg.mxu0
        %3289 = vmatpush.msra.mxu0 0.0
        %3290 = vmatpush.msra.mxu0 0.0
        %3291 = vmatpush.msra.mxu0 0.0
        %3292 = vmatpush.msra.mxu0 0.0
        %3293 = vmatpush.msra.mxu0 0.0
        %3294 = vmatpush.msra.mxu0 0.0
        %3295 = vmatpush.msra.mxu0 0.0
        %3296 = vmatpush.msra.mxu0 0.0
        %v3297 = vand.u32 %v2863, 4294901760
        %3298 = vmatpush.msra.mxu0 %v3297
        %v3299 = vand.u32 %v2862, 4294901760
        %3300 = vmatpush.msra.mxu0 %v3299
        %v3301 = vand.u32 %v2861, 4294901760
        %3302 = vmatpush.msra.mxu0 %v3301
        %v3303 = vand.u32 %v2860, 4294901760
        %3304 = vmatpush.msra.mxu0 %v3303
        %v3305 = vand.u32 %v2859, 4294901760
        %3306 = vmatpush.msra.mxu0 %v3305
        %v3307 = vand.u32 %v2858, 4294901760
        %3308 = vmatpush.msra.mxu0 %v3307
        %v3309 = vand.u32 %v2857, 4294901760
        %3310 = vmatpush.msra.mxu0 %v3309
        %v3311 = vand.u32 %v2856, 4294901760
        %3312 = vmatpush.msra.mxu0 %v3311
        %v3313 = vand.u32 %v2869, 4294901760
        %3314 = vmatmul.f32.gmra.mxu0 %v3313
        %v3315 = vpop.f32.mrf.mxu0
        %v3316 = vadd.f32 %v3259, %v3315
        %v3317 = vand.u32 %v2872, 4294901760
        %3318 = vmatmul.f32.gmra.mxu0 %v3317
        %v3319 = vpop.f32.mrf.mxu0
        %v3320 = vadd.f32 %v3263, %v3319
        %v3321 = vand.u32 %v2875, 4294901760
        %3322 = vmatmul.f32.gmra.mxu0 %v3321
        %v3323 = vpop.f32.mrf.mxu0
        %v3324 = vadd.f32 %v3267, %v3323
        %v3325 = vand.u32 %v2878, 4294901760
        %3326 = vmatmul.f32.gmra.mxu0 %v3325
        %v3327 = vpop.f32.mrf.mxu0
        %v3328 = vadd.f32 %v3271, %v3327
        %v3329 = vand.u32 %v2881, 4294901760
        %3330 = vmatmul.f32.gmra.mxu0 %v3329
        %v3331 = vpop.f32.mrf.mxu0
        %v3332 = vadd.f32 %v3275, %v3331
        %v3333 = vand.u32 %v2884, 4294901760
        %3334 = vmatmul.f32.gmra.mxu0 %v3333
        %v3335 = vpop.f32.mrf.mxu0
        %v3336 = vadd.f32 %v3279, %v3335
        %v3337 = vand.u32 %v2887, 4294901760
        %3338 = vmatmul.f32.gmra.mxu0 %v3337
        %v3339 = vpop.f32.mrf.mxu0
        %v3340 = vadd.f32 %v3283, %v3339
        %v3341 = vand.u32 %v2890, 4294901760
        %3342 = vmatmul.f32.gmra.mxu0 %v3341
        %v3343 = vpop.f32.mrf.mxu0
        %v3344 = vadd.f32 %v3287, %v3343
        %3345 = vdwg.mxu0
        %3346 = vst [vmem:[%s460] sm:$0xff] %v3316
        %3347 = vst [vmem:[%s460 + $0x8] sm:$0xff] %v3320
        %3348 = vst [vmem:[%s460 + $0x10] sm:$0xff] %v3324
        %3349 = vst [vmem:[%s460 + $0x18] sm:$0xff] %v3328
        %3350 = vst [vmem:[%s460 + $0x20] sm:$0xff] %v3332
        %3351 = vst [vmem:[%s460 + $0x28] sm:$0xff] %v3336
        %3352 = vst [vmem:[%s460 + $0x30] sm:$0xff] %v3340
        %3353 = vst [vmem:[%s460 + $0x38] sm:$0xff] %v3344
        %s3354 = sand.u32 %s316, 1
        %s3355 = scalar_lea.sflag [#allocation4], %s3354
        %s3356 = sand.u32 %s316, 1
        %s3357 = smul.addr %s3356, 64
        %s3358 = scalar_lea.vmem [#allocation5], %s3357
        // Predicated region
        $region77: #{tpu_custom_call.1} parent=71 // pred_check
          %p3359 = pneg %p326
        $region78: #{tpu_custom_call.1} parent=71 // pred_check_branch
          %3361 = sbr.rel (%p3359) target = $region80
        $region79: #{tpu_custom_call.1} parent=71 // pred_region
          %s3362 = smul.u32 8, %s30
          %3364 = vsyncadd %s3355, 0
          %s3365 = smul.addr %s3362, 8
          %s3366 = scalar_lea.hbm %s13, %s3365
          %s3367 = sshll.u32 %s3358, 4
          %s3368 = int_to_ptr.vmem [resolvable:$true] %s3367
          %s3369 = sshll.u32 %s3366, 4
          %s3370 = int_to_ptr.hbm [resolvable:$true] %s3369
          %3375 = dma.vmem_to_hbm [thread:$0]  %s3368, 1024, %s3370, %s3355, 128, 128, 8
        $region80: #{tpu_custom_call.1} parent=71 // pred_fallthru
          _
      $region72: #{tpu_custom_call.1} parent=5 // pred_fallthru
        _
      %p3376 = scmp.le.s32.totalorder 2, %s25
      // Predicated region
      $region81: #{tpu_custom_call.1} parent=5 // pred_check
        %p3377 = pneg %p3376
      $region82: #{tpu_custom_call.1} parent=5 // pred_check_branch
        %3379 = sbr.rel (%p3377) target = $region84
      $region83: #{tpu_custom_call.1} parent=5 // pred_region
        %s3380 = ssub.s32 %s25, 2
        // Predicated region
        $region85: #{tpu_custom_call.1} parent=83 // pred_check
          %p3381 = pneg %p332
        $region86: #{tpu_custom_call.1} parent=83 // pred_check_branch
          %3383 = sbr.rel (%p3381) target = $region88
        $region87: #{tpu_custom_call.1} parent=83 // pred_region
          %s3384 = sand.u32 %s317, 1
          %s3385 = scalar_lea.sflag [#allocation4], %s3384
          %s3386 = sand.u32 %s317, 1
          %s3387 = smul.addr %s3386, 64
          %s3388 = scalar_lea.vmem [#allocation5], %s3387
          %3390 = dma.done %s3385, 1024
        $region88: #{tpu_custom_call.1} parent=83 // pred_fallthru
          _
      $region84: #{tpu_custom_call.1} parent=5 // pred_fallthru
        _
    $region6: #{tpu_custom_call.1} parent=1 // loop_footer
      %s29 = sadd.s32 1, %s25
    $region7: #{tpu_custom_call.1} parent=1 // loop_footer_branch
      %24 = sbr.rel target = $region3
    $region8: #{tpu_custom_call.1} parent=1 // loop_exit
      _
    %3391 = vsyncpa [#allocation3], 1
    %s3392 = scalar_lea.sflag [#allocation3], 1
    %3393 = vsyncpa %s3392, 1
    %3394 = vsyncpa [#allocation4], 1
    %s3395 = scalar_lea.sflag [#allocation4], 1
    %3396 = vsyncpa %s3395, 1

</llo_original>
